<compile_context>
chip_gen: v6e
topology: v6e:2x2x1
jax: 0.10.0
libtpu: 0.0.40
codegen_flags: <defaults>
</compile_context>

<pallas_src>
import jax
import jax.numpy as jnp
import numpy as np
from jax.experimental import pallas as pl
from jax.experimental.pallas import tpu as pltpu

KSIZE = 11
PAD = 5
ALIGN = 8                          # sublane-aligned halo (>= PAD) in the pad slab
CHANNELS = (16, 16, 32, 64, 128)   # cin of layer1, then per-layer couts
STRIDES = (1, 2, 2, 2)


def _conv_taps(x, pad_ref, w_ref, stride, b):
    """Conv1d(k=11, pad=5, stride) on a channels-last (Lin, Cin) f32 tile.

    Writes the tile into a zero-padded f32 VMEM slab (8-row halos, every store
    sublane-aligned) and accumulates the 11 taps as 11 small MXU dots taken
    directly from strided slab views -- no im2col slab, no masked lane-offset
    stores.  Returns the f32 (Lout, Cout) pre-activation accumulator.
    """
    lin, cin = x.shape
    l_out = lin // stride
    slab = lin + 2 * ALIGN
    base = b * slab                 # static Python int (batch handled statically)

    zeros = jnp.zeros((ALIGN, cin), pad_ref.dtype)
    pad_ref[base:base + ALIGN, :] = zeros
    pad_ref[base + ALIGN + lin:base + slab, :] = zeros
    pad_ref[base + ALIGN:base + ALIGN + lin, :] = x.astype(pad_ref.dtype)

    def tap(k):
        start = base + ALIGN - PAD + k          # static
        if stride == 1:
            t = pad_ref[pl.ds(start, l_out), :]
        else:
            t = pad_ref[pl.ds(start, l_out, stride=stride), :]
        return t.astype(jnp.bfloat16)

    acc = jnp.dot(tap(0), w_ref[0], preferred_element_type=jnp.float32)
    for k in range(1, KSIZE):
        acc = acc + jnp.dot(tap(k), w_ref[k], preferred_element_type=jnp.float32)
    return acc


def _encoder_kernel(x_ref, w1, w2, w3, w4, ba_ref,
                    o1, o2, o3, o4,
                    pad1, pad2, pad3, pad4):
    bpp = x_ref.shape[0]            # batch elements handled by this grid step
    ws = (w1, w2, w3, w4)
    outs = (o1, o2, o3, o4)
    pads = (pad1, pad2, pad3, pad4)

    # NCL tile -> channels-last working layout, in-kernel (XLU is idle here).
    xs = [jnp.transpose(x_ref[b], (1, 0)) for b in range(bpp)]

    for li in range(4):
        w_ref, pad_ref, o_ref, stride = ws[li], pads[li], outs[li], STRIDES[li]
        cout = w_ref.shape[-1]
        bias = ba_ref[2 * li:2 * li + 1, 0:cout]       # (1, cout) f32
        slope = ba_ref[2 * li + 1:2 * li + 2, 0:cout]  # (1, cout) f32
        ys = []
        for b in range(bpp):
            y = _conv_taps(xs[b], pad_ref, w_ref, stride, b) + bias
            y = jnp.where(y > 0, y, slope * y)         # PReLU, f32 on VPU
            # Store channel-major (NCL) directly: no wrapper transposes needed.
            o_ref[b] = jnp.transpose(y, (1, 0)).astype(o_ref.dtype)
            ys.append(y)
        xs = ys                                        # stays in VMEM / vregs


def init_encoder_params(key):
    """Deterministic synthetic init (PyTorch-style uniform bounds, PReLU slope 0.25)."""
    params = []
    for cin, cout in zip(CHANNELS[:-1], CHANNELS[1:]):
        key, kw, kb = jax.random.split(key, 3)
        bound = 1.0 / np.sqrt(cin * KSIZE)
        w = jax.random.uniform(kw, (KSIZE, cin, cout), jnp.float32, -bound, bound)
        b = jax.random.uniform(kb, (1, cout), jnp.float32, -bound, bound)
        a = jnp.full((1, cout), 0.25, jnp.float32)
        params.append((w, b, a))
    return params


def prepare_encoder_params(params):
    """One-time packing: bf16 (K,Cin,Cout) weights + one (8,128) bias/slope table."""
    ws = []
    ba = np.zeros((8, 128), np.float32)
    for li, (w, b, a) in enumerate(params):
        cout = w.shape[-1]
        ws.append(jnp.asarray(w, jnp.bfloat16))
        ba[2 * li, :cout] = np.asarray(b[0])
        ba[2 * li + 1, :cout] = np.asarray(a[0])
    return tuple(ws) + (jnp.asarray(ba, jnp.float32),)


def _fold_batch():
    """Fold the batch into one grid step on single-TC chips (v5e/v6e); keep a
    parallel per-batch grid on 2-TC chips (v7x / v4 megacore)."""
    try:
        kind = jax.devices()[0].device_kind.lower()
    except Exception:
        return True
    return any(t in kind for t in
               ("v5e", "v5 lite", "v5lite", "v6e", "v6 lite", "v6lite"))


@jax.jit
def encoder_forward(x_ncl, prepped_params):
    """Matches Encoder.forward: returns (x, en_list), all in PyTorch NCL layout."""
    n, c, l = x_ncl.shape
    assert c == CHANNELS[0] and l % 8 == 0 and l >= 8, (c, l)
    w1, w2, w3, w4, ba = prepped_params
    x_f32 = x_ncl.astype(jnp.float32)

    fold = _fold_batch() or n == 1
    n_steps = 1 if fold else n
    bpp = n if fold else 1

    in_specs = [pl.BlockSpec((bpp, CHANNELS[0], l), lambda i: (i, 0, 0))]
    for w in (w1, w2, w3, w4):
        in_specs.append(pl.BlockSpec(w.shape, lambda i: (0, 0, 0)))  # loaded once
    in_specs.append(pl.BlockSpec((8, 128), lambda i: (0, 0)))        # bias/slope table

    l_outs = (l, l // 2, l // 4, l // 8)
    couts = CHANNELS[1:]
    out_shape = tuple(jax.ShapeDtypeStruct((n, co, lo), jnp.float32)
                      for co, lo in zip(couts, l_outs))
    out_specs = tuple(pl.BlockSpec((bpp, co, lo), lambda i: (i, 0, 0))
                      for co, lo in zip(couts, l_outs))

    # Per-layer padded-input slabs (f32, all batch elements of the step stacked).
    l_ins = (l, l, l // 2, l // 4)
    cins = CHANNELS[:4]
    scratch_shapes = [pltpu.VMEM((bpp * (lin + 2 * ALIGN), cin), jnp.float32)
                      for lin, cin in zip(l_ins, cins)]

    outs = pl.pallas_call(
        _encoder_kernel,
        out_shape=out_shape,
        grid=(n_steps,),
        in_specs=in_specs,
        out_specs=out_specs,
        scratch_shapes=scratch_shapes,
        compiler_params=pltpu.CompilerParams(dimension_semantics=("parallel",)),
    )(x_f32, w1, w2, w3, w4, ba)

    en_list = list(outs)            # already NCL; no wrapper transposes
    return en_list[-1], en_list


def encoder_reference(x_ncl, params):
    """Pure-JAX f32 reference (lax.conv) for correctness checking."""
    x = x_ncl
    outs = []
    for (w, b, a), stride in zip(params, STRIDES):
        w_oik = jnp.transpose(w, (2, 1, 0))  # (Cout, Cin, K)
        y = jax.lax.conv_general_dilated(
            x, w_oik, (stride,), [(PAD, PAD)],
            dimension_numbers=("NCH", "OIH", "NCH"))
        y = y + b[0][None, :, None]
        y = jnp.where(y > 0, y, a[0][None, :, None] * y)
        x = y
        outs.append(y)
    return x, outs


if __name__ == "__main__":
    key = jax.random.PRNGKey(0)
    key, kx = jax.random.split(key)

    N, C, L = 2, 16, 64
    x = jax.random.normal(kx, (N, C, L), jnp.float32)  # PyTorch NCL input

    params = init_encoder_params(key)
    prepped = prepare_encoder_params(params)

    out, en_list = encoder_forward(x, prepped)
    out = jax.block_until_ready(out)
    en_list = [jax.block_until_ready(e) for e in en_list]

    # Shape check against PyTorch semantics.
    expected_shapes = [(N, 16, 64), (N, 32, 32), (N, 64, 16), (N, 128, 8)]
    assert [tuple(e.shape) for e in en_list] == expected_shapes, \
        [tuple(e.shape) for e in en_list]
    assert tuple(out.shape) == expected_shapes[-1]

    # Numerical check against the f32 reference.  Matmul operands are bf16
    # (weights + taps) with f32 accumulation and f32 epilogue; measured error
    # is well inside these bounds.
    ref_out, ref_list = encoder_reference(x, params)
    for got, ref in zip(en_list, ref_list):
        np.testing.assert_allclose(np.asarray(got), np.asarray(ref),
                                   rtol=5e-2, atol=5e-2)

    print("KERNEL_OK")
</pallas_src>

<mosaic_0001>
module attributes {stable_mosaic.version = 11 : i64} {
  func.func @_encoder_kernel(%arg0: i32, %arg1: memref<1x16x64xf32, #tpu.memory_space<vmem>>, %arg2: memref<11x16x16xbf16, #tpu.memory_space<vmem>>, %arg3: memref<11x16x32xbf16, #tpu.memory_space<vmem>>, %arg4: memref<11x32x64xbf16, #tpu.memory_space<vmem>>, %arg5: memref<11x64x128xbf16, #tpu.memory_space<vmem>>, %arg6: memref<8x128xf32, #tpu.memory_space<vmem>>, %arg7: memref<1x16x64xf32, #tpu.memory_space<vmem>>, %arg8: memref<1x32x32xf32, #tpu.memory_space<vmem>>, %arg9: memref<1x64x16xf32, #tpu.memory_space<vmem>>, %arg10: memref<1x128x8xf32, #tpu.memory_space<vmem>>, %arg11: memref<80x16xf32, #tpu.memory_space<vmem>>, %arg12: memref<80x16xf32, #tpu.memory_space<vmem>>, %arg13: memref<48x32xf32, #tpu.memory_space<vmem>>, %arg14: memref<32x64xf32, #tpu.memory_space<vmem>>) attributes {dimension_semantics = [#tpu.dimension_semantics<parallel>], iteration_bounds = array<i64: 2>, scalar_prefetch = 0 : i64, scratch_operands = 4 : i64, tpu.core_type = #tpu.core_type<tc>, window_params = [{transform_indices = @transform_0, window_bounds = array<i64: 1, 16, 64>}, {pipeline_mode = #tpu.pipeline_mode<synchronous>, transform_indices = @transform_1, window_bounds = array<i64: 11, 16, 16>}, {pipeline_mode = #tpu.pipeline_mode<synchronous>, transform_indices = @transform_2, window_bounds = array<i64: 11, 16, 32>}, {pipeline_mode = #tpu.pipeline_mode<synchronous>, transform_indices = @transform_3, window_bounds = array<i64: 11, 32, 64>}, {pipeline_mode = #tpu.pipeline_mode<synchronous>, transform_indices = @transform_4, window_bounds = array<i64: 11, 64, 128>}, {pipeline_mode = #tpu.pipeline_mode<synchronous>, transform_indices = @transform_5, window_bounds = array<i64: 8, 128>}, {transform_indices = @transform_6, window_bounds = array<i64: 1, 16, 64>}, {transform_indices = @transform_7, window_bounds = array<i64: 1, 32, 32>}, {transform_indices = @transform_8, window_bounds = array<i64: 1, 64, 16>}, {transform_indices = @transform_9, window_bounds = array<i64: 1, 128, 8>}]} {
    %c0 = arith.constant 0 : index
    %c0_0 = arith.constant 0 : index
    %c0_1 = arith.constant 0 : index
    %0 = vector.load %arg1[%c0, %c0_0, %c0_1] : memref<1x16x64xf32, #tpu.memory_space<vmem>>, vector<1x16x64xf32>
    %1 = vector.shape_cast %0 : vector<1x16x64xf32> to vector<16x64xf32>
    %2 = tpu.transpose %1, [1, 0] : vector<16x64xf32> -> vector<64x16xf32>
    %c0_2 = arith.constant 0 : index
    %c0_3 = arith.constant 0 : index
    %3 = vector.load %arg6[%c0_2, %c0_3] : memref<8x128xf32, #tpu.memory_space<vmem>>, vector<1x16xf32>
    %c1 = arith.constant 1 : index
    %c0_4 = arith.constant 0 : index
    %4 = vector.load %arg6[%c1, %c0_4] : memref<8x128xf32, #tpu.memory_space<vmem>>, vector<1x16xf32>
    %cst = arith.constant 0.000000e+00 : f32
    %5 = vector.broadcast %cst : f32 to vector<8x16xf32>
    %c0_5 = arith.constant 0 : index
    %c0_6 = arith.constant 0 : index
    %6 = vector.load %arg11[%c0_5, %c0_6] : memref<80x16xf32, #tpu.memory_space<vmem>>, vector<8x16xf32>
    tpu.vector_store %arg11[%c0_5, %c0_6], %5 {strides = array<i32>} : memref<80x16xf32, #tpu.memory_space<vmem>>, vector<8x16xf32>,
    %c72 = arith.constant 72 : index
    %c0_7 = arith.constant 0 : index
    %7 = vector.load %arg11[%c72, %c0_7] : memref<80x16xf32, #tpu.memory_space<vmem>>, vector<8x16xf32>
    tpu.vector_store %arg11[%c72, %c0_7], %5 {strides = array<i32>} : memref<80x16xf32, #tpu.memory_space<vmem>>, vector<8x16xf32>,
    %c8 = arith.constant 8 : index
    %c0_8 = arith.constant 0 : index
    %8 = vector.load %arg11[%c8, %c0_8] : memref<80x16xf32, #tpu.memory_space<vmem>>, vector<64x16xf32>
    tpu.vector_store %arg11[%c8, %c0_8], %2 {strides = array<i32>} : memref<80x16xf32, #tpu.memory_space<vmem>>, vector<64x16xf32>,
    %c3 = arith.constant 3 : index
    %c0_9 = arith.constant 0 : index
    %9 = vector.load %arg11[%c3, %c0_9] : memref<80x16xf32, #tpu.memory_space<vmem>>, vector<64x16xf32>
    %10 = arith.truncf %9 : vector<64x16xf32> to vector<64x16xbf16>
    %c0_10 = arith.constant 0 : index
    %c0_11 = arith.constant 0 : index
    %c0_12 = arith.constant 0 : index
    %11 = vector.load %arg2[%c0_10, %c0_11, %c0_12] : memref<11x16x16xbf16, #tpu.memory_space<vmem>>, vector<1x16x16xbf16>
    %12 = vector.shape_cast %11 : vector<1x16x16xbf16> to vector<16x16xbf16>
    %cst_13 = arith.constant dense<0.000000e+00> : vector<64x16xf32>
    %13 = tpu.matmul %10, %12, %cst_13 {dimension_numbers = #tpu.dot_dimension_numbers<[1], [0], [0], [1], [0, 0, 1, 1], [], []>} : vector<64x16xbf16>, vector<16x16xbf16>, vector<64x16xf32> -> vector<64x16xf32>
    %c4 = arith.constant 4 : index
    %c0_14 = arith.constant 0 : index
    %14 = vector.load %arg11[%c4, %c0_14] : memref<80x16xf32, #tpu.memory_space<vmem>>, vector<64x16xf32>
    %15 = arith.truncf %14 : vector<64x16xf32> to vector<64x16xbf16>
    %c1_15 = arith.constant 1 : index
    %c0_16 = arith.constant 0 : index
    %c0_17 = arith.constant 0 : index
    %16 = vector.load %arg2[%c1_15, %c0_16, %c0_17] : memref<11x16x16xbf16, #tpu.memory_space<vmem>>, vector<1x16x16xbf16>
    %17 = vector.shape_cast %16 : vector<1x16x16xbf16> to vector<16x16xbf16>
    %cst_18 = arith.constant dense<0.000000e+00> : vector<64x16xf32>
    %18 = tpu.matmul %15, %17, %cst_18 {dimension_numbers = #tpu.dot_dimension_numbers<[1], [0], [0], [1], [0, 0, 1, 1], [], []>} : vector<64x16xbf16>, vector<16x16xbf16>, vector<64x16xf32> -> vector<64x16xf32>
    %19 = arith.addf %13, %18 : vector<64x16xf32>
    %c5 = arith.constant 5 : index
    %c0_19 = arith.constant 0 : index
    %20 = vector.load %arg11[%c5, %c0_19] : memref<80x16xf32, #tpu.memory_space<vmem>>, vector<64x16xf32>
    %21 = arith.truncf %20 : vector<64x16xf32> to vector<64x16xbf16>
    %c2 = arith.constant 2 : index
    %c0_20 = arith.constant 0 : index
    %c0_21 = arith.constant 0 : index
    %22 = vector.load %arg2[%c2, %c0_20, %c0_21] : memref<11x16x16xbf16, #tpu.memory_space<vmem>>, vector<1x16x16xbf16>
    %23 = vector.shape_cast %22 : vector<1x16x16xbf16> to vector<16x16xbf16>
    %cst_22 = arith.constant dense<0.000000e+00> : vector<64x16xf32>
    %24 = tpu.matmul %21, %23, %cst_22 {dimension_numbers = #tpu.dot_dimension_numbers<[1], [0], [0], [1], [0, 0, 1, 1], [], []>} : vector<64x16xbf16>, vector<16x16xbf16>, vector<64x16xf32> -> vector<64x16xf32>
    %25 = arith.addf %19, %24 : vector<64x16xf32>
    %c6 = arith.constant 6 : index
    %c0_23 = arith.constant 0 : index
    %26 = vector.load %arg11[%c6, %c0_23] : memref<80x16xf32, #tpu.memory_space<vmem>>, vector<64x16xf32>
    %27 = arith.truncf %26 : vector<64x16xf32> to vector<64x16xbf16>
    %c3_24 = arith.constant 3 : index
    %c0_25 = arith.constant 0 : index
    %c0_26 = arith.constant 0 : index
    %28 = vector.load %arg2[%c3_24, %c0_25, %c0_26] : memref<11x16x16xbf16, #tpu.memory_space<vmem>>, vector<1x16x16xbf16>
    %29 = vector.shape_cast %28 : vector<1x16x16xbf16> to vector<16x16xbf16>
    %cst_27 = arith.constant dense<0.000000e+00> : vector<64x16xf32>
    %30 = tpu.matmul %27, %29, %cst_27 {dimension_numbers = #tpu.dot_dimension_numbers<[1], [0], [0], [1], [0, 0, 1, 1], [], []>} : vector<64x16xbf16>, vector<16x16xbf16>, vector<64x16xf32> -> vector<64x16xf32>
    %31 = arith.addf %25, %30 : vector<64x16xf32>
    %c7 = arith.constant 7 : index
    %c0_28 = arith.constant 0 : index
    %32 = vector.load %arg11[%c7, %c0_28] : memref<80x16xf32, #tpu.memory_space<vmem>>, vector<64x16xf32>
    %33 = arith.truncf %32 : vector<64x16xf32> to vector<64x16xbf16>
    %c4_29 = arith.constant 4 : index
    %c0_30 = arith.constant 0 : index
    %c0_31 = arith.constant 0 : index
    %34 = vector.load %arg2[%c4_29, %c0_30, %c0_31] : memref<11x16x16xbf16, #tpu.memory_space<vmem>>, vector<1x16x16xbf16>
    %35 = vector.shape_cast %34 : vector<1x16x16xbf16> to vector<16x16xbf16>
    %cst_32 = arith.constant dense<0.000000e+00> : vector<64x16xf32>
    %36 = tpu.matmul %33, %35, %cst_32 {dimension_numbers = #tpu.dot_dimension_numbers<[1], [0], [0], [1], [0, 0, 1, 1], [], []>} : vector<64x16xbf16>, vector<16x16xbf16>, vector<64x16xf32> -> vector<64x16xf32>
    %37 = arith.addf %31, %36 : vector<64x16xf32>
    %c8_33 = arith.constant 8 : index
    %c0_34 = arith.constant 0 : index
    %38 = vector.load %arg11[%c8_33, %c0_34] : memref<80x16xf32, #tpu.memory_space<vmem>>, vector<64x16xf32>
    %39 = arith.truncf %38 : vector<64x16xf32> to vector<64x16xbf16>
    %c5_35 = arith.constant 5 : index
    %c0_36 = arith.constant 0 : index
    %c0_37 = arith.constant 0 : index
    %40 = vector.load %arg2[%c5_35, %c0_36, %c0_37] : memref<11x16x16xbf16, #tpu.memory_space<vmem>>, vector<1x16x16xbf16>
    %41 = vector.shape_cast %40 : vector<1x16x16xbf16> to vector<16x16xbf16>
    %cst_38 = arith.constant dense<0.000000e+00> : vector<64x16xf32>
    %42 = tpu.matmul %39, %41, %cst_38 {dimension_numbers = #tpu.dot_dimension_numbers<[1], [0], [0], [1], [0, 0, 1, 1], [], []>} : vector<64x16xbf16>, vector<16x16xbf16>, vector<64x16xf32> -> vector<64x16xf32>
    %43 = arith.addf %37, %42 : vector<64x16xf32>
    %c9 = arith.constant 9 : index
    %c0_39 = arith.constant 0 : index
    %44 = vector.load %arg11[%c9, %c0_39] : memref<80x16xf32, #tpu.memory_space<vmem>>, vector<64x16xf32>
    %45 = arith.truncf %44 : vector<64x16xf32> to vector<64x16xbf16>
    %c6_40 = arith.constant 6 : index
    %c0_41 = arith.constant 0 : index
    %c0_42 = arith.constant 0 : index
    %46 = vector.load %arg2[%c6_40, %c0_41, %c0_42] : memref<11x16x16xbf16, #tpu.memory_space<vmem>>, vector<1x16x16xbf16>
    %47 = vector.shape_cast %46 : vector<1x16x16xbf16> to vector<16x16xbf16>
    %cst_43 = arith.constant dense<0.000000e+00> : vector<64x16xf32>
    %48 = tpu.matmul %45, %47, %cst_43 {dimension_numbers = #tpu.dot_dimension_numbers<[1], [0], [0], [1], [0, 0, 1, 1], [], []>} : vector<64x16xbf16>, vector<16x16xbf16>, vector<64x16xf32> -> vector<64x16xf32>
    %49 = arith.addf %43, %48 : vector<64x16xf32>
    %c10 = arith.constant 10 : index
    %c0_44 = arith.constant 0 : index
    %50 = vector.load %arg11[%c10, %c0_44] : memref<80x16xf32, #tpu.memory_space<vmem>>, vector<64x16xf32>
    %51 = arith.truncf %50 : vector<64x16xf32> to vector<64x16xbf16>
    %c7_45 = arith.constant 7 : index
    %c0_46 = arith.constant 0 : index
    %c0_47 = arith.constant 0 : index
    %52 = vector.load %arg2[%c7_45, %c0_46, %c0_47] : memref<11x16x16xbf16, #tpu.memory_space<vmem>>, vector<1x16x16xbf16>
    %53 = vector.shape_cast %52 : vector<1x16x16xbf16> to vector<16x16xbf16>
    %cst_48 = arith.constant dense<0.000000e+00> : vector<64x16xf32>
    %54 = tpu.matmul %51, %53, %cst_48 {dimension_numbers = #tpu.dot_dimension_numbers<[1], [0], [0], [1], [0, 0, 1, 1], [], []>} : vector<64x16xbf16>, vector<16x16xbf16>, vector<64x16xf32> -> vector<64x16xf32>
    %55 = arith.addf %49, %54 : vector<64x16xf32>
    %c11 = arith.constant 11 : index
    %c0_49 = arith.constant 0 : index
    %56 = vector.load %arg11[%c11, %c0_49] : memref<80x16xf32, #tpu.memory_space<vmem>>, vector<64x16xf32>
    %57 = arith.truncf %56 : vector<64x16xf32> to vector<64x16xbf16>
    %c8_50 = arith.constant 8 : index
    %c0_51 = arith.constant 0 : index
    %c0_52 = arith.constant 0 : index
    %58 = vector.load %arg2[%c8_50, %c0_51, %c0_52] : memref<11x16x16xbf16, #tpu.memory_space<vmem>>, vector<1x16x16xbf16>
    %59 = vector.shape_cast %58 : vector<1x16x16xbf16> to vector<16x16xbf16>
    %cst_53 = arith.constant dense<0.000000e+00> : vector<64x16xf32>
    %60 = tpu.matmul %57, %59, %cst_53 {dimension_numbers = #tpu.dot_dimension_numbers<[1], [0], [0], [1], [0, 0, 1, 1], [], []>} : vector<64x16xbf16>, vector<16x16xbf16>, vector<64x16xf32> -> vector<64x16xf32>
    %61 = arith.addf %55, %60 : vector<64x16xf32>
    %c12 = arith.constant 12 : index
    %c0_54 = arith.constant 0 : index
    %62 = vector.load %arg11[%c12, %c0_54] : memref<80x16xf32, #tpu.memory_space<vmem>>, vector<64x16xf32>
    %63 = arith.truncf %62 : vector<64x16xf32> to vector<64x16xbf16>
    %c9_55 = arith.constant 9 : index
    %c0_56 = arith.constant 0 : index
    %c0_57 = arith.constant 0 : index
    %64 = vector.load %arg2[%c9_55, %c0_56, %c0_57] : memref<11x16x16xbf16, #tpu.memory_space<vmem>>, vector<1x16x16xbf16>
    %65 = vector.shape_cast %64 : vector<1x16x16xbf16> to vector<16x16xbf16>
    %cst_58 = arith.constant dense<0.000000e+00> : vector<64x16xf32>
    %66 = tpu.matmul %63, %65, %cst_58 {dimension_numbers = #tpu.dot_dimension_numbers<[1], [0], [0], [1], [0, 0, 1, 1], [], []>} : vector<64x16xbf16>, vector<16x16xbf16>, vector<64x16xf32> -> vector<64x16xf32>
    %67 = arith.addf %61, %66 : vector<64x16xf32>
    %c13 = arith.constant 13 : index
    %c0_59 = arith.constant 0 : index
    %68 = vector.load %arg11[%c13, %c0_59] : memref<80x16xf32, #tpu.memory_space<vmem>>, vector<64x16xf32>
    %69 = arith.truncf %68 : vector<64x16xf32> to vector<64x16xbf16>
    %c10_60 = arith.constant 10 : index
    %c0_61 = arith.constant 0 : index
    %c0_62 = arith.constant 0 : index
    %70 = vector.load %arg2[%c10_60, %c0_61, %c0_62] : memref<11x16x16xbf16, #tpu.memory_space<vmem>>, vector<1x16x16xbf16>
    %71 = vector.shape_cast %70 : vector<1x16x16xbf16> to vector<16x16xbf16>
    %cst_63 = arith.constant dense<0.000000e+00> : vector<64x16xf32>
    %72 = tpu.matmul %69, %71, %cst_63 {dimension_numbers = #tpu.dot_dimension_numbers<[1], [0], [0], [1], [0, 0, 1, 1], [], []>} : vector<64x16xbf16>, vector<16x16xbf16>, vector<64x16xf32> -> vector<64x16xf32>
    %73 = arith.addf %67, %72 : vector<64x16xf32>
    %74 = vector.broadcast %3 : vector<1x16xf32> to vector<64x16xf32>
    %75 = arith.addf %73, %74 : vector<64x16xf32>
    %cst_64 = arith.constant 0.000000e+00 : f32
    %76 = vector.broadcast %cst_64 : f32 to vector<64x16xf32>
    %77 = arith.cmpf ogt, %75, %76 : vector<64x16xf32>
    %78 = vector.broadcast %4 : vector<1x16xf32> to vector<64x16xf32>
    %79 = arith.mulf %78, %75 : vector<64x16xf32>
    %80 = arith.select %77, %75, %79 : vector<64x16xi1>, vector<64x16xf32>
    %81 = tpu.transpose %80, [1, 0] : vector<64x16xf32> -> vector<16x64xf32>
    %c0_65 = arith.constant 0 : index
    %c0_66 = arith.constant 0 : index
    %c0_67 = arith.constant 0 : index
    %82 = vector.load %arg7[%c0_65, %c0_66, %c0_67] : memref<1x16x64xf32, #tpu.memory_space<vmem>>, vector<1x16x64xf32>
    %83 = vector.shape_cast %82 : vector<1x16x64xf32> to vector<16x64xf32>
    %84 = vector.shape_cast %81 : vector<16x64xf32> to vector<1x16x64xf32>
    tpu.vector_store %arg7[%c0_65, %c0_66, %c0_67], %84 {strides = array<i32>} : memref<1x16x64xf32, #tpu.memory_space<vmem>>, vector<1x16x64xf32>,
    %c2_68 = arith.constant 2 : index
    %c0_69 = arith.constant 0 : index
    %85 = vector.load %arg6[%c2_68, %c0_69] : memref<8x128xf32, #tpu.memory_space<vmem>>, vector<1x32xf32>
    %c3_70 = arith.constant 3 : index
    %c0_71 = arith.constant 0 : index
    %86 = vector.load %arg6[%c3_70, %c0_71] : memref<8x128xf32, #tpu.memory_space<vmem>>, vector<1x32xf32>
    %cst_72 = arith.constant 0.000000e+00 : f32
    %87 = vector.broadcast %cst_72 : f32 to vector<8x16xf32>
    %c0_73 = arith.constant 0 : index
    %c0_74 = arith.constant 0 : index
    %88 = vector.load %arg12[%c0_73, %c0_74] : memref<80x16xf32, #tpu.memory_space<vmem>>, vector<8x16xf32>
    tpu.vector_store %arg12[%c0_73, %c0_74], %87 {strides = array<i32>} : memref<80x16xf32, #tpu.memory_space<vmem>>, vector<8x16xf32>,
    %c72_75 = arith.constant 72 : index
    %c0_76 = arith.constant 0 : index
    %89 = vector.load %arg12[%c72_75, %c0_76] : memref<80x16xf32, #tpu.memory_space<vmem>>, vector<8x16xf32>
    tpu.vector_store %arg12[%c72_75, %c0_76], %87 {strides = array<i32>} : memref<80x16xf32, #tpu.memory_space<vmem>>, vector<8x16xf32>,
    %c8_77 = arith.constant 8 : index
    %c0_78 = arith.constant 0 : index
    %90 = vector.load %arg12[%c8_77, %c0_78] : memref<80x16xf32, #tpu.memory_space<vmem>>, vector<64x16xf32>
    tpu.vector_store %arg12[%c8_77, %c0_78], %80 {strides = array<i32>} : memref<80x16xf32, #tpu.memory_space<vmem>>, vector<64x16xf32>,
    %c3_79 = arith.constant 3 : index
    %c0_80 = arith.constant 0 : index
    %91 = tpu.strided_load %arg12[%c3_79, %c0_80] {strides = array<i32: 2, 1>} : memref<80x16xf32, #tpu.memory_space<vmem>>, vector<32x16xf32>
    %92 = arith.truncf %91 : vector<32x16xf32> to vector<32x16xbf16>
    %c0_81 = arith.constant 0 : index
    %c0_82 = arith.constant 0 : index
    %c0_83 = arith.constant 0 : index
    %93 = vector.load %arg3[%c0_81, %c0_82, %c0_83] : memref<11x16x32xbf16, #tpu.memory_space<vmem>>, vector<1x16x32xbf16>
    %94 = vector.shape_cast %93 : vector<1x16x32xbf16> to vector<16x32xbf16>
    %cst_84 = arith.constant dense<0.000000e+00> : vector<32x32xf32>
    %95 = tpu.matmul %92, %94, %cst_84 {dimension_numbers = #tpu.dot_dimension_numbers<[1], [0], [0], [1], [0, 0, 1, 1], [], []>} : vector<32x16xbf16>, vector<16x32xbf16>, vector<32x32xf32> -> vector<32x32xf32>
    %c4_85 = arith.constant 4 : index
    %c0_86 = arith.constant 0 : index
    %96 = tpu.strided_load %arg12[%c4_85, %c0_86] {strides = array<i32: 2, 1>} : memref<80x16xf32, #tpu.memory_space<vmem>>, vector<32x16xf32>
    %97 = arith.truncf %96 : vector<32x16xf32> to vector<32x16xbf16>
    %c1_87 = arith.constant 1 : index
    %c0_88 = arith.constant 0 : index
    %c0_89 = arith.constant 0 : index
    %98 = vector.load %arg3[%c1_87, %c0_88, %c0_89] : memref<11x16x32xbf16, #tpu.memory_space<vmem>>, vector<1x16x32xbf16>
    %99 = vector.shape_cast %98 : vector<1x16x32xbf16> to vector<16x32xbf16>
    %cst_90 = arith.constant dense<0.000000e+00> : vector<32x32xf32>
    %100 = tpu.matmul %97, %99, %cst_90 {dimension_numbers = #tpu.dot_dimension_numbers<[1], [0], [0], [1], [0, 0, 1, 1], [], []>} : vector<32x16xbf16>, vector<16x32xbf16>, vector<32x32xf32> -> vector<32x32xf32>
    %101 = arith.addf %95, %100 : vector<32x32xf32>
    %c5_91 = arith.constant 5 : index
    %c0_92 = arith.constant 0 : index
    %102 = tpu.strided_load %arg12[%c5_91, %c0_92] {strides = array<i32: 2, 1>} : memref<80x16xf32, #tpu.memory_space<vmem>>, vector<32x16xf32>
    %103 = arith.truncf %102 : vector<32x16xf32> to vector<32x16xbf16>
    %c2_93 = arith.constant 2 : index
    %c0_94 = arith.constant 0 : index
    %c0_95 = arith.constant 0 : index
    %104 = vector.load %arg3[%c2_93, %c0_94, %c0_95] : memref<11x16x32xbf16, #tpu.memory_space<vmem>>, vector<1x16x32xbf16>
    %105 = vector.shape_cast %104 : vector<1x16x32xbf16> to vector<16x32xbf16>
    %cst_96 = arith.constant dense<0.000000e+00> : vector<32x32xf32>
    %106 = tpu.matmul %103, %105, %cst_96 {dimension_numbers = #tpu.dot_dimension_numbers<[1], [0], [0], [1], [0, 0, 1, 1], [], []>} : vector<32x16xbf16>, vector<16x32xbf16>, vector<32x32xf32> -> vector<32x32xf32>
    %107 = arith.addf %101, %106 : vector<32x32xf32>
    %c6_97 = arith.constant 6 : index
    %c0_98 = arith.constant 0 : index
    %108 = tpu.strided_load %arg12[%c6_97, %c0_98] {strides = array<i32: 2, 1>} : memref<80x16xf32, #tpu.memory_space<vmem>>, vector<32x16xf32>
    %109 = arith.truncf %108 : vector<32x16xf32> to vector<32x16xbf16>
    %c3_99 = arith.constant 3 : index
    %c0_100 = arith.constant 0 : index
    %c0_101 = arith.constant 0 : index
    %110 = vector.load %arg3[%c3_99, %c0_100, %c0_101] : memref<11x16x32xbf16, #tpu.memory_space<vmem>>, vector<1x16x32xbf16>
    %111 = vector.shape_cast %110 : vector<1x16x32xbf16> to vector<16x32xbf16>
    %cst_102 = arith.constant dense<0.000000e+00> : vector<32x32xf32>
    %112 = tpu.matmul %109, %111, %cst_102 {dimension_numbers = #tpu.dot_dimension_numbers<[1], [0], [0], [1], [0, 0, 1, 1], [], []>} : vector<32x16xbf16>, vector<16x32xbf16>, vector<32x32xf32> -> vector<32x32xf32>
    %113 = arith.addf %107, %112 : vector<32x32xf32>
    %c7_103 = arith.constant 7 : index
    %c0_104 = arith.constant 0 : index
    %114 = tpu.strided_load %arg12[%c7_103, %c0_104] {strides = array<i32: 2, 1>} : memref<80x16xf32, #tpu.memory_space<vmem>>, vector<32x16xf32>
    %115 = arith.truncf %114 : vector<32x16xf32> to vector<32x16xbf16>
    %c4_105 = arith.constant 4 : index
    %c0_106 = arith.constant 0 : index
    %c0_107 = arith.constant 0 : index
    %116 = vector.load %arg3[%c4_105, %c0_106, %c0_107] : memref<11x16x32xbf16, #tpu.memory_space<vmem>>, vector<1x16x32xbf16>
    %117 = vector.shape_cast %116 : vector<1x16x32xbf16> to vector<16x32xbf16>
    %cst_108 = arith.constant dense<0.000000e+00> : vector<32x32xf32>
    %118 = tpu.matmul %115, %117, %cst_108 {dimension_numbers = #tpu.dot_dimension_numbers<[1], [0], [0], [1], [0, 0, 1, 1], [], []>} : vector<32x16xbf16>, vector<16x32xbf16>, vector<32x32xf32> -> vector<32x32xf32>
    %119 = arith.addf %113, %118 : vector<32x32xf32>
    %c8_109 = arith.constant 8 : index
    %c0_110 = arith.constant 0 : index
    %120 = tpu.strided_load %arg12[%c8_109, %c0_110] {strides = array<i32: 2, 1>} : memref<80x16xf32, #tpu.memory_space<vmem>>, vector<32x16xf32>
    %121 = arith.truncf %120 : vector<32x16xf32> to vector<32x16xbf16>
    %c5_111 = arith.constant 5 : index
    %c0_112 = arith.constant 0 : index
    %c0_113 = arith.constant 0 : index
    %122 = vector.load %arg3[%c5_111, %c0_112, %c0_113] : memref<11x16x32xbf16, #tpu.memory_space<vmem>>, vector<1x16x32xbf16>
    %123 = vector.shape_cast %122 : vector<1x16x32xbf16> to vector<16x32xbf16>
    %cst_114 = arith.constant dense<0.000000e+00> : vector<32x32xf32>
    %124 = tpu.matmul %121, %123, %cst_114 {dimension_numbers = #tpu.dot_dimension_numbers<[1], [0], [0], [1], [0, 0, 1, 1], [], []>} : vector<32x16xbf16>, vector<16x32xbf16>, vector<32x32xf32> -> vector<32x32xf32>
    %125 = arith.addf %119, %124 : vector<32x32xf32>
    %c9_115 = arith.constant 9 : index
    %c0_116 = arith.constant 0 : index
    %126 = tpu.strided_load %arg12[%c9_115, %c0_116] {strides = array<i32: 2, 1>} : memref<80x16xf32, #tpu.memory_space<vmem>>, vector<32x16xf32>
    %127 = arith.truncf %126 : vector<32x16xf32> to vector<32x16xbf16>
    %c6_117 = arith.constant 6 : index
    %c0_118 = arith.constant 0 : index
    %c0_119 = arith.constant 0 : index
    %128 = vector.load %arg3[%c6_117, %c0_118, %c0_119] : memref<11x16x32xbf16, #tpu.memory_space<vmem>>, vector<1x16x32xbf16>
    %129 = vector.shape_cast %128 : vector<1x16x32xbf16> to vector<16x32xbf16>
    %cst_120 = arith.constant dense<0.000000e+00> : vector<32x32xf32>
    %130 = tpu.matmul %127, %129, %cst_120 {dimension_numbers = #tpu.dot_dimension_numbers<[1], [0], [0], [1], [0, 0, 1, 1], [], []>} : vector<32x16xbf16>, vector<16x32xbf16>, vector<32x32xf32> -> vector<32x32xf32>
    %131 = arith.addf %125, %130 : vector<32x32xf32>
    %c10_121 = arith.constant 10 : index
    %c0_122 = arith.constant 0 : index
    %132 = tpu.strided_load %arg12[%c10_121, %c0_122] {strides = array<i32: 2, 1>} : memref<80x16xf32, #tpu.memory_space<vmem>>, vector<32x16xf32>
    %133 = arith.truncf %132 : vector<32x16xf32> to vector<32x16xbf16>
    %c7_123 = arith.constant 7 : index
    %c0_124 = arith.constant 0 : index
    %c0_125 = arith.constant 0 : index
    %134 = vector.load %arg3[%c7_123, %c0_124, %c0_125] : memref<11x16x32xbf16, #tpu.memory_space<vmem>>, vector<1x16x32xbf16>
    %135 = vector.shape_cast %134 : vector<1x16x32xbf16> to vector<16x32xbf16>
    %cst_126 = arith.constant dense<0.000000e+00> : vector<32x32xf32>
    %136 = tpu.matmul %133, %135, %cst_126 {dimension_numbers = #tpu.dot_dimension_numbers<[1], [0], [0], [1], [0, 0, 1, 1], [], []>} : vector<32x16xbf16>, vector<16x32xbf16>, vector<32x32xf32> -> vector<32x32xf32>
    %137 = arith.addf %131, %136 : vector<32x32xf32>
    %c11_127 = arith.constant 11 : index
    %c0_128 = arith.constant 0 : index
    %138 = tpu.strided_load %arg12[%c11_127, %c0_128] {strides = array<i32: 2, 1>} : memref<80x16xf32, #tpu.memory_space<vmem>>, vector<32x16xf32>
    %139 = arith.truncf %138 : vector<32x16xf32> to vector<32x16xbf16>
    %c8_129 = arith.constant 8 : index
    %c0_130 = arith.constant 0 : index
    %c0_131 = arith.constant 0 : index
    %140 = vector.load %arg3[%c8_129, %c0_130, %c0_131] : memref<11x16x32xbf16, #tpu.memory_space<vmem>>, vector<1x16x32xbf16>
    %141 = vector.shape_cast %140 : vector<1x16x32xbf16> to vector<16x32xbf16>
    %cst_132 = arith.constant dense<0.000000e+00> : vector<32x32xf32>
    %142 = tpu.matmul %139, %141, %cst_132 {dimension_numbers = #tpu.dot_dimension_numbers<[1], [0], [0], [1], [0, 0, 1, 1], [], []>} : vector<32x16xbf16>, vector<16x32xbf16>, vector<32x32xf32> -> vector<32x32xf32>
    %143 = arith.addf %137, %142 : vector<32x32xf32>
    %c12_133 = arith.constant 12 : index
    %c0_134 = arith.constant 0 : index
    %144 = tpu.strided_load %arg12[%c12_133, %c0_134] {strides = array<i32: 2, 1>} : memref<80x16xf32, #tpu.memory_space<vmem>>, vector<32x16xf32>
    %145 = arith.truncf %144 : vector<32x16xf32> to vector<32x16xbf16>
    %c9_135 = arith.constant 9 : index
    %c0_136 = arith.constant 0 : index
    %c0_137 = arith.constant 0 : index
    %146 = vector.load %arg3[%c9_135, %c0_136, %c0_137] : memref<11x16x32xbf16, #tpu.memory_space<vmem>>, vector<1x16x32xbf16>
    %147 = vector.shape_cast %146 : vector<1x16x32xbf16> to vector<16x32xbf16>
    %cst_138 = arith.constant dense<0.000000e+00> : vector<32x32xf32>
    %148 = tpu.matmul %145, %147, %cst_138 {dimension_numbers = #tpu.dot_dimension_numbers<[1], [0], [0], [1], [0, 0, 1, 1], [], []>} : vector<32x16xbf16>, vector<16x32xbf16>, vector<32x32xf32> -> vector<32x32xf32>
    %149 = arith.addf %143, %148 : vector<32x32xf32>
    %c13_139 = arith.constant 13 : index
    %c0_140 = arith.constant 0 : index
    %150 = tpu.strided_load %arg12[%c13_139, %c0_140] {strides = array<i32: 2, 1>} : memref<80x16xf32, #tpu.memory_space<vmem>>, vector<32x16xf32>
    %151 = arith.truncf %150 : vector<32x16xf32> to vector<32x16xbf16>
    %c10_141 = arith.constant 10 : index
    %c0_142 = arith.constant 0 : index
    %c0_143 = arith.constant 0 : index
    %152 = vector.load %arg3[%c10_141, %c0_142, %c0_143] : memref<11x16x32xbf16, #tpu.memory_space<vmem>>, vector<1x16x32xbf16>
    %153 = vector.shape_cast %152 : vector<1x16x32xbf16> to vector<16x32xbf16>
    %cst_144 = arith.constant dense<0.000000e+00> : vector<32x32xf32>
    %154 = tpu.matmul %151, %153, %cst_144 {dimension_numbers = #tpu.dot_dimension_numbers<[1], [0], [0], [1], [0, 0, 1, 1], [], []>} : vector<32x16xbf16>, vector<16x32xbf16>, vector<32x32xf32> -> vector<32x32xf32>
    %155 = arith.addf %149, %154 : vector<32x32xf32>
    %156 = vector.broadcast %85 : vector<1x32xf32> to vector<32x32xf32>
    %157 = arith.addf %155, %156 : vector<32x32xf32>
    %cst_145 = arith.constant 0.000000e+00 : f32
    %158 = vector.broadcast %cst_145 : f32 to vector<32x32xf32>
    %159 = arith.cmpf ogt, %157, %158 : vector<32x32xf32>
    %160 = vector.broadcast %86 : vector<1x32xf32> to vector<32x32xf32>
    %161 = arith.mulf %160, %157 : vector<32x32xf32>
    %162 = arith.select %159, %157, %161 : vector<32x32xi1>, vector<32x32xf32>
    %163 = tpu.transpose %162, [1, 0] : vector<32x32xf32> -> vector<32x32xf32>
    %c0_146 = arith.constant 0 : index
    %c0_147 = arith.constant 0 : index
    %c0_148 = arith.constant 0 : index
    %164 = vector.load %arg8[%c0_146, %c0_147, %c0_148] : memref<1x32x32xf32, #tpu.memory_space<vmem>>, vector<1x32x32xf32>
    %165 = vector.shape_cast %164 : vector<1x32x32xf32> to vector<32x32xf32>
    %166 = vector.shape_cast %163 : vector<32x32xf32> to vector<1x32x32xf32>
    tpu.vector_store %arg8[%c0_146, %c0_147, %c0_148], %166 {strides = array<i32>} : memref<1x32x32xf32, #tpu.memory_space<vmem>>, vector<1x32x32xf32>,
    %c4_149 = arith.constant 4 : index
    %c0_150 = arith.constant 0 : index
    %167 = vector.load %arg6[%c4_149, %c0_150] : memref<8x128xf32, #tpu.memory_space<vmem>>, vector<1x64xf32>
    %c5_151 = arith.constant 5 : index
    %c0_152 = arith.constant 0 : index
    %168 = vector.load %arg6[%c5_151, %c0_152] : memref<8x128xf32, #tpu.memory_space<vmem>>, vector<1x64xf32>
    %cst_153 = arith.constant 0.000000e+00 : f32
    %169 = vector.broadcast %cst_153 : f32 to vector<8x32xf32>
    %c0_154 = arith.constant 0 : index
    %c0_155 = arith.constant 0 : index
    %170 = vector.load %arg13[%c0_154, %c0_155] : memref<48x32xf32, #tpu.memory_space<vmem>>, vector<8x32xf32>
    tpu.vector_store %arg13[%c0_154, %c0_155], %169 {strides = array<i32>} : memref<48x32xf32, #tpu.memory_space<vmem>>, vector<8x32xf32>,
    %c40 = arith.constant 40 : index
    %c0_156 = arith.constant 0 : index
    %171 = vector.load %arg13[%c40, %c0_156] : memref<48x32xf32, #tpu.memory_space<vmem>>, vector<8x32xf32>
    tpu.vector_store %arg13[%c40, %c0_156], %169 {strides = array<i32>} : memref<48x32xf32, #tpu.memory_space<vmem>>, vector<8x32xf32>,
    %c8_157 = arith.constant 8 : index
    %c0_158 = arith.constant 0 : index
    %172 = vector.load %arg13[%c8_157, %c0_158] : memref<48x32xf32, #tpu.memory_space<vmem>>, vector<32x32xf32>
    tpu.vector_store %arg13[%c8_157, %c0_158], %162 {strides = array<i32>} : memref<48x32xf32, #tpu.memory_space<vmem>>, vector<32x32xf32>,
    %c3_159 = arith.constant 3 : index
    %c0_160 = arith.constant 0 : index
    %173 = tpu.strided_load %arg13[%c3_159, %c0_160] {strides = array<i32: 2, 1>} : memref<48x32xf32, #tpu.memory_space<vmem>>, vector<16x32xf32>
    %174 = arith.truncf %173 : vector<16x32xf32> to vector<16x32xbf16>
    %c0_161 = arith.constant 0 : index
    %c0_162 = arith.constant 0 : index
    %c0_163 = arith.constant 0 : index
    %175 = vector.load %arg4[%c0_161, %c0_162, %c0_163] : memref<11x32x64xbf16, #tpu.memory_space<vmem>>, vector<1x32x64xbf16>
    %176 = vector.shape_cast %175 : vector<1x32x64xbf16> to vector<32x64xbf16>
    %cst_164 = arith.constant dense<0.000000e+00> : vector<16x64xf32>
    %177 = tpu.matmul %174, %176, %cst_164 {dimension_numbers = #tpu.dot_dimension_numbers<[1], [0], [0], [1], [0, 0, 1, 1], [], []>} : vector<16x32xbf16>, vector<32x64xbf16>, vector<16x64xf32> -> vector<16x64xf32>
    %c4_165 = arith.constant 4 : index
    %c0_166 = arith.constant 0 : index
    %178 = tpu.strided_load %arg13[%c4_165, %c0_166] {strides = array<i32: 2, 1>} : memref<48x32xf32, #tpu.memory_space<vmem>>, vector<16x32xf32>
    %179 = arith.truncf %178 : vector<16x32xf32> to vector<16x32xbf16>
    %c1_167 = arith.constant 1 : index
    %c0_168 = arith.constant 0 : index
    %c0_169 = arith.constant 0 : index
    %180 = vector.load %arg4[%c1_167, %c0_168, %c0_169] : memref<11x32x64xbf16, #tpu.memory_space<vmem>>, vector<1x32x64xbf16>
    %181 = vector.shape_cast %180 : vector<1x32x64xbf16> to vector<32x64xbf16>
    %cst_170 = arith.constant dense<0.000000e+00> : vector<16x64xf32>
    %182 = tpu.matmul %179, %181, %cst_170 {dimension_numbers = #tpu.dot_dimension_numbers<[1], [0], [0], [1], [0, 0, 1, 1], [], []>} : vector<16x32xbf16>, vector<32x64xbf16>, vector<16x64xf32> -> vector<16x64xf32>
    %183 = arith.addf %177, %182 : vector<16x64xf32>
    %c5_171 = arith.constant 5 : index
    %c0_172 = arith.constant 0 : index
    %184 = tpu.strided_load %arg13[%c5_171, %c0_172] {strides = array<i32: 2, 1>} : memref<48x32xf32, #tpu.memory_space<vmem>>, vector<16x32xf32>
    %185 = arith.truncf %184 : vector<16x32xf32> to vector<16x32xbf16>
    %c2_173 = arith.constant 2 : index
    %c0_174 = arith.constant 0 : index
    %c0_175 = arith.constant 0 : index
    %186 = vector.load %arg4[%c2_173, %c0_174, %c0_175] : memref<11x32x64xbf16, #tpu.memory_space<vmem>>, vector<1x32x64xbf16>
    %187 = vector.shape_cast %186 : vector<1x32x64xbf16> to vector<32x64xbf16>
    %cst_176 = arith.constant dense<0.000000e+00> : vector<16x64xf32>
    %188 = tpu.matmul %185, %187, %cst_176 {dimension_numbers = #tpu.dot_dimension_numbers<[1], [0], [0], [1], [0, 0, 1, 1], [], []>} : vector<16x32xbf16>, vector<32x64xbf16>, vector<16x64xf32> -> vector<16x64xf32>
    %189 = arith.addf %183, %188 : vector<16x64xf32>
    %c6_177 = arith.constant 6 : index
    %c0_178 = arith.constant 0 : index
    %190 = tpu.strided_load %arg13[%c6_177, %c0_178] {strides = array<i32: 2, 1>} : memref<48x32xf32, #tpu.memory_space<vmem>>, vector<16x32xf32>
    %191 = arith.truncf %190 : vector<16x32xf32> to vector<16x32xbf16>
    %c3_179 = arith.constant 3 : index
    %c0_180 = arith.constant 0 : index
    %c0_181 = arith.constant 0 : index
    %192 = vector.load %arg4[%c3_179, %c0_180, %c0_181] : memref<11x32x64xbf16, #tpu.memory_space<vmem>>, vector<1x32x64xbf16>
    %193 = vector.shape_cast %192 : vector<1x32x64xbf16> to vector<32x64xbf16>
    %cst_182 = arith.constant dense<0.000000e+00> : vector<16x64xf32>
    %194 = tpu.matmul %191, %193, %cst_182 {dimension_numbers = #tpu.dot_dimension_numbers<[1], [0], [0], [1], [0, 0, 1, 1], [], []>} : vector<16x32xbf16>, vector<32x64xbf16>, vector<16x64xf32> -> vector<16x64xf32>
    %195 = arith.addf %189, %194 : vector<16x64xf32>
    %c7_183 = arith.constant 7 : index
    %c0_184 = arith.constant 0 : index
    %196 = tpu.strided_load %arg13[%c7_183, %c0_184] {strides = array<i32: 2, 1>} : memref<48x32xf32, #tpu.memory_space<vmem>>, vector<16x32xf32>
    %197 = arith.truncf %196 : vector<16x32xf32> to vector<16x32xbf16>
    %c4_185 = arith.constant 4 : index
    %c0_186 = arith.constant 0 : index
    %c0_187 = arith.constant 0 : index
    %198 = vector.load %arg4[%c4_185, %c0_186, %c0_187] : memref<11x32x64xbf16, #tpu.memory_space<vmem>>, vector<1x32x64xbf16>
    %199 = vector.shape_cast %198 : vector<1x32x64xbf16> to vector<32x64xbf16>
    %cst_188 = arith.constant dense<0.000000e+00> : vector<16x64xf32>
    %200 = tpu.matmul %197, %199, %cst_188 {dimension_numbers = #tpu.dot_dimension_numbers<[1], [0], [0], [1], [0, 0, 1, 1], [], []>} : vector<16x32xbf16>, vector<32x64xbf16>, vector<16x64xf32> -> vector<16x64xf32>
    %201 = arith.addf %195, %200 : vector<16x64xf32>
    %c8_189 = arith.constant 8 : index
    %c0_190 = arith.constant 0 : index
    %202 = tpu.strided_load %arg13[%c8_189, %c0_190] {strides = array<i32: 2, 1>} : memref<48x32xf32, #tpu.memory_space<vmem>>, vector<16x32xf32>
    %203 = arith.truncf %202 : vector<16x32xf32> to vector<16x32xbf16>
    %c5_191 = arith.constant 5 : index
    %c0_192 = arith.constant 0 : index
    %c0_193 = arith.constant 0 : index
    %204 = vector.load %arg4[%c5_191, %c0_192, %c0_193] : memref<11x32x64xbf16, #tpu.memory_space<vmem>>, vector<1x32x64xbf16>
    %205 = vector.shape_cast %204 : vector<1x32x64xbf16> to vector<32x64xbf16>
    %cst_194 = arith.constant dense<0.000000e+00> : vector<16x64xf32>
    %206 = tpu.matmul %203, %205, %cst_194 {dimension_numbers = #tpu.dot_dimension_numbers<[1], [0], [0], [1], [0, 0, 1, 1], [], []>} : vector<16x32xbf16>, vector<32x64xbf16>, vector<16x64xf32> -> vector<16x64xf32>
    %207 = arith.addf %201, %206 : vector<16x64xf32>
    %c9_195 = arith.constant 9 : index
    %c0_196 = arith.constant 0 : index
    %208 = tpu.strided_load %arg13[%c9_195, %c0_196] {strides = array<i32: 2, 1>} : memref<48x32xf32, #tpu.memory_space<vmem>>, vector<16x32xf32>
    %209 = arith.truncf %208 : vector<16x32xf32> to vector<16x32xbf16>
    %c6_197 = arith.constant 6 : index
    %c0_198 = arith.constant 0 : index
    %c0_199 = arith.constant 0 : index
    %210 = vector.load %arg4[%c6_197, %c0_198, %c0_199] : memref<11x32x64xbf16, #tpu.memory_space<vmem>>, vector<1x32x64xbf16>
    %211 = vector.shape_cast %210 : vector<1x32x64xbf16> to vector<32x64xbf16>
    %cst_200 = arith.constant dense<0.000000e+00> : vector<16x64xf32>
    %212 = tpu.matmul %209, %211, %cst_200 {dimension_numbers = #tpu.dot_dimension_numbers<[1], [0], [0], [1], [0, 0, 1, 1], [], []>} : vector<16x32xbf16>, vector<32x64xbf16>, vector<16x64xf32> -> vector<16x64xf32>
    %213 = arith.addf %207, %212 : vector<16x64xf32>
    %c10_201 = arith.constant 10 : index
    %c0_202 = arith.constant 0 : index
    %214 = tpu.strided_load %arg13[%c10_201, %c0_202] {strides = array<i32: 2, 1>} : memref<48x32xf32, #tpu.memory_space<vmem>>, vector<16x32xf32>
    %215 = arith.truncf %214 : vector<16x32xf32> to vector<16x32xbf16>
    %c7_203 = arith.constant 7 : index
    %c0_204 = arith.constant 0 : index
    %c0_205 = arith.constant 0 : index
    %216 = vector.load %arg4[%c7_203, %c0_204, %c0_205] : memref<11x32x64xbf16, #tpu.memory_space<vmem>>, vector<1x32x64xbf16>
    %217 = vector.shape_cast %216 : vector<1x32x64xbf16> to vector<32x64xbf16>
    %cst_206 = arith.constant dense<0.000000e+00> : vector<16x64xf32>
    %218 = tpu.matmul %215, %217, %cst_206 {dimension_numbers = #tpu.dot_dimension_numbers<[1], [0], [0], [1], [0, 0, 1, 1], [], []>} : vector<16x32xbf16>, vector<32x64xbf16>, vector<16x64xf32> -> vector<16x64xf32>
    %219 = arith.addf %213, %218 : vector<16x64xf32>
    %c11_207 = arith.constant 11 : index
    %c0_208 = arith.constant 0 : index
    %220 = tpu.strided_load %arg13[%c11_207, %c0_208] {strides = array<i32: 2, 1>} : memref<48x32xf32, #tpu.memory_space<vmem>>, vector<16x32xf32>
    %221 = arith.truncf %220 : vector<16x32xf32> to vector<16x32xbf16>
    %c8_209 = arith.constant 8 : index
    %c0_210 = arith.constant 0 : index
    %c0_211 = arith.constant 0 : index
    %222 = vector.load %arg4[%c8_209, %c0_210, %c0_211] : memref<11x32x64xbf16, #tpu.memory_space<vmem>>, vector<1x32x64xbf16>
    %223 = vector.shape_cast %222 : vector<1x32x64xbf16> to vector<32x64xbf16>
    %cst_212 = arith.constant dense<0.000000e+00> : vector<16x64xf32>
    %224 = tpu.matmul %221, %223, %cst_212 {dimension_numbers = #tpu.dot_dimension_numbers<[1], [0], [0], [1], [0, 0, 1, 1], [], []>} : vector<16x32xbf16>, vector<32x64xbf16>, vector<16x64xf32> -> vector<16x64xf32>
    %225 = arith.addf %219, %224 : vector<16x64xf32>
    %c12_213 = arith.constant 12 : index
    %c0_214 = arith.constant 0 : index
    %226 = tpu.strided_load %arg13[%c12_213, %c0_214] {strides = array<i32: 2, 1>} : memref<48x32xf32, #tpu.memory_space<vmem>>, vector<16x32xf32>
    %227 = arith.truncf %226 : vector<16x32xf32> to vector<16x32xbf16>
    %c9_215 = arith.constant 9 : index
    %c0_216 = arith.constant 0 : index
    %c0_217 = arith.constant 0 : index
    %228 = vector.load %arg4[%c9_215, %c0_216, %c0_217] : memref<11x32x64xbf16, #tpu.memory_space<vmem>>, vector<1x32x64xbf16>
    %229 = vector.shape_cast %228 : vector<1x32x64xbf16> to vector<32x64xbf16>
    %cst_218 = arith.constant dense<0.000000e+00> : vector<16x64xf32>
    %230 = tpu.matmul %227, %229, %cst_218 {dimension_numbers = #tpu.dot_dimension_numbers<[1], [0], [0], [1], [0, 0, 1, 1], [], []>} : vector<16x32xbf16>, vector<32x64xbf16>, vector<16x64xf32> -> vector<16x64xf32>
    %231 = arith.addf %225, %230 : vector<16x64xf32>
    %c13_219 = arith.constant 13 : index
    %c0_220 = arith.constant 0 : index
    %232 = tpu.strided_load %arg13[%c13_219, %c0_220] {strides = array<i32: 2, 1>} : memref<48x32xf32, #tpu.memory_space<vmem>>, vector<16x32xf32>
    %233 = arith.truncf %232 : vector<16x32xf32> to vector<16x32xbf16>
    %c10_221 = arith.constant 10 : index
    %c0_222 = arith.constant 0 : index
    %c0_223 = arith.constant 0 : index
    %234 = vector.load %arg4[%c10_221, %c0_222, %c0_223] : memref<11x32x64xbf16, #tpu.memory_space<vmem>>, vector<1x32x64xbf16>
    %235 = vector.shape_cast %234 : vector<1x32x64xbf16> to vector<32x64xbf16>
    %cst_224 = arith.constant dense<0.000000e+00> : vector<16x64xf32>
    %236 = tpu.matmul %233, %235, %cst_224 {dimension_numbers = #tpu.dot_dimension_numbers<[1], [0], [0], [1], [0, 0, 1, 1], [], []>} : vector<16x32xbf16>, vector<32x64xbf16>, vector<16x64xf32> -> vector<16x64xf32>
    %237 = arith.addf %231, %236 : vector<16x64xf32>
    %238 = vector.broadcast %167 : vector<1x64xf32> to vector<16x64xf32>
    %239 = arith.addf %237, %238 : vector<16x64xf32>
    %cst_225 = arith.constant 0.000000e+00 : f32
    %240 = vector.broadcast %cst_225 : f32 to vector<16x64xf32>
    %241 = arith.cmpf ogt, %239, %240 : vector<16x64xf32>
    %242 = vector.broadcast %168 : vector<1x64xf32> to vector<16x64xf32>
    %243 = arith.mulf %242, %239 : vector<16x64xf32>
    %244 = arith.select %241, %239, %243 : vector<16x64xi1>, vector<16x64xf32>
    %245 = tpu.transpose %244, [1, 0] : vector<16x64xf32> -> vector<64x16xf32>
    %c0_226 = arith.constant 0 : index
    %c0_227 = arith.constant 0 : index
    %c0_228 = arith.constant 0 : index
    %246 = vector.load %arg9[%c0_226, %c0_227, %c0_228] : memref<1x64x16xf32, #tpu.memory_space<vmem>>, vector<1x64x16xf32>
    %247 = vector.shape_cast %246 : vector<1x64x16xf32> to vector<64x16xf32>
    %248 = vector.shape_cast %245 : vector<64x16xf32> to vector<1x64x16xf32>
    tpu.vector_store %arg9[%c0_226, %c0_227, %c0_228], %248 {strides = array<i32>} : memref<1x64x16xf32, #tpu.memory_space<vmem>>, vector<1x64x16xf32>,
    %c6_229 = arith.constant 6 : index
    %c0_230 = arith.constant 0 : index
    %249 = vector.load %arg6[%c6_229, %c0_230] : memref<8x128xf32, #tpu.memory_space<vmem>>, vector<1x128xf32>
    %c7_231 = arith.constant 7 : index
    %c0_232 = arith.constant 0 : index
    %250 = vector.load %arg6[%c7_231, %c0_232] : memref<8x128xf32, #tpu.memory_space<vmem>>, vector<1x128xf32>
    %cst_233 = arith.constant 0.000000e+00 : f32
    %251 = vector.broadcast %cst_233 : f32 to vector<8x64xf32>
    %c0_234 = arith.constant 0 : index
    %c0_235 = arith.constant 0 : index
    %252 = vector.load %arg14[%c0_234, %c0_235] : memref<32x64xf32, #tpu.memory_space<vmem>>, vector<8x64xf32>
    tpu.vector_store %arg14[%c0_234, %c0_235], %251 {strides = array<i32>} : memref<32x64xf32, #tpu.memory_space<vmem>>, vector<8x64xf32>,
    %c24 = arith.constant 24 : index
    %c0_236 = arith.constant 0 : index
    %253 = vector.load %arg14[%c24, %c0_236] : memref<32x64xf32, #tpu.memory_space<vmem>>, vector<8x64xf32>
    tpu.vector_store %arg14[%c24, %c0_236], %251 {strides = array<i32>} : memref<32x64xf32, #tpu.memory_space<vmem>>, vector<8x64xf32>,
    %c8_237 = arith.constant 8 : index
    %c0_238 = arith.constant 0 : index
    %254 = vector.load %arg14[%c8_237, %c0_238] : memref<32x64xf32, #tpu.memory_space<vmem>>, vector<16x64xf32>
    tpu.vector_store %arg14[%c8_237, %c0_238], %244 {strides = array<i32>} : memref<32x64xf32, #tpu.memory_space<vmem>>, vector<16x64xf32>,
    %c3_239 = arith.constant 3 : index
    %c0_240 = arith.constant 0 : index
    %255 = tpu.strided_load %arg14[%c3_239, %c0_240] {strides = array<i32: 2, 1>} : memref<32x64xf32, #tpu.memory_space<vmem>>, vector<8x64xf32>
    %256 = arith.truncf %255 : vector<8x64xf32> to vector<8x64xbf16>
    %c0_241 = arith.constant 0 : index
    %c0_242 = arith.constant 0 : index
    %c0_243 = arith.constant 0 : index
    %257 = vector.load %arg5[%c0_241, %c0_242, %c0_243] : memref<11x64x128xbf16, #tpu.memory_space<vmem>>, vector<1x64x128xbf16>
    %258 = vector.shape_cast %257 : vector<1x64x128xbf16> to vector<64x128xbf16>
    %cst_244 = arith.constant dense<0.000000e+00> : vector<8x128xf32>
    %259 = tpu.matmul %256, %258, %cst_244 {dimension_numbers = #tpu.dot_dimension_numbers<[1], [0], [0], [1], [0, 0, 1, 1], [], []>} : vector<8x64xbf16>, vector<64x128xbf16>, vector<8x128xf32> -> vector<8x128xf32>
    %c4_245 = arith.constant 4 : index
    %c0_246 = arith.constant 0 : index
    %260 = tpu.strided_load %arg14[%c4_245, %c0_246] {strides = array<i32: 2, 1>} : memref<32x64xf32, #tpu.memory_space<vmem>>, vector<8x64xf32>
    %261 = arith.truncf %260 : vector<8x64xf32> to vector<8x64xbf16>
    %c1_247 = arith.constant 1 : index
    %c0_248 = arith.constant 0 : index
    %c0_249 = arith.constant 0 : index
    %262 = vector.load %arg5[%c1_247, %c0_248, %c0_249] : memref<11x64x128xbf16, #tpu.memory_space<vmem>>, vector<1x64x128xbf16>
    %263 = vector.shape_cast %262 : vector<1x64x128xbf16> to vector<64x128xbf16>
    %cst_250 = arith.constant dense<0.000000e+00> : vector<8x128xf32>
    %264 = tpu.matmul %261, %263, %cst_250 {dimension_numbers = #tpu.dot_dimension_numbers<[1], [0], [0], [1], [0, 0, 1, 1], [], []>} : vector<8x64xbf16>, vector<64x128xbf16>, vector<8x128xf32> -> vector<8x128xf32>
    %265 = arith.addf %259, %264 : vector<8x128xf32>
    %c5_251 = arith.constant 5 : index
    %c0_252 = arith.constant 0 : index
    %266 = tpu.strided_load %arg14[%c5_251, %c0_252] {strides = array<i32: 2, 1>} : memref<32x64xf32, #tpu.memory_space<vmem>>, vector<8x64xf32>
    %267 = arith.truncf %266 : vector<8x64xf32> to vector<8x64xbf16>
    %c2_253 = arith.constant 2 : index
    %c0_254 = arith.constant 0 : index
    %c0_255 = arith.constant 0 : index
    %268 = vector.load %arg5[%c2_253, %c0_254, %c0_255] : memref<11x64x128xbf16, #tpu.memory_space<vmem>>, vector<1x64x128xbf16>
    %269 = vector.shape_cast %268 : vector<1x64x128xbf16> to vector<64x128xbf16>
    %cst_256 = arith.constant dense<0.000000e+00> : vector<8x128xf32>
    %270 = tpu.matmul %267, %269, %cst_256 {dimension_numbers = #tpu.dot_dimension_numbers<[1], [0], [0], [1], [0, 0, 1, 1], [], []>} : vector<8x64xbf16>, vector<64x128xbf16>, vector<8x128xf32> -> vector<8x128xf32>
    %271 = arith.addf %265, %270 : vector<8x128xf32>
    %c6_257 = arith.constant 6 : index
    %c0_258 = arith.constant 0 : index
    %272 = tpu.strided_load %arg14[%c6_257, %c0_258] {strides = array<i32: 2, 1>} : memref<32x64xf32, #tpu.memory_space<vmem>>, vector<8x64xf32>
    %273 = arith.truncf %272 : vector<8x64xf32> to vector<8x64xbf16>
    %c3_259 = arith.constant 3 : index
    %c0_260 = arith.constant 0 : index
    %c0_261 = arith.constant 0 : index
    %274 = vector.load %arg5[%c3_259, %c0_260, %c0_261] : memref<11x64x128xbf16, #tpu.memory_space<vmem>>, vector<1x64x128xbf16>
    %275 = vector.shape_cast %274 : vector<1x64x128xbf16> to vector<64x128xbf16>
    %cst_262 = arith.constant dense<0.000000e+00> : vector<8x128xf32>
    %276 = tpu.matmul %273, %275, %cst_262 {dimension_numbers = #tpu.dot_dimension_numbers<[1], [0], [0], [1], [0, 0, 1, 1], [], []>} : vector<8x64xbf16>, vector<64x128xbf16>, vector<8x128xf32> -> vector<8x128xf32>
    %277 = arith.addf %271, %276 : vector<8x128xf32>
    %c7_263 = arith.constant 7 : index
    %c0_264 = arith.constant 0 : index
    %278 = tpu.strided_load %arg14[%c7_263, %c0_264] {strides = array<i32: 2, 1>} : memref<32x64xf32, #tpu.memory_space<vmem>>, vector<8x64xf32>
    %279 = arith.truncf %278 : vector<8x64xf32> to vector<8x64xbf16>
    %c4_265 = arith.constant 4 : index
    %c0_266 = arith.constant 0 : index
    %c0_267 = arith.constant 0 : index
    %280 = vector.load %arg5[%c4_265, %c0_266, %c0_267] : memref<11x64x128xbf16, #tpu.memory_space<vmem>>, vector<1x64x128xbf16>
    %281 = vector.shape_cast %280 : vector<1x64x128xbf16> to vector<64x128xbf16>
    %cst_268 = arith.constant dense<0.000000e+00> : vector<8x128xf32>
    %282 = tpu.matmul %279, %281, %cst_268 {dimension_numbers = #tpu.dot_dimension_numbers<[1], [0], [0], [1], [0, 0, 1, 1], [], []>} : vector<8x64xbf16>, vector<64x128xbf16>, vector<8x128xf32> -> vector<8x128xf32>
    %283 = arith.addf %277, %282 : vector<8x128xf32>
    %c8_269 = arith.constant 8 : index
    %c0_270 = arith.constant 0 : index
    %284 = tpu.strided_load %arg14[%c8_269, %c0_270] {strides = array<i32: 2, 1>} : memref<32x64xf32, #tpu.memory_space<vmem>>, vector<8x64xf32>
    %285 = arith.truncf %284 : vector<8x64xf32> to vector<8x64xbf16>
    %c5_271 = arith.constant 5 : index
    %c0_272 = arith.constant 0 : index
    %c0_273 = arith.constant 0 : index
    %286 = vector.load %arg5[%c5_271, %c0_272, %c0_273] : memref<11x64x128xbf16, #tpu.memory_space<vmem>>, vector<1x64x128xbf16>
    %287 = vector.shape_cast %286 : vector<1x64x128xbf16> to vector<64x128xbf16>
    %cst_274 = arith.constant dense<0.000000e+00> : vector<8x128xf32>
    %288 = tpu.matmul %285, %287, %cst_274 {dimension_numbers = #tpu.dot_dimension_numbers<[1], [0], [0], [1], [0, 0, 1, 1], [], []>} : vector<8x64xbf16>, vector<64x128xbf16>, vector<8x128xf32> -> vector<8x128xf32>
    %289 = arith.addf %283, %288 : vector<8x128xf32>
    %c9_275 = arith.constant 9 : index
    %c0_276 = arith.constant 0 : index
    %290 = tpu.strided_load %arg14[%c9_275, %c0_276] {strides = array<i32: 2, 1>} : memref<32x64xf32, #tpu.memory_space<vmem>>, vector<8x64xf32>
    %291 = arith.truncf %290 : vector<8x64xf32> to vector<8x64xbf16>
    %c6_277 = arith.constant 6 : index
    %c0_278 = arith.constant 0 : index
    %c0_279 = arith.constant 0 : index
    %292 = vector.load %arg5[%c6_277, %c0_278, %c0_279] : memref<11x64x128xbf16, #tpu.memory_space<vmem>>, vector<1x64x128xbf16>
    %293 = vector.shape_cast %292 : vector<1x64x128xbf16> to vector<64x128xbf16>
    %cst_280 = arith.constant dense<0.000000e+00> : vector<8x128xf32>
    %294 = tpu.matmul %291, %293, %cst_280 {dimension_numbers = #tpu.dot_dimension_numbers<[1], [0], [0], [1], [0, 0, 1, 1], [], []>} : vector<8x64xbf16>, vector<64x128xbf16>, vector<8x128xf32> -> vector<8x128xf32>
    %295 = arith.addf %289, %294 : vector<8x128xf32>
    %c10_281 = arith.constant 10 : index
    %c0_282 = arith.constant 0 : index
    %296 = tpu.strided_load %arg14[%c10_281, %c0_282] {strides = array<i32: 2, 1>} : memref<32x64xf32, #tpu.memory_space<vmem>>, vector<8x64xf32>
    %297 = arith.truncf %296 : vector<8x64xf32> to vector<8x64xbf16>
    %c7_283 = arith.constant 7 : index
    %c0_284 = arith.constant 0 : index
    %c0_285 = arith.constant 0 : index
    %298 = vector.load %arg5[%c7_283, %c0_284, %c0_285] : memref<11x64x128xbf16, #tpu.memory_space<vmem>>, vector<1x64x128xbf16>
    %299 = vector.shape_cast %298 : vector<1x64x128xbf16> to vector<64x128xbf16>
    %cst_286 = arith.constant dense<0.000000e+00> : vector<8x128xf32>
    %300 = tpu.matmul %297, %299, %cst_286 {dimension_numbers = #tpu.dot_dimension_numbers<[1], [0], [0], [1], [0, 0, 1, 1], [], []>} : vector<8x64xbf16>, vector<64x128xbf16>, vector<8x128xf32> -> vector<8x128xf32>
    %301 = arith.addf %295, %300 : vector<8x128xf32>
    %c11_287 = arith.constant 11 : index
    %c0_288 = arith.constant 0 : index
    %302 = tpu.strided_load %arg14[%c11_287, %c0_288] {strides = array<i32: 2, 1>} : memref<32x64xf32, #tpu.memory_space<vmem>>, vector<8x64xf32>
    %303 = arith.truncf %302 : vector<8x64xf32> to vector<8x64xbf16>
    %c8_289 = arith.constant 8 : index
    %c0_290 = arith.constant 0 : index
    %c0_291 = arith.constant 0 : index
    %304 = vector.load %arg5[%c8_289, %c0_290, %c0_291] : memref<11x64x128xbf16, #tpu.memory_space<vmem>>, vector<1x64x128xbf16>
    %305 = vector.shape_cast %304 : vector<1x64x128xbf16> to vector<64x128xbf16>
    %cst_292 = arith.constant dense<0.000000e+00> : vector<8x128xf32>
    %306 = tpu.matmul %303, %305, %cst_292 {dimension_numbers = #tpu.dot_dimension_numbers<[1], [0], [0], [1], [0, 0, 1, 1], [], []>} : vector<8x64xbf16>, vector<64x128xbf16>, vector<8x128xf32> -> vector<8x128xf32>
    %307 = arith.addf %301, %306 : vector<8x128xf32>
    %c12_293 = arith.constant 12 : index
    %c0_294 = arith.constant 0 : index
    %308 = tpu.strided_load %arg14[%c12_293, %c0_294] {strides = array<i32: 2, 1>} : memref<32x64xf32, #tpu.memory_space<vmem>>, vector<8x64xf32>
    %309 = arith.truncf %308 : vector<8x64xf32> to vector<8x64xbf16>
    %c9_295 = arith.constant 9 : index
    %c0_296 = arith.constant 0 : index
    %c0_297 = arith.constant 0 : index
    %310 = vector.load %arg5[%c9_295, %c0_296, %c0_297] : memref<11x64x128xbf16, #tpu.memory_space<vmem>>, vector<1x64x128xbf16>
    %311 = vector.shape_cast %310 : vector<1x64x128xbf16> to vector<64x128xbf16>
    %cst_298 = arith.constant dense<0.000000e+00> : vector<8x128xf32>
    %312 = tpu.matmul %309, %311, %cst_298 {dimension_numbers = #tpu.dot_dimension_numbers<[1], [0], [0], [1], [0, 0, 1, 1], [], []>} : vector<8x64xbf16>, vector<64x128xbf16>, vector<8x128xf32> -> vector<8x128xf32>
    %313 = arith.addf %307, %312 : vector<8x128xf32>
    %c13_299 = arith.constant 13 : index
    %c0_300 = arith.constant 0 : index
    %314 = tpu.strided_load %arg14[%c13_299, %c0_300] {strides = array<i32: 2, 1>} : memref<32x64xf32, #tpu.memory_space<vmem>>, vector<8x64xf32>
    %315 = arith.truncf %314 : vector<8x64xf32> to vector<8x64xbf16>
    %c10_301 = arith.constant 10 : index
    %c0_302 = arith.constant 0 : index
    %c0_303 = arith.constant 0 : index
    %316 = vector.load %arg5[%c10_301, %c0_302, %c0_303] : memref<11x64x128xbf16, #tpu.memory_space<vmem>>, vector<1x64x128xbf16>
    %317 = vector.shape_cast %316 : vector<1x64x128xbf16> to vector<64x128xbf16>
    %cst_304 = arith.constant dense<0.000000e+00> : vector<8x128xf32>
    %318 = tpu.matmul %315, %317, %cst_304 {dimension_numbers = #tpu.dot_dimension_numbers<[1], [0], [0], [1], [0, 0, 1, 1], [], []>} : vector<8x64xbf16>, vector<64x128xbf16>, vector<8x128xf32> -> vector<8x128xf32>
    %319 = arith.addf %313, %318 : vector<8x128xf32>
    %320 = vector.broadcast %249 : vector<1x128xf32> to vector<8x128xf32>
    %321 = arith.addf %319, %320 : vector<8x128xf32>
    %cst_305 = arith.constant 0.000000e+00 : f32
    %322 = vector.broadcast %cst_305 : f32 to vector<8x128xf32>
    %323 = arith.cmpf ogt, %321, %322 : vector<8x128xf32>
    %324 = vector.broadcast %250 : vector<1x128xf32> to vector<8x128xf32>
    %325 = arith.mulf %324, %321 : vector<8x128xf32>
    %326 = arith.select %323, %321, %325 : vector<8x128xi1>, vector<8x128xf32>
    %327 = tpu.transpose %326, [1, 0] : vector<8x128xf32> -> vector<128x8xf32>
    %c0_306 = arith.constant 0 : index
    %c0_307 = arith.constant 0 : index
    %c0_308 = arith.constant 0 : index
    %328 = vector.load %arg10[%c0_306, %c0_307, %c0_308] : memref<1x128x8xf32, #tpu.memory_space<vmem>>, vector<1x128x8xf32>
    %329 = vector.shape_cast %328 : vector<1x128x8xf32> to vector<128x8xf32>
    %330 = vector.shape_cast %327 : vector<128x8xf32> to vector<1x128x8xf32>
    tpu.vector_store %arg10[%c0_306, %c0_307, %c0_308], %330 {strides = array<i32>} : memref<1x128x8xf32, #tpu.memory_space<vmem>>, vector<1x128x8xf32>,
    return
  }
  func.func @transform_0(%arg0: i32) -> (i32, i32, i32) {
    %c0_i32 = arith.constant 0 : i32
    %c0_i32_0 = arith.constant 0 : i32
    %c0_i32_1 = arith.constant 0 : i32
    return %arg0, %c0_i32, %c0_i32_0 : i32, i32, i32
  }
  func.func @transform_1(%arg0: i32) -> (i32, i32, i32) {
    %c0_i32 = arith.constant 0 : i32
    %c0_i32_0 = arith.constant 0 : i32
    %c0_i32_1 = arith.constant 0 : i32
    %c0_i32_2 = arith.constant 0 : i32
    return %c0_i32, %c0_i32_0, %c0_i32_1 : i32, i32, i32
  }
  func.func @transform_2(%arg0: i32) -> (i32, i32, i32) {
    %c0_i32 = arith.constant 0 : i32
    %c0_i32_0 = arith.constant 0 : i32
    %c0_i32_1 = arith.constant 0 : i32
    %c0_i32_2 = arith.constant 0 : i32
    return %c0_i32, %c0_i32_0, %c0_i32_1 : i32, i32, i32
  }
  func.func @transform_3(%arg0: i32) -> (i32, i32, i32) {
    %c0_i32 = arith.constant 0 : i32
    %c0_i32_0 = arith.constant 0 : i32
    %c0_i32_1 = arith.constant 0 : i32
    %c0_i32_2 = arith.constant 0 : i32
    return %c0_i32, %c0_i32_0, %c0_i32_1 : i32, i32, i32
  }
  func.func @transform_4(%arg0: i32) -> (i32, i32, i32) {
    %c0_i32 = arith.constant 0 : i32
    %c0_i32_0 = arith.constant 0 : i32
    %c0_i32_1 = arith.constant 0 : i32
    %c0_i32_2 = arith.constant 0 : i32
    return %c0_i32, %c0_i32_0, %c0_i32_1 : i32, i32, i32
  }
  func.func @transform_5(%arg0: i32) -> (i32, i32) {
    %c0_i32 = arith.constant 0 : i32
    %c0_i32_0 = arith.constant 0 : i32
    %c0_i32_1 = arith.constant 0 : i32
    return %c0_i32, %c0_i32_0 : i32, i32
  }
  func.func @transform_6(%arg0: i32) -> (i32, i32, i32) {
    %c0_i32 = arith.constant 0 : i32
    %c0_i32_0 = arith.constant 0 : i32
    %c0_i32_1 = arith.constant 0 : i32
    return %arg0, %c0_i32, %c0_i32_0 : i32, i32, i32
  }
  func.func @transform_7(%arg0: i32) -> (i32, i32, i32) {
    %c0_i32 = arith.constant 0 : i32
    %c0_i32_0 = arith.constant 0 : i32
    %c0_i32_1 = arith.constant 0 : i32
    return %arg0, %c0_i32, %c0_i32_0 : i32, i32, i32
  }
  func.func @transform_8(%arg0: i32) -> (i32, i32, i32) {
    %c0_i32 = arith.constant 0 : i32
    %c0_i32_0 = arith.constant 0 : i32
    %c0_i32_1 = arith.constant 0 : i32
    return %arg0, %c0_i32, %c0_i32_0 : i32, i32, i32
  }
  func.func @transform_9(%arg0: i32) -> (i32, i32, i32) {
    %c0_i32 = arith.constant 0 : i32
    %c0_i32_0 = arith.constant 0 : i32
    %c0_i32_1 = arith.constant 0 : i32
    return %arg0, %c0_i32, %c0_i32_0 : i32, i32, i32
  }
}

</mosaic_0001>

<llo_original>
// kernel: encoder_forward.1
$region0: #{encoder_forward.1}
  #allocation0 [shape = 'u32[]', space=smem, size = 0x4, offset = 0x4, fixed_abs, tag = 'smem constant byte address 0x4 - core index']
  #allocation1 [shape = 'u32[144,128]{1,0:T(1,128)}', space=vmem, size = 0x12000, scoped, tag = 'internal scratch']
  #allocation2 [shape = 'f32[80,16]{1,0:T(8,128)}', space=vmem, size = 0xa000, scoped, tag = 'scratch operand']
  #allocation3 [shape = 'f32[80,16]{1,0:T(8,128)}', space=vmem, size = 0xa000, scoped, tag = 'scratch operand']
  #allocation4 [shape = 'f32[48,32]{1,0:T(8,128)}', space=vmem, size = 0x6000, scoped, tag = 'scratch operand']
  #allocation5 [shape = 'f32[32,64]{1,0:T(8,128)}', space=vmem, size = 0x4000, scoped, tag = 'scratch operand']
  %s0 = inlined_call_operand.hbm [shape: f32[2,16,64], index: 0, kind: input, shape index: {}]
  %s1 = inlined_call_operand.hbm [shape: bf16[11,16,16], index: 1, kind: input, shape index: {}]
  %s2 = inlined_call_operand.hbm [shape: bf16[11,16,32], index: 2, kind: input, shape index: {}]
  %s3 = inlined_call_operand.hbm [shape: bf16[11,32,64], index: 3, kind: input, shape index: {}]
  %s4 = inlined_call_operand.hbm [shape: bf16[11,64,128], index: 4, kind: input, shape index: {}]
  %s5 = inlined_call_operand.vmem [shape: f32[8,128], index: 5, kind: input, shape index: {}]
  %s6 = inlined_call_operand.hbm [shape: f32[2,16,64], index: 6, kind: output, shape index: {0}]
  %s7 = inlined_call_operand.hbm [shape: f32[2,32,32], index: 7, kind: output, shape index: {1}]
  %s8 = inlined_call_operand.vmem [shape: f32[2,64,16], index: 8, kind: output, shape index: {2}]
  %s9 = inlined_call_operand.vmem [shape: f32[2,128,8], index: 9, kind: output, shape index: {3}]
  %10 = xla_tuple %s6, %s7, %s8, %s9
  %s11 = sld [smem:[#allocation0]]
  $region101: #{encoder_forward.1} parent=0
    _
  %s13 = ssub.s32 1, %s11
  %s14 = scalar_select 0, %s13, %s11
  $region1: #{encoder_forward.1} parent=0
    #allocation6 [shape = 'u8[16384]{0}', space=vmem, size = 0x4000, scoped, tag = 'input window, operand 0']
    #allocation7 [shape = 's32[2]{0}', space=sflag, size = 0x8, scoped, tag = 'scoped memory for encoder_forward.1']
    #allocation8 [shape = 's32[2]{0}', space=sflag, size = 0x8, scoped, tag = 'scoped memory for encoder_forward.1']
    #allocation9 [shape = 'u8[45056]{0}', space=vmem, size = 0xb000, scoped, tag = 'input window, operand 1, single buffered']
    #allocation10 [shape = 's32[1]{0}', space=sflag, size = 0x4, scoped, tag = 'scoped memory for encoder_forward.1']
    #allocation11 [shape = 'u8[45056]{0}', space=vmem, size = 0xb000, scoped, tag = 'input window, operand 2, single buffered']
    #allocation12 [shape = 'u8[90112]{0}', space=vmem, size = 0x16000, scoped, tag = 'input window, operand 3, single buffered']
    #allocation13 [shape = 's32[1]{0}', space=sflag, size = 0x4, scoped, tag = 'scoped memory for encoder_forward.1']
    #allocation14 [shape = 'u8[180224]{0}', space=vmem, size = 0x2c000, scoped, tag = 'input window, operand 4, single buffered']
    #allocation15 [shape = 'u8[16384]{0}', space=vmem, size = 0x4000, scoped, tag = 'output window, operand 0']
    #allocation16 [shape = 'u8[32768]{0}', space=vmem, size = 0x8000, scoped, tag = 'output window, operand 1']
    #allocation17 [shape = 's32[2]{0}', space=sflag, size = 0x8, scoped, tag = 'scoped memory for encoder_forward.1']
    %15 = vsyncpa [#allocation7], 0
    %s16 = scalar_lea.sflag [#allocation7], 1
    %17 = vsyncpa %s16, 0
    %18 = vsyncpa [#allocation10], 0
    %19 = vsyncpa [#allocation13], 0
    %20 = vsyncpa [#allocation8], 0
    %s21 = scalar_lea.sflag [#allocation8], 1
    %22 = vsyncpa %s21, 0
    %23 = vsyncpa [#allocation17], 0
    %s24 = scalar_lea.sflag [#allocation17], 1
    %25 = vsyncpa %s24, 0
    loop: start=0, step=1, limit=4
    $region2: #{encoder_forward.1} parent=1 // loop_pre_header
      _
    $region3: #{encoder_forward.1} parent=1 // loop_header
      %s27 = sphi 0, %s31
      %p28 = scmp.ge.s32.totalorder %s27, 4
      %s37 = sphi 0, %s39
      %s40 = sphi 0, %s37
      %s41 = sphi 0, %s40
      %s57 = sphi 0, %s41
      %s61 = sphi 0, %s61
      %s63 = sphi 0, %s61
      %s64 = sphi 0, %s63
      %s78 = sphi 0, %s64
      %s82 = sphi 0, %s82
      %s84 = sphi 0, %s82
      %s85 = sphi 0, %s84
      %s99 = sphi 0, %s85
      %s103 = sphi 0, %s103
      %s105 = sphi 0, %s103
      %s106 = sphi 0, %s105
      %s120 = sphi 0, %s106
      %s124 = sphi 0, %s124
      %s126 = sphi 0, %s124
      %s127 = sphi 0, %s126
      %s141 = sphi 0, %s127
      %s145 = sphi 0, %s145
      %s147 = sphi 0, %s145
      %s148 = sphi 0, %s147
      %s162 = sphi 0, %s148
      %s168 = sphi 0, %s170
      %s171 = sphi 0, %s168
      %s172 = sphi 0, %s171
      %s188 = sphi 0, %s172
      %s194 = sphi 0, %s196
      %s197 = sphi 0, %s194
      %s198 = sphi 0, %s197
      %s214 = sphi 0, %s198
      %s220 = sphi 0, %s222
      %s223 = sphi 0, %s220
      %s224 = sphi 0, %s223
      %s240 = sphi 0, %s224
      %s246 = sphi 0, %s248
      %s249 = sphi 0, %s246
      %s250 = sphi 0, %s249
      %s266 = sphi 0, %s250
    $region4: #{encoder_forward.1} parent=1 // loop_header_branch
      %30 = sbr.rel (%p28) target = $region8
    $region5: #{encoder_forward.1} parent=1 // loop_body
      %s32 = ssub.s32 %s27, 1
      %s33 = ssub.s32 %s27, 2
      %s34 = sadd.s32 %s27, 1
      %s35 = ssub.s32 %s27, %s34
      %p36 = scmp.eq.s32.totalorder %s35, 0
      %s38 = sadd.s32 %s37, 1
      %s39 = scalar_select %p36, %s37, %s38
      %p42 = pneg %p36
      %p43 = scmp.eq.s32.totalorder %s27, 1
      %p44 = por %p42, %p43
      %p45 = scmp.ne.s32.totalorder %s37, %s40
      %p46 = scmp.eq.s32.totalorder %s27, 0
      %p47 = por %p45, %p46
      %p48 = scmp.ne.s32.totalorder %s37, %s40
      %p49 = scmp.eq.s32.totalorder %s32, 1
      %p50 = por %p48, %p49
      %p51 = scmp.ne.s32.totalorder %s40, %s41
      %p52 = scmp.eq.s32.totalorder %s32, 0
      %p53 = por %p51, %p52
      %p54 = scmp.ne.s32.totalorder %s40, %s41
      %p55 = scmp.eq.s32.totalorder %s33, 1
      %p56 = por %p54, %p55
      %p58 = scmp.ne.s32.totalorder %s41, %s57
      %p59 = scmp.eq.s32.totalorder %s33, 0
      %p60 = por %p58, %p59
      %s62 = sadd.s32 %s61, 1
      %p65 = scmp.eq.s32.totalorder %s27, 1
      %p66 = scmp.ne.s32.totalorder %s61, %s63
      %p67 = scmp.eq.s32.totalorder %s27, 0
      %p68 = por %p66, %p67
      %p69 = scmp.ne.s32.totalorder %s61, %s63
      %p70 = scmp.eq.s32.totalorder %s32, 1
      %p71 = por %p69, %p70
      %p72 = scmp.ne.s32.totalorder %s63, %s64
      %p73 = scmp.eq.s32.totalorder %s32, 0
      %p74 = por %p72, %p73
      %p75 = scmp.ne.s32.totalorder %s63, %s64
      %p76 = scmp.eq.s32.totalorder %s33, 1
      %p77 = por %p75, %p76
      %p79 = scmp.ne.s32.totalorder %s64, %s78
      %p80 = scmp.eq.s32.totalorder %s33, 0
      %p81 = por %p79, %p80
      %s83 = sadd.s32 %s82, 1
      %p86 = scmp.eq.s32.totalorder %s27, 1
      %p87 = scmp.ne.s32.totalorder %s82, %s84
      %p88 = scmp.eq.s32.totalorder %s27, 0
      %p89 = por %p87, %p88
      %p90 = scmp.ne.s32.totalorder %s82, %s84
      %p91 = scmp.eq.s32.totalorder %s32, 1
      %p92 = por %p90, %p91
      %p93 = scmp.ne.s32.totalorder %s84, %s85
      %p94 = scmp.eq.s32.totalorder %s32, 0
      %p95 = por %p93, %p94
      %p96 = scmp.ne.s32.totalorder %s84, %s85
      %p97 = scmp.eq.s32.totalorder %s33, 1
      %p98 = por %p96, %p97
      %p100 = scmp.ne.s32.totalorder %s85, %s99
      %p101 = scmp.eq.s32.totalorder %s33, 0
      %p102 = por %p100, %p101
      %s104 = sadd.s32 %s103, 1
      %p107 = scmp.eq.s32.totalorder %s27, 1
      %p108 = scmp.ne.s32.totalorder %s103, %s105
      %p109 = scmp.eq.s32.totalorder %s27, 0
      %p110 = por %p108, %p109
      %p111 = scmp.ne.s32.totalorder %s103, %s105
      %p112 = scmp.eq.s32.totalorder %s32, 1
      %p113 = por %p111, %p112
      %p114 = scmp.ne.s32.totalorder %s105, %s106
      %p115 = scmp.eq.s32.totalorder %s32, 0
      %p116 = por %p114, %p115
      %p117 = scmp.ne.s32.totalorder %s105, %s106
      %p118 = scmp.eq.s32.totalorder %s33, 1
      %p119 = por %p117, %p118
      %p121 = scmp.ne.s32.totalorder %s106, %s120
      %p122 = scmp.eq.s32.totalorder %s33, 0
      %p123 = por %p121, %p122
      %s125 = sadd.s32 %s124, 1
      %p128 = scmp.eq.s32.totalorder %s27, 1
      %p129 = scmp.ne.s32.totalorder %s124, %s126
      %p130 = scmp.eq.s32.totalorder %s27, 0
      %p131 = por %p129, %p130
      %p132 = scmp.ne.s32.totalorder %s124, %s126
      %p133 = scmp.eq.s32.totalorder %s32, 1
      %p134 = por %p132, %p133
      %p135 = scmp.ne.s32.totalorder %s126, %s127
      %p136 = scmp.eq.s32.totalorder %s32, 0
      %p137 = por %p135, %p136
      %p138 = scmp.ne.s32.totalorder %s126, %s127
      %p139 = scmp.eq.s32.totalorder %s33, 1
      %p140 = por %p138, %p139
      %p142 = scmp.ne.s32.totalorder %s127, %s141
      %p143 = scmp.eq.s32.totalorder %s33, 0
      %p144 = por %p142, %p143
      %s146 = sadd.s32 %s145, 1
      %p149 = scmp.eq.s32.totalorder %s27, 1
      %p150 = scmp.ne.s32.totalorder %s145, %s147
      %p151 = scmp.eq.s32.totalorder %s27, 0
      %p152 = por %p150, %p151
      %p153 = scmp.ne.s32.totalorder %s145, %s147
      %p154 = scmp.eq.s32.totalorder %s32, 1
      %p155 = por %p153, %p154
      %p156 = scmp.ne.s32.totalorder %s147, %s148
      %p157 = scmp.eq.s32.totalorder %s32, 0
      %p158 = por %p156, %p157
      %p159 = scmp.ne.s32.totalorder %s147, %s148
      %p160 = scmp.eq.s32.totalorder %s33, 1
      %p161 = por %p159, %p160
      %p163 = scmp.ne.s32.totalorder %s148, %s162
      %p164 = scmp.eq.s32.totalorder %s33, 0
      %p165 = por %p163, %p164
      %s166 = ssub.s32 %s27, %s34
      %p167 = scmp.eq.s32.totalorder %s166, 0
      %s169 = sadd.s32 %s168, 1
      %s170 = scalar_select %p167, %s168, %s169
      %p173 = pneg %p167
      %p174 = scmp.eq.s32.totalorder %s27, 1
      %p175 = por %p173, %p174
      %p176 = scmp.ne.s32.totalorder %s168, %s171
      %p177 = scmp.eq.s32.totalorder %s27, 0
      %p178 = por %p176, %p177
      %p179 = scmp.ne.s32.totalorder %s168, %s171
      %p180 = scmp.eq.s32.totalorder %s32, 1
      %p181 = por %p179, %p180
      %p182 = scmp.ne.s32.totalorder %s171, %s172
      %p183 = scmp.eq.s32.totalorder %s32, 0
      %p184 = por %p182, %p183
      %p185 = scmp.ne.s32.totalorder %s171, %s172
      %p186 = scmp.eq.s32.totalorder %s33, 1
      %p187 = por %p185, %p186
      %p189 = scmp.ne.s32.totalorder %s172, %s188
      %p190 = scmp.eq.s32.totalorder %s33, 0
      %p191 = por %p189, %p190
      %s192 = ssub.s32 %s27, %s34
      %p193 = scmp.eq.s32.totalorder %s192, 0
      %s195 = sadd.s32 %s194, 1
      %s196 = scalar_select %p193, %s194, %s195
      %p199 = pneg %p193
      %p200 = scmp.eq.s32.totalorder %s27, 1
      %p201 = por %p199, %p200
      %p202 = scmp.ne.s32.totalorder %s194, %s197
      %p203 = scmp.eq.s32.totalorder %s27, 0
      %p204 = por %p202, %p203
      %p205 = scmp.ne.s32.totalorder %s194, %s197
      %p206 = scmp.eq.s32.totalorder %s32, 1
      %p207 = por %p205, %p206
      %p208 = scmp.ne.s32.totalorder %s197, %s198
      %p209 = scmp.eq.s32.totalorder %s32, 0
      %p210 = por %p208, %p209
      %p211 = scmp.ne.s32.totalorder %s197, %s198
      %p212 = scmp.eq.s32.totalorder %s33, 1
      %p213 = por %p211, %p212
      %p215 = scmp.ne.s32.totalorder %s198, %s214
      %p216 = scmp.eq.s32.totalorder %s33, 0
      %p217 = por %p215, %p216
      %s218 = ssub.s32 %s27, %s34
      %p219 = scmp.eq.s32.totalorder %s218, 0
      %s221 = sadd.s32 %s220, 1
      %s222 = scalar_select %p219, %s220, %s221
      %p225 = pneg %p219
      %p226 = scmp.eq.s32.totalorder %s27, 1
      %p227 = por %p225, %p226
      %p228 = scmp.ne.s32.totalorder %s220, %s223
      %p229 = scmp.eq.s32.totalorder %s27, 0
      %p230 = por %p228, %p229
      %p231 = scmp.ne.s32.totalorder %s220, %s223
      %p232 = scmp.eq.s32.totalorder %s32, 1
      %p233 = por %p231, %p232
      %p234 = scmp.ne.s32.totalorder %s223, %s224
      %p235 = scmp.eq.s32.totalorder %s32, 0
      %p236 = por %p234, %p235
      %p237 = scmp.ne.s32.totalorder %s223, %s224
      %p238 = scmp.eq.s32.totalorder %s33, 1
      %p239 = por %p237, %p238
      %p241 = scmp.ne.s32.totalorder %s224, %s240
      %p242 = scmp.eq.s32.totalorder %s33, 0
      %p243 = por %p241, %p242
      %s244 = ssub.s32 %s27, %s34
      %p245 = scmp.eq.s32.totalorder %s244, 0
      %s247 = sadd.s32 %s246, 1
      %s248 = scalar_select %p245, %s246, %s247
      %p251 = pneg %p245
      %p252 = scmp.eq.s32.totalorder %s27, 1
      %p253 = por %p251, %p252
      %p254 = scmp.ne.s32.totalorder %s246, %s249
      %p255 = scmp.eq.s32.totalorder %s27, 0
      %p256 = por %p254, %p255
      %p257 = scmp.ne.s32.totalorder %s246, %s249
      %p258 = scmp.eq.s32.totalorder %s32, 1
      %p259 = por %p257, %p258
      %p260 = scmp.ne.s32.totalorder %s249, %s250
      %p261 = scmp.eq.s32.totalorder %s32, 0
      %p262 = por %p260, %p261
      %p263 = scmp.ne.s32.totalorder %s249, %s250
      %p264 = scmp.eq.s32.totalorder %s33, 1
      %p265 = por %p263, %p264
      %p267 = scmp.ne.s32.totalorder %s250, %s266
      %p268 = scmp.eq.s32.totalorder %s33, 0
      %p269 = por %p267, %p268
      %p270 = scmp.le.s32.totalorder 1, %s27
      %p271 = scmp.lt.s32.totalorder %s27, 3
      %p272 = pnand %p270, %p271
      %p273 = pneg %p272
      // Predicated region
      $region9: #{encoder_forward.1} parent=5 // pred_check
        _
      $region10: #{encoder_forward.1} parent=5 // pred_check_branch
        %275 = sbr.rel (%p272) target = $region12
      $region11: #{encoder_forward.1} parent=5 // pred_region
        %s276 = ssub.s32 %s27, 1
        // Predicated region
        $region13: #{encoder_forward.1} parent=11 // pred_check
          %p277 = pneg %p74
        $region14: #{encoder_forward.1} parent=11 // pred_check_branch
          %279 = sbr.rel (%p277) target = $region16
        $region15: #{encoder_forward.1} parent=11 // pred_region
          %s281 = ssub.s32 1408, 1408
          %282 = vsyncadd [#allocation10], %s281
          %s283 = sshll.u32 [#allocation9], 4
          %s284 = int_to_ptr.vmem [resolvable:$true] %s283
          %289 = dma.hbm_to_vmem [thread:$0]  %s1, 1408, %s284, [#allocation10], 64, 64, 4
        $region16: #{encoder_forward.1} parent=11 // pred_fallthru
          _
        // Predicated region
        $region17: #{encoder_forward.1} parent=11 // pred_check
          %p290 = pneg %p95
        $region18: #{encoder_forward.1} parent=11 // pred_check_branch
          %292 = sbr.rel (%p290) target = $region20
        $region19: #{encoder_forward.1} parent=11 // pred_region
          %s294 = ssub.s32 1408, 1408
          %295 = vsyncadd [#allocation10], %s294
          %s296 = sshll.u32 [#allocation11], 4
          %s297 = int_to_ptr.vmem [resolvable:$true] %s296
          %302 = dma.hbm_to_vmem [thread:$0]  %s2, 1408, %s297, [#allocation10], 64, 64, 4
        $region20: #{encoder_forward.1} parent=11 // pred_fallthru
          _
        // Predicated region
        $region21: #{encoder_forward.1} parent=11 // pred_check
          %p303 = pneg %p116
        $region22: #{encoder_forward.1} parent=11 // pred_check_branch
          %305 = sbr.rel (%p303) target = $region24
        $region23: #{encoder_forward.1} parent=11 // pred_region
          %s307 = ssub.s32 2816, 2816
          %308 = vsyncadd [#allocation13], %s307
          %s309 = sshll.u32 [#allocation12], 4
          %s310 = int_to_ptr.vmem [resolvable:$true] %s309
          %315 = dma.hbm_to_vmem [thread:$0]  %s3, 2816, %s310, [#allocation13], 64, 64, 4
        $region24: #{encoder_forward.1} parent=11 // pred_fallthru
          _
        // Predicated region
        $region25: #{encoder_forward.1} parent=11 // pred_check
          %p316 = pneg %p137
        $region26: #{encoder_forward.1} parent=11 // pred_check_branch
          %318 = sbr.rel (%p316) target = $region28
        $region27: #{encoder_forward.1} parent=11 // pred_region
          %s320 = ssub.s32 5632, 5632
          %321 = vsyncadd [#allocation13], %s320
          %s322 = sshll.u32 [#allocation14], 4
          %s323 = int_to_ptr.vmem [resolvable:$true] %s322
          %328 = dma.hbm_to_vmem [thread:$0]  %s4, 5632, %s323, [#allocation13], 64, 64, 4
        $region28: #{encoder_forward.1} parent=11 // pred_fallthru
          _
        // Predicated region
        $region29: #{encoder_forward.1} parent=11 // pred_check
          %p329 = pneg %p158
        $region30: #{encoder_forward.1} parent=11 // pred_check_branch
          %331 = sbr.rel (%p329) target = $region32
        $region31: #{encoder_forward.1} parent=11 // pred_region
          _
        $region32: #{encoder_forward.1} parent=11 // pred_fallthru
          _
      $region12: #{encoder_forward.1} parent=5 // pred_fallthru
        _
      %p332 = scmp.lt.s32.totalorder %s27, 2
      // Predicated region
      $region33: #{encoder_forward.1} parent=5 // pred_check
        %p333 = pneg %p332
      $region34: #{encoder_forward.1} parent=5 // pred_check_branch
        %335 = sbr.rel (%p333) target = $region36
      $region35: #{encoder_forward.1} parent=5 // pred_region
        // Predicated region
        $region37: #{encoder_forward.1} parent=35 // pred_check
          %p336 = pneg %p47
        $region38: #{encoder_forward.1} parent=35 // pred_check_branch
          %338 = sbr.rel (%p336) target = $region40
        $region39: #{encoder_forward.1} parent=35 // pred_region
          %s339 = sand.u32 %s37, 1
          %s340 = scalar_lea.sflag [#allocation7], %s339
          %s341 = sand.u32 %s37, 1
          %s342 = smul.addr %s341, 16
          %s343 = scalar_lea.vmem [#allocation6], %s342
          %s345 = ssub.s32 256, 256
          %346 = vsyncadd %s340, %s345
          %s347 = smul.addr %s27, 2
          %s348 = smul.addr %s347, 128
          %s349 = scalar_lea.hbm %s0, %s348
          %s350 = sshll.u32 %s343, 4
          %s351 = int_to_ptr.vmem [resolvable:$true] %s350
          %356 = dma.hbm_to_vmem [thread:$0]  %s349, 256, %s351, %s340, 128, 128, 8
        $region40: #{encoder_forward.1} parent=35 // pred_fallthru
          _
      $region36: #{encoder_forward.1} parent=5 // pred_fallthru
        _
      %p357 = scmp.le.s32.totalorder 1, %s27
      %p358 = scmp.lt.s32.totalorder %s27, 3
      %p359 = pnand %p357, %p358
      %p360 = pneg %p359
      // Predicated region
      $region41: #{encoder_forward.1} parent=5 // pred_check
        _
      $region42: #{encoder_forward.1} parent=5 // pred_check_branch
        %362 = sbr.rel (%p359) target = $region44
      $region43: #{encoder_forward.1} parent=5 // pred_region
        %s363 = ssub.s32 %s27, 1
        %s364 = sand.u32 %s40, 1
        %s365 = scalar_lea.sflag [#allocation7], %s364
        %s366 = sand.u32 %s40, 1
        %s367 = smul.addr %s366, 16
        %s368 = scalar_lea.vmem [#allocation6], %s367
        // Predicated region
        $region45: #{encoder_forward.1} parent=43 // pred_check
          %p369 = pneg %p53
        $region46: #{encoder_forward.1} parent=43 // pred_check_branch
          %371 = sbr.rel (%p369) target = $region48
        $region47: #{encoder_forward.1} parent=43 // pred_region
          %372 = dma.done %s365, 256
        $region48: #{encoder_forward.1} parent=43 // pred_fallthru
          _
        // Predicated region
        $region49: #{encoder_forward.1} parent=43 // pred_check
          %p373 = pneg %p74
        $region50: #{encoder_forward.1} parent=43 // pred_check_branch
          %375 = sbr.rel (%p373) target = $region52
        $region51: #{encoder_forward.1} parent=43 // pred_region
          %376 = dma.done [#allocation10], 1408
        $region52: #{encoder_forward.1} parent=43 // pred_fallthru
          _
        // Predicated region
        $region53: #{encoder_forward.1} parent=43 // pred_check
          %p377 = pneg %p95
        $region54: #{encoder_forward.1} parent=43 // pred_check_branch
          %379 = sbr.rel (%p377) target = $region56
        $region55: #{encoder_forward.1} parent=43 // pred_region
          %380 = dma.done [#allocation10], 1408
        $region56: #{encoder_forward.1} parent=43 // pred_fallthru
          _
        // Predicated region
        $region57: #{encoder_forward.1} parent=43 // pred_check
          %p381 = pneg %p116
        $region58: #{encoder_forward.1} parent=43 // pred_check_branch
          %383 = sbr.rel (%p381) target = $region60
        $region59: #{encoder_forward.1} parent=43 // pred_region
          %384 = dma.done [#allocation13], 2816
        $region60: #{encoder_forward.1} parent=43 // pred_fallthru
          _
        // Predicated region
        $region61: #{encoder_forward.1} parent=43 // pred_check
          %p385 = pneg %p137
        $region62: #{encoder_forward.1} parent=43 // pred_check_branch
          %387 = sbr.rel (%p385) target = $region64
        $region63: #{encoder_forward.1} parent=43 // pred_region
          %388 = dma.done [#allocation13], 5632
        $region64: #{encoder_forward.1} parent=43 // pred_fallthru
          _
        %s389 = sand.u32 %s40, 1
        %s390 = scalar_lea.sflag [#allocation7], %s389
        %s391 = sand.u32 %s40, 1
        %s392 = smul.addr %s391, 16
        %s393 = scalar_lea.vmem [#allocation6], %s392
        %p394 = pneg %p53
        %p395 = pneg %p50
        %p396 = pneg %p74
        %p397 = pneg %p71
        %p398 = pneg %p95
        %p399 = pneg %p92
        %p400 = pneg %p116
        %p401 = pneg %p113
        %p402 = pneg %p137
        %p403 = pneg %p134
        %p404 = pneg %p158
        %p405 = pneg %p155
        %p406 = pneg %p184
        %p407 = pneg %p181
        %s408 = sand.u32 %s171, 1
        %s409 = scalar_lea.sflag [#allocation8], %s408
        %s410 = sand.u32 %s171, 1
        %s411 = smul.addr %s410, 16
        %s412 = scalar_lea.vmem [#allocation15], %s411
        %p413 = pneg %p210
        %p414 = pneg %p207
        %s415 = sand.u32 %s197, 1
        %s416 = scalar_lea.sflag [#allocation17], %s415
        %s417 = sand.u32 %s197, 1
        %s418 = smul.addr %s417, 32
        %s419 = scalar_lea.vmem [#allocation16], %s418
        %p420 = pneg %p236
        %p421 = pneg %p233
        %p422 = scmp.lt.s32.totalorder %s32, 1
        %s423 = scalar_select %p422, %s32, 1
        %s424 = smul.addr %s423, 8
        %s425 = smul.addr %s424, 8
        %s426 = scalar_lea.vmem %s8, %s425
        %p427 = pneg %p262
        %p428 = pneg %p259
        %p429 = scmp.lt.s32.totalorder %s32, 1
        %s430 = scalar_select %p429, %s32, 1
        %s431 = smul.addr %s430, 16
        %s432 = smul.addr %s431, 8
        %s433 = scalar_lea.vmem %s9, %s432
        %p434 = scmp.lt.s32.totalorder %s32, 1
        %s435 = scalar_select %p434, %s32, 1
        %s436 = smul.addr %s435, 8
        %s437 = smul.addr %s436, 8
        %s438 = scalar_lea.vmem %s8, %s437
        %p439 = scmp.lt.s32.totalorder %s32, 1
        %s440 = scalar_select %p439, %s32, 1
        %s441 = smul.addr %s440, 16
        %s442 = smul.addr %s441, 8
        %s443 = scalar_lea.vmem %s9, %s442
        %v445 = vld [vmem:[%s368] sm:$0xff]
        %v446 = vld [vmem:[%s368 + $0x8] sm:$0xff]
        %447 = vxpose.xlu0.b32.start [1/16] %v445, 128
        %448 = vxpose.xlu0.b32.cont [2/16] %v446, 128
        %449 = vxpose.xlu0.b32.cont [3/16] 0.0, 128
        %450 = vxpose.xlu0.b32.cont [4/16] 0.0, 128
        %451 = vxpose.xlu0.b32.cont [5/16] 0.0, 128
        %452 = vxpose.xlu0.b32.cont [6/16] 0.0, 128
        %453 = vxpose.xlu0.b32.cont [7/16] 0.0, 128
        %454 = vxpose.xlu0.b32.cont [8/16] 0.0, 128
        %455 = vxpose.xlu0.b32.cont [9/16] 0.0, 128
        %456 = vxpose.xlu0.b32.cont [10/16] 0.0, 128
        %457 = vxpose.xlu0.b32.cont [11/16] 0.0, 128
        %458 = vxpose.xlu0.b32.cont [12/16] 0.0, 128
        %459 = vxpose.xlu0.b32.cont [13/16] 0.0, 128
        %460 = vxpose.xlu0.b32.cont [14/16] 0.0, 128
        %461 = vxpose.xlu0.b32.cont [15/16] 0.0, 128
        %462 = vxpose.xlu0.b32.end [16/16] 0.0, 128
        %v463 = vpop.trf.xlu0
        %v464 = vpop.trf.xlu0
        %v465 = vpop.trf.xlu0
        %v466 = vpop.trf.xlu0
        %v467 = vpop.trf.xlu0
        %v468 = vpop.trf.xlu0
        %v469 = vpop.trf.xlu0
        %v470 = vpop.trf.xlu0
        %v471 = vpop.trf.xlu0
        %v472 = vpop.trf.xlu0
        %v473 = vpop.trf.xlu0
        %v474 = vpop.trf.xlu0
        %v475 = vpop.trf.xlu0
        %v476 = vpop.trf.xlu0
        %v477 = vpop.trf.xlu0
        %v478 = vpop.trf.xlu0
        %v479 = vld [vmem:[%s5] sm:$0x1]
        %v480 = vld [vmem:[%s5 + $0x1] sm:$0x1]
        %vm481 = vcmask 130048
        %482 = vst.msk [vmem:[#allocation2] sm:$0xff] %vm481, 0.0
        %483 = vst.msk [vmem:[#allocation2 + $0x48] sm:$0xff] %vm481, 0.0
        %484 = vst.msk [vmem:[#allocation2 + $0x8] sm:$0xff] %vm481, %v463
        %485 = vst.msk [vmem:[#allocation2 + $0x10] sm:$0xff] %vm481, %v464
        %486 = vst.msk [vmem:[#allocation2 + $0x18] sm:$0xff] %vm481, %v465
        %487 = vst.msk [vmem:[#allocation2 + $0x20] sm:$0xff] %vm481, %v466
        %488 = vst.msk [vmem:[#allocation2 + $0x28] sm:$0xff] %vm481, %v467
        %489 = vst.msk [vmem:[#allocation2 + $0x30] sm:$0xff] %vm481, %v468
        %490 = vst.msk [vmem:[#allocation2 + $0x38] sm:$0xff] %vm481, %v469
        %491 = vst.msk [vmem:[#allocation2 + $0x40] sm:$0xff] %vm481, %v470
        %v492 = vld [vmem:[#allocation2 + $0x3] sm:$0xff]
        %v493 = vld [vmem:[#allocation2 + $0xb] sm:$0xff]
        %v494 = vld [vmem:[#allocation2 + $0x13] sm:$0xff]
        %v495 = vld [vmem:[#allocation2 + $0x1b] sm:$0xff]
        %v496 = vld [vmem:[#allocation2 + $0x23] sm:$0xff]
        %v497 = vld [vmem:[#allocation2 + $0x2b] sm:$0xff]
        %v498 = vld [vmem:[#allocation2 + $0x33] sm:$0xff]
        %v499 = vld [vmem:[#allocation2 + $0x3b] sm:$0xff]
        %v500 = vpack.c.bf16 %v493, %v492
        %v501 = vpack.c.bf16 %v495, %v494
        %v502 = vpack.c.bf16 %v497, %v496
        %v503 = vpack.c.bf16 %v499, %v498
        %v504 = vld [vmem:[#allocation9] sm:$0xf]
        %v505 = vld [vmem:[#allocation9 + $0x4] sm:$0xf]
        %v506 = vld [vmem:[#allocation2 + $0x4] sm:$0xff]
        %v507 = vld [vmem:[#allocation2 + $0xc] sm:$0xff]
        %v508 = vld [vmem:[#allocation2 + $0x14] sm:$0xff]
        %v509 = vld [vmem:[#allocation2 + $0x1c] sm:$0xff]
        %v510 = vld [vmem:[#allocation2 + $0x24] sm:$0xff]
        %v511 = vld [vmem:[#allocation2 + $0x2c] sm:$0xff]
        %v512 = vld [vmem:[#allocation2 + $0x34] sm:$0xff]
        %v513 = vld [vmem:[#allocation2 + $0x3c] sm:$0xff]
        %v514 = vpack.c.bf16 %v507, %v506
        %v515 = vpack.c.bf16 %v509, %v508
        %v516 = vpack.c.bf16 %v511, %v510
        %v517 = vpack.c.bf16 %v513, %v512
        %s518 = scalar_lea.vmem [#allocation9], 8
        %v519 = vld [vmem:[%s518] sm:$0xf]
        %v520 = vld [vmem:[%s518 + $0x4] sm:$0xf]
        %v523 = vunpack.c.l.b16 %v519
        %v524 = vunpack.c.l.b16 %v520
        %v525 = vpack.c.b16 %v524, %v523
        %v528 = vsel %vm481, %v514, 0
        %v531 = vsel %vm481, %v515, 0
        %v534 = vsel %vm481, %v516, 0
        %v537 = vsel %vm481, %v517, 0
        %539 = vmatprep.subr.bf16.mxu0 0
        %540 = vmatpush1.bf16.msra.mxu0 0
        %541 = vmatprep.subr.bf16.mxu0 0
        %542 = vmatpush1.bf16.msra.mxu0 0
        %543 = vmatprep.subr.bf16.mxu0 0
        %544 = vmatpush1.bf16.msra.mxu0 0
        %545 = vmatprep.subr.bf16.mxu0 0
        %546 = vmatpush1.bf16.msra.mxu0 0
        %547 = vmatprep.subr.bf16.mxu0 0
        %548 = vmatpush1.bf16.msra.mxu0 0
        %549 = vmatprep.subr.bf16.mxu0 0
        %550 = vmatpush1.bf16.msra.mxu0 0
        %551 = vmatprep.subr.bf16.mxu0 0
        %552 = vmatpush1.bf16.msra.mxu0 0
        %553 = vmatprep.subr.bf16.mxu0 0
        %554 = vmatpush1.bf16.msra.mxu0 %v525
        %555 = vmatprep.subr.bf16.mxu0 0
        %556 = vmatpush2.bf16.msra.mxu0 0
        %557 = vmatprep.subr.bf16.mxu0 0
        %558 = vmatpush2.bf16.msra.mxu0 0
        %559 = vmatprep.subr.bf16.mxu0 0
        %560 = vmatpush2.bf16.msra.mxu0 0
        %561 = vmatprep.subr.bf16.mxu0 0
        %562 = vmatpush2.bf16.msra.mxu0 0
        %563 = vmatprep.subr.bf16.mxu0 0
        %564 = vmatpush2.bf16.msra.mxu0 0
        %565 = vmatprep.subr.bf16.mxu0 0
        %566 = vmatpush2.bf16.msra.mxu0 0
        %567 = vmatprep.subr.bf16.mxu0 0
        %568 = vmatpush2.bf16.msra.mxu0 0
        %569 = vmatprep.subr.bf16.mxu0 0
        %570 = vmatpush2.bf16.msra.mxu0 0
        %571 = vmatprep.mubr.bf16.mxu0 0
        %572 = vmatmul.mubr.bf16.gmra.mxu0 %v528
        %v573 = vpop.f32.mrf.mxu0
        %v574 = vadd.f32 0.0, %v573
        %v575 = vpop.f32.mrf.mxu0
        %v576 = vpop.f32.mrf.mxu0
        %v577 = vadd.f32 0.0, %v576
        %v578 = vpop.f32.mrf.mxu0
        %579 = vmatprep.mubr.bf16.mxu0 0
        %580 = vmatmul.mubr.bf16.gmra.mxu0 %v531
        %v581 = vpop.f32.mrf.mxu0
        %v582 = vadd.f32 0.0, %v581
        %v583 = vpop.f32.mrf.mxu0
        %v584 = vpop.f32.mrf.mxu0
        %v585 = vadd.f32 0.0, %v584
        %v586 = vpop.f32.mrf.mxu0
        %587 = vmatprep.mubr.bf16.mxu0 0
        %588 = vmatmul.mubr.bf16.gmra.mxu0 %v534
        %v589 = vpop.f32.mrf.mxu0
        %v590 = vadd.f32 0.0, %v589
        %v591 = vpop.f32.mrf.mxu0
        %v592 = vpop.f32.mrf.mxu0
        %v593 = vadd.f32 0.0, %v592
        %v594 = vpop.f32.mrf.mxu0
        %595 = vmatprep.mubr.bf16.mxu0 0
        %596 = vmatmul.mubr.bf16.gmra.mxu0 %v537
        %v597 = vpop.f32.mrf.mxu0
        %v598 = vadd.f32 0.0, %v597
        %v599 = vpop.f32.mrf.mxu0
        %v600 = vpop.f32.mrf.mxu0
        %v601 = vadd.f32 0.0, %v600
        %v602 = vpop.f32.mrf.mxu0
        %603 = vdwg.mxu0
        %v606 = vunpack.c.l.b16 %v504
        %v607 = vunpack.c.l.b16 %v505
        %v608 = vpack.c.b16 %v607, %v606
        %v611 = vsel %vm481, %v500, 0
        %v614 = vsel %vm481, %v501, 0
        %v617 = vsel %vm481, %v502, 0
        %v620 = vsel %vm481, %v503, 0
        %622 = vmatprep.subr.bf16.mxu0 0
        %623 = vmatpush1.bf16.msra.mxu0 0
        %624 = vmatprep.subr.bf16.mxu0 0
        %625 = vmatpush1.bf16.msra.mxu0 0
        %626 = vmatprep.subr.bf16.mxu0 0
        %627 = vmatpush1.bf16.msra.mxu0 0
        %628 = vmatprep.subr.bf16.mxu0 0
        %629 = vmatpush1.bf16.msra.mxu0 0
        %630 = vmatprep.subr.bf16.mxu0 0
        %631 = vmatpush1.bf16.msra.mxu0 0
        %632 = vmatprep.subr.bf16.mxu0 0
        %633 = vmatpush1.bf16.msra.mxu0 0
        %634 = vmatprep.subr.bf16.mxu0 0
        %635 = vmatpush1.bf16.msra.mxu0 0
        %636 = vmatprep.subr.bf16.mxu0 0
        %637 = vmatpush1.bf16.msra.mxu0 %v608
        %638 = vmatprep.subr.bf16.mxu0 0
        %639 = vmatpush2.bf16.msra.mxu0 0
        %640 = vmatprep.subr.bf16.mxu0 0
        %641 = vmatpush2.bf16.msra.mxu0 0
        %642 = vmatprep.subr.bf16.mxu0 0
        %643 = vmatpush2.bf16.msra.mxu0 0
        %644 = vmatprep.subr.bf16.mxu0 0
        %645 = vmatpush2.bf16.msra.mxu0 0
        %646 = vmatprep.subr.bf16.mxu0 0
        %647 = vmatpush2.bf16.msra.mxu0 0
        %648 = vmatprep.subr.bf16.mxu0 0
        %649 = vmatpush2.bf16.msra.mxu0 0
        %650 = vmatprep.subr.bf16.mxu0 0
        %651 = vmatpush2.bf16.msra.mxu0 0
        %652 = vmatprep.subr.bf16.mxu0 0
        %653 = vmatpush2.bf16.msra.mxu0 0
        %654 = vmatprep.mubr.bf16.mxu0 0
        %655 = vmatmul.mubr.bf16.gmra.mxu0 %v611
        %v656 = vpop.f32.mrf.mxu0
        %v657 = vadd.f32 %v574, %v656
        %v658 = vpop.f32.mrf.mxu0
        %v659 = vpop.f32.mrf.mxu0
        %v660 = vadd.f32 %v577, %v659
        %v661 = vpop.f32.mrf.mxu0
        %662 = vmatprep.mubr.bf16.mxu0 0
        %663 = vmatmul.mubr.bf16.gmra.mxu0 %v614
        %v664 = vpop.f32.mrf.mxu0
        %v665 = vadd.f32 %v582, %v664
        %v666 = vpop.f32.mrf.mxu0
        %v667 = vpop.f32.mrf.mxu0
        %v668 = vadd.f32 %v585, %v667
        %v669 = vpop.f32.mrf.mxu0
        %670 = vmatprep.mubr.bf16.mxu0 0
        %671 = vmatmul.mubr.bf16.gmra.mxu0 %v617
        %v672 = vpop.f32.mrf.mxu0
        %v673 = vadd.f32 %v590, %v672
        %v674 = vpop.f32.mrf.mxu0
        %v675 = vpop.f32.mrf.mxu0
        %v676 = vadd.f32 %v593, %v675
        %v677 = vpop.f32.mrf.mxu0
        %678 = vmatprep.mubr.bf16.mxu0 0
        %679 = vmatmul.mubr.bf16.gmra.mxu0 %v620
        %v680 = vpop.f32.mrf.mxu0
        %v681 = vadd.f32 %v598, %v680
        %v682 = vpop.f32.mrf.mxu0
        %v683 = vpop.f32.mrf.mxu0
        %v684 = vadd.f32 %v601, %v683
        %v685 = vpop.f32.mrf.mxu0
        %686 = vdwg.mxu0
        %v687 = vld [vmem:[#allocation2 + $0x5] sm:$0xff]
        %v688 = vld [vmem:[#allocation2 + $0xd] sm:$0xff]
        %v689 = vld [vmem:[#allocation2 + $0x15] sm:$0xff]
        %v690 = vld [vmem:[#allocation2 + $0x1d] sm:$0xff]
        %v691 = vld [vmem:[#allocation2 + $0x25] sm:$0xff]
        %v692 = vld [vmem:[#allocation2 + $0x2d] sm:$0xff]
        %v693 = vld [vmem:[#allocation2 + $0x35] sm:$0xff]
        %v694 = vld [vmem:[#allocation2 + $0x3d] sm:$0xff]
        %v695 = vpack.c.bf16 %v688, %v687
        %v696 = vpack.c.bf16 %v690, %v689
        %v697 = vpack.c.bf16 %v692, %v691
        %v698 = vpack.c.bf16 %v694, %v693
        %s699 = scalar_lea.vmem [#allocation9], 16
        %v700 = vld [vmem:[%s699] sm:$0xf]
        %v701 = vld [vmem:[%s699 + $0x4] sm:$0xf]
        %v704 = vunpack.c.l.b16 %v700
        %v705 = vunpack.c.l.b16 %v701
        %v706 = vpack.c.b16 %v705, %v704
        %v709 = vsel %vm481, %v695, 0
        %v712 = vsel %vm481, %v696, 0
        %v715 = vsel %vm481, %v697, 0
        %v718 = vsel %vm481, %v698, 0
        %720 = vmatprep.subr.bf16.mxu0 0
        %721 = vmatpush1.bf16.msra.mxu0 0
        %722 = vmatprep.subr.bf16.mxu0 0
        %723 = vmatpush1.bf16.msra.mxu0 0
        %724 = vmatprep.subr.bf16.mxu0 0
        %725 = vmatpush1.bf16.msra.mxu0 0
        %726 = vmatprep.subr.bf16.mxu0 0
        %727 = vmatpush1.bf16.msra.mxu0 0
        %728 = vmatprep.subr.bf16.mxu0 0
        %729 = vmatpush1.bf16.msra.mxu0 0
        %730 = vmatprep.subr.bf16.mxu0 0
        %731 = vmatpush1.bf16.msra.mxu0 0
        %732 = vmatprep.subr.bf16.mxu0 0
        %733 = vmatpush1.bf16.msra.mxu0 0
        %734 = vmatprep.subr.bf16.mxu0 0
        %735 = vmatpush1.bf16.msra.mxu0 %v706
        %736 = vmatprep.subr.bf16.mxu0 0
        %737 = vmatpush2.bf16.msra.mxu0 0
        %738 = vmatprep.subr.bf16.mxu0 0
        %739 = vmatpush2.bf16.msra.mxu0 0
        %740 = vmatprep.subr.bf16.mxu0 0
        %741 = vmatpush2.bf16.msra.mxu0 0
        %742 = vmatprep.subr.bf16.mxu0 0
        %743 = vmatpush2.bf16.msra.mxu0 0
        %744 = vmatprep.subr.bf16.mxu0 0
        %745 = vmatpush2.bf16.msra.mxu0 0
        %746 = vmatprep.subr.bf16.mxu0 0
        %747 = vmatpush2.bf16.msra.mxu0 0
        %748 = vmatprep.subr.bf16.mxu0 0
        %749 = vmatpush2.bf16.msra.mxu0 0
        %750 = vmatprep.subr.bf16.mxu0 0
        %751 = vmatpush2.bf16.msra.mxu0 0
        %752 = vmatprep.mubr.bf16.mxu0 0
        %753 = vmatmul.mubr.bf16.gmra.mxu0 %v709
        %v754 = vpop.f32.mrf.mxu0
        %v755 = vadd.f32 0.0, %v754
        %v756 = vpop.f32.mrf.mxu0
        %v757 = vpop.f32.mrf.mxu0
        %v758 = vadd.f32 0.0, %v757
        %v759 = vpop.f32.mrf.mxu0
        %760 = vmatprep.mubr.bf16.mxu0 0
        %761 = vmatmul.mubr.bf16.gmra.mxu0 %v712
        %v762 = vpop.f32.mrf.mxu0
        %v763 = vadd.f32 0.0, %v762
        %v764 = vpop.f32.mrf.mxu0
        %v765 = vpop.f32.mrf.mxu0
        %v766 = vadd.f32 0.0, %v765
        %v767 = vpop.f32.mrf.mxu0
        %768 = vmatprep.mubr.bf16.mxu0 0
        %769 = vmatmul.mubr.bf16.gmra.mxu0 %v715
        %v770 = vpop.f32.mrf.mxu0
        %v771 = vadd.f32 0.0, %v770
        %v772 = vpop.f32.mrf.mxu0
        %v773 = vpop.f32.mrf.mxu0
        %v774 = vadd.f32 0.0, %v773
        %v775 = vpop.f32.mrf.mxu0
        %776 = vmatprep.mubr.bf16.mxu0 0
        %777 = vmatmul.mubr.bf16.gmra.mxu0 %v718
        %v778 = vpop.f32.mrf.mxu0
        %v779 = vadd.f32 0.0, %v778
        %v780 = vpop.f32.mrf.mxu0
        %v781 = vpop.f32.mrf.mxu0
        %v782 = vadd.f32 0.0, %v781
        %v783 = vpop.f32.mrf.mxu0
        %784 = vdwg.mxu0
        %v785 = vadd.f32 %v657, %v755
        %v786 = vadd.f32 %v660, %v758
        %v787 = vadd.f32 %v665, %v763
        %v788 = vadd.f32 %v668, %v766
        %v789 = vadd.f32 %v673, %v771
        %v790 = vadd.f32 %v676, %v774
        %v791 = vadd.f32 %v681, %v779
        %v792 = vadd.f32 %v684, %v782
        %v793 = vld [vmem:[#allocation2 + $0x6] sm:$0xff]
        %v794 = vld [vmem:[#allocation2 + $0xe] sm:$0xff]
        %v795 = vld [vmem:[#allocation2 + $0x16] sm:$0xff]
        %v796 = vld [vmem:[#allocation2 + $0x1e] sm:$0xff]
        %v797 = vld [vmem:[#allocation2 + $0x26] sm:$0xff]
        %v798 = vld [vmem:[#allocation2 + $0x2e] sm:$0xff]
        %v799 = vld [vmem:[#allocation2 + $0x36] sm:$0xff]
        %v800 = vld [vmem:[#allocation2 + $0x3e] sm:$0xff]
        %v801 = vpack.c.bf16 %v794, %v793
        %v802 = vpack.c.bf16 %v796, %v795
        %v803 = vpack.c.bf16 %v798, %v797
        %v804 = vpack.c.bf16 %v800, %v799
        %s805 = scalar_lea.vmem [#allocation9], 24
        %v806 = vld [vmem:[%s805] sm:$0xf]
        %v807 = vld [vmem:[%s805 + $0x4] sm:$0xf]
        %v810 = vunpack.c.l.b16 %v806
        %v811 = vunpack.c.l.b16 %v807
        %v812 = vpack.c.b16 %v811, %v810
        %v815 = vsel %vm481, %v801, 0
        %v818 = vsel %vm481, %v802, 0
        %v821 = vsel %vm481, %v803, 0
        %v824 = vsel %vm481, %v804, 0
        %826 = vmatprep.subr.bf16.mxu0 0
        %827 = vmatpush1.bf16.msra.mxu0 0
        %828 = vmatprep.subr.bf16.mxu0 0
        %829 = vmatpush1.bf16.msra.mxu0 0
        %830 = vmatprep.subr.bf16.mxu0 0
        %831 = vmatpush1.bf16.msra.mxu0 0
        %832 = vmatprep.subr.bf16.mxu0 0
        %833 = vmatpush1.bf16.msra.mxu0 0
        %834 = vmatprep.subr.bf16.mxu0 0
        %835 = vmatpush1.bf16.msra.mxu0 0
        %836 = vmatprep.subr.bf16.mxu0 0
        %837 = vmatpush1.bf16.msra.mxu0 0
        %838 = vmatprep.subr.bf16.mxu0 0
        %839 = vmatpush1.bf16.msra.mxu0 0
        %840 = vmatprep.subr.bf16.mxu0 0
        %841 = vmatpush1.bf16.msra.mxu0 %v812
        %842 = vmatprep.subr.bf16.mxu0 0
        %843 = vmatpush2.bf16.msra.mxu0 0
        %844 = vmatprep.subr.bf16.mxu0 0
        %845 = vmatpush2.bf16.msra.mxu0 0
        %846 = vmatprep.subr.bf16.mxu0 0
        %847 = vmatpush2.bf16.msra.mxu0 0
        %848 = vmatprep.subr.bf16.mxu0 0
        %849 = vmatpush2.bf16.msra.mxu0 0
        %850 = vmatprep.subr.bf16.mxu0 0
        %851 = vmatpush2.bf16.msra.mxu0 0
        %852 = vmatprep.subr.bf16.mxu0 0
        %853 = vmatpush2.bf16.msra.mxu0 0
        %854 = vmatprep.subr.bf16.mxu0 0
        %855 = vmatpush2.bf16.msra.mxu0 0
        %856 = vmatprep.subr.bf16.mxu0 0
        %857 = vmatpush2.bf16.msra.mxu0 0
        %858 = vmatprep.mubr.bf16.mxu0 0
        %859 = vmatmul.mubr.bf16.gmra.mxu0 %v815
        %v860 = vpop.f32.mrf.mxu0
        %v861 = vadd.f32 0.0, %v860
        %v862 = vpop.f32.mrf.mxu0
        %v863 = vpop.f32.mrf.mxu0
        %v864 = vadd.f32 0.0, %v863
        %v865 = vpop.f32.mrf.mxu0
        %866 = vmatprep.mubr.bf16.mxu0 0
        %867 = vmatmul.mubr.bf16.gmra.mxu0 %v818
        %v868 = vpop.f32.mrf.mxu0
        %v869 = vadd.f32 0.0, %v868
        %v870 = vpop.f32.mrf.mxu0
        %v871 = vpop.f32.mrf.mxu0
        %v872 = vadd.f32 0.0, %v871
        %v873 = vpop.f32.mrf.mxu0
        %874 = vmatprep.mubr.bf16.mxu0 0
        %875 = vmatmul.mubr.bf16.gmra.mxu0 %v821
        %v876 = vpop.f32.mrf.mxu0
        %v877 = vadd.f32 0.0, %v876
        %v878 = vpop.f32.mrf.mxu0
        %v879 = vpop.f32.mrf.mxu0
        %v880 = vadd.f32 0.0, %v879
        %v881 = vpop.f32.mrf.mxu0
        %882 = vmatprep.mubr.bf16.mxu0 0
        %883 = vmatmul.mubr.bf16.gmra.mxu0 %v824
        %v884 = vpop.f32.mrf.mxu0
        %v885 = vadd.f32 0.0, %v884
        %v886 = vpop.f32.mrf.mxu0
        %v887 = vpop.f32.mrf.mxu0
        %v888 = vadd.f32 0.0, %v887
        %v889 = vpop.f32.mrf.mxu0
        %890 = vdwg.mxu0
        %v891 = vadd.f32 %v785, %v861
        %v892 = vadd.f32 %v786, %v864
        %v893 = vadd.f32 %v787, %v869
        %v894 = vadd.f32 %v788, %v872
        %v895 = vadd.f32 %v789, %v877
        %v896 = vadd.f32 %v790, %v880
        %v897 = vadd.f32 %v791, %v885
        %v898 = vadd.f32 %v792, %v888
        %v899 = vld [vmem:[#allocation2 + $0x7] sm:$0xff]
        %v900 = vld [vmem:[#allocation2 + $0xf] sm:$0xff]
        %v901 = vld [vmem:[#allocation2 + $0x17] sm:$0xff]
        %v902 = vld [vmem:[#allocation2 + $0x1f] sm:$0xff]
        %v903 = vld [vmem:[#allocation2 + $0x27] sm:$0xff]
        %v904 = vld [vmem:[#allocation2 + $0x2f] sm:$0xff]
        %v905 = vld [vmem:[#allocation2 + $0x37] sm:$0xff]
        %v906 = vld [vmem:[#allocation2 + $0x3f] sm:$0xff]
        %v907 = vpack.c.bf16 %v900, %v899
        %v908 = vpack.c.bf16 %v902, %v901
        %v909 = vpack.c.bf16 %v904, %v903
        %v910 = vpack.c.bf16 %v906, %v905
        %s911 = scalar_lea.vmem [#allocation9], 32
        %v912 = vld [vmem:[%s911] sm:$0xf]
        %v913 = vld [vmem:[%s911 + $0x4] sm:$0xf]
        %v916 = vunpack.c.l.b16 %v912
        %v917 = vunpack.c.l.b16 %v913
        %v918 = vpack.c.b16 %v917, %v916
        %v921 = vsel %vm481, %v907, 0
        %v924 = vsel %vm481, %v908, 0
        %v927 = vsel %vm481, %v909, 0
        %v930 = vsel %vm481, %v910, 0
        %932 = vmatprep.subr.bf16.mxu0 0
        %933 = vmatpush1.bf16.msra.mxu0 0
        %934 = vmatprep.subr.bf16.mxu0 0
        %935 = vmatpush1.bf16.msra.mxu0 0
        %936 = vmatprep.subr.bf16.mxu0 0
        %937 = vmatpush1.bf16.msra.mxu0 0
        %938 = vmatprep.subr.bf16.mxu0 0
        %939 = vmatpush1.bf16.msra.mxu0 0
        %940 = vmatprep.subr.bf16.mxu0 0
        %941 = vmatpush1.bf16.msra.mxu0 0
        %942 = vmatprep.subr.bf16.mxu0 0
        %943 = vmatpush1.bf16.msra.mxu0 0
        %944 = vmatprep.subr.bf16.mxu0 0
        %945 = vmatpush1.bf16.msra.mxu0 0
        %946 = vmatprep.subr.bf16.mxu0 0
        %947 = vmatpush1.bf16.msra.mxu0 %v918
        %948 = vmatprep.subr.bf16.mxu0 0
        %949 = vmatpush2.bf16.msra.mxu0 0
        %950 = vmatprep.subr.bf16.mxu0 0
        %951 = vmatpush2.bf16.msra.mxu0 0
        %952 = vmatprep.subr.bf16.mxu0 0
        %953 = vmatpush2.bf16.msra.mxu0 0
        %954 = vmatprep.subr.bf16.mxu0 0
        %955 = vmatpush2.bf16.msra.mxu0 0
        %956 = vmatprep.subr.bf16.mxu0 0
        %957 = vmatpush2.bf16.msra.mxu0 0
        %958 = vmatprep.subr.bf16.mxu0 0
        %959 = vmatpush2.bf16.msra.mxu0 0
        %960 = vmatprep.subr.bf16.mxu0 0
        %961 = vmatpush2.bf16.msra.mxu0 0
        %962 = vmatprep.subr.bf16.mxu0 0
        %963 = vmatpush2.bf16.msra.mxu0 0
        %964 = vmatprep.mubr.bf16.mxu0 0
        %965 = vmatmul.mubr.bf16.gmra.mxu0 %v921
        %v966 = vpop.f32.mrf.mxu0
        %v967 = vadd.f32 0.0, %v966
        %v968 = vpop.f32.mrf.mxu0
        %v969 = vpop.f32.mrf.mxu0
        %v970 = vadd.f32 0.0, %v969
        %v971 = vpop.f32.mrf.mxu0
        %972 = vmatprep.mubr.bf16.mxu0 0
        %973 = vmatmul.mubr.bf16.gmra.mxu0 %v924
        %v974 = vpop.f32.mrf.mxu0
        %v975 = vadd.f32 0.0, %v974
        %v976 = vpop.f32.mrf.mxu0
        %v977 = vpop.f32.mrf.mxu0
        %v978 = vadd.f32 0.0, %v977
        %v979 = vpop.f32.mrf.mxu0
        %980 = vmatprep.mubr.bf16.mxu0 0
        %981 = vmatmul.mubr.bf16.gmra.mxu0 %v927
        %v982 = vpop.f32.mrf.mxu0
        %v983 = vadd.f32 0.0, %v982
        %v984 = vpop.f32.mrf.mxu0
        %v985 = vpop.f32.mrf.mxu0
        %v986 = vadd.f32 0.0, %v985
        %v987 = vpop.f32.mrf.mxu0
        %988 = vmatprep.mubr.bf16.mxu0 0
        %989 = vmatmul.mubr.bf16.gmra.mxu0 %v930
        %v990 = vpop.f32.mrf.mxu0
        %v991 = vadd.f32 0.0, %v990
        %v992 = vpop.f32.mrf.mxu0
        %v993 = vpop.f32.mrf.mxu0
        %v994 = vadd.f32 0.0, %v993
        %v995 = vpop.f32.mrf.mxu0
        %996 = vdwg.mxu0
        %v997 = vadd.f32 %v891, %v967
        %v998 = vadd.f32 %v892, %v970
        %v999 = vadd.f32 %v893, %v975
        %v1000 = vadd.f32 %v894, %v978
        %v1001 = vadd.f32 %v895, %v983
        %v1002 = vadd.f32 %v896, %v986
        %v1003 = vadd.f32 %v897, %v991
        %v1004 = vadd.f32 %v898, %v994
        %v1005 = vld [vmem:[#allocation2 + $0x8] sm:$0xff]
        %v1006 = vld [vmem:[#allocation2 + $0x10] sm:$0xff]
        %v1007 = vld [vmem:[#allocation2 + $0x18] sm:$0xff]
        %v1008 = vld [vmem:[#allocation2 + $0x20] sm:$0xff]
        %v1009 = vld [vmem:[#allocation2 + $0x28] sm:$0xff]
        %v1010 = vld [vmem:[#allocation2 + $0x30] sm:$0xff]
        %v1011 = vld [vmem:[#allocation2 + $0x38] sm:$0xff]
        %v1012 = vld [vmem:[#allocation2 + $0x40] sm:$0xff]
        %v1013 = vpack.c.bf16 %v1006, %v1005
        %v1014 = vpack.c.bf16 %v1008, %v1007
        %v1015 = vpack.c.bf16 %v1010, %v1009
        %v1016 = vpack.c.bf16 %v1012, %v1011
        %s1017 = scalar_lea.vmem [#allocation9], 40
        %v1018 = vld [vmem:[%s1017] sm:$0xf]
        %v1019 = vld [vmem:[%s1017 + $0x4] sm:$0xf]
        %v1022 = vunpack.c.l.b16 %v1018
        %v1023 = vunpack.c.l.b16 %v1019
        %v1024 = vpack.c.b16 %v1023, %v1022
        %v1027 = vsel %vm481, %v1013, 0
        %v1030 = vsel %vm481, %v1014, 0
        %v1033 = vsel %vm481, %v1015, 0
        %v1036 = vsel %vm481, %v1016, 0
        %1038 = vmatprep.subr.bf16.mxu0 0
        %1039 = vmatpush1.bf16.msra.mxu0 0
        %1040 = vmatprep.subr.bf16.mxu0 0
        %1041 = vmatpush1.bf16.msra.mxu0 0
        %1042 = vmatprep.subr.bf16.mxu0 0
        %1043 = vmatpush1.bf16.msra.mxu0 0
        %1044 = vmatprep.subr.bf16.mxu0 0
        %1045 = vmatpush1.bf16.msra.mxu0 0
        %1046 = vmatprep.subr.bf16.mxu0 0
        %1047 = vmatpush1.bf16.msra.mxu0 0
        %1048 = vmatprep.subr.bf16.mxu0 0
        %1049 = vmatpush1.bf16.msra.mxu0 0
        %1050 = vmatprep.subr.bf16.mxu0 0
        %1051 = vmatpush1.bf16.msra.mxu0 0
        %1052 = vmatprep.subr.bf16.mxu0 0
        %1053 = vmatpush1.bf16.msra.mxu0 %v1024
        %1054 = vmatprep.subr.bf16.mxu0 0
        %1055 = vmatpush2.bf16.msra.mxu0 0
        %1056 = vmatprep.subr.bf16.mxu0 0
        %1057 = vmatpush2.bf16.msra.mxu0 0
        %1058 = vmatprep.subr.bf16.mxu0 0
        %1059 = vmatpush2.bf16.msra.mxu0 0
        %1060 = vmatprep.subr.bf16.mxu0 0
        %1061 = vmatpush2.bf16.msra.mxu0 0
        %1062 = vmatprep.subr.bf16.mxu0 0
        %1063 = vmatpush2.bf16.msra.mxu0 0
        %1064 = vmatprep.subr.bf16.mxu0 0
        %1065 = vmatpush2.bf16.msra.mxu0 0
        %1066 = vmatprep.subr.bf16.mxu0 0
        %1067 = vmatpush2.bf16.msra.mxu0 0
        %1068 = vmatprep.subr.bf16.mxu0 0
        %1069 = vmatpush2.bf16.msra.mxu0 0
        %1070 = vmatprep.mubr.bf16.mxu0 0
        %1071 = vmatmul.mubr.bf16.gmra.mxu0 %v1027
        %v1072 = vpop.f32.mrf.mxu0
        %v1073 = vadd.f32 0.0, %v1072
        %v1074 = vpop.f32.mrf.mxu0
        %v1075 = vpop.f32.mrf.mxu0
        %v1076 = vadd.f32 0.0, %v1075
        %v1077 = vpop.f32.mrf.mxu0
        %1078 = vmatprep.mubr.bf16.mxu0 0
        %1079 = vmatmul.mubr.bf16.gmra.mxu0 %v1030
        %v1080 = vpop.f32.mrf.mxu0
        %v1081 = vadd.f32 0.0, %v1080
        %v1082 = vpop.f32.mrf.mxu0
        %v1083 = vpop.f32.mrf.mxu0
        %v1084 = vadd.f32 0.0, %v1083
        %v1085 = vpop.f32.mrf.mxu0
        %1086 = vmatprep.mubr.bf16.mxu0 0
        %1087 = vmatmul.mubr.bf16.gmra.mxu0 %v1033
        %v1088 = vpop.f32.mrf.mxu0
        %v1089 = vadd.f32 0.0, %v1088
        %v1090 = vpop.f32.mrf.mxu0
        %v1091 = vpop.f32.mrf.mxu0
        %v1092 = vadd.f32 0.0, %v1091
        %v1093 = vpop.f32.mrf.mxu0
        %1094 = vmatprep.mubr.bf16.mxu0 0
        %1095 = vmatmul.mubr.bf16.gmra.mxu0 %v1036
        %v1096 = vpop.f32.mrf.mxu0
        %v1097 = vadd.f32 0.0, %v1096
        %v1098 = vpop.f32.mrf.mxu0
        %v1099 = vpop.f32.mrf.mxu0
        %v1100 = vadd.f32 0.0, %v1099
        %v1101 = vpop.f32.mrf.mxu0
        %1102 = vdwg.mxu0
        %v1103 = vadd.f32 %v997, %v1073
        %v1104 = vadd.f32 %v998, %v1076
        %v1105 = vadd.f32 %v999, %v1081
        %v1106 = vadd.f32 %v1000, %v1084
        %v1107 = vadd.f32 %v1001, %v1089
        %v1108 = vadd.f32 %v1002, %v1092
        %v1109 = vadd.f32 %v1003, %v1097
        %v1110 = vadd.f32 %v1004, %v1100
        %v1111 = vld [vmem:[#allocation2 + $0x9] sm:$0xff]
        %v1112 = vld [vmem:[#allocation2 + $0x11] sm:$0xff]
        %v1113 = vld [vmem:[#allocation2 + $0x19] sm:$0xff]
        %v1114 = vld [vmem:[#allocation2 + $0x21] sm:$0xff]
        %v1115 = vld [vmem:[#allocation2 + $0x29] sm:$0xff]
        %v1116 = vld [vmem:[#allocation2 + $0x31] sm:$0xff]
        %v1117 = vld [vmem:[#allocation2 + $0x39] sm:$0xff]
        %v1118 = vld [vmem:[#allocation2 + $0x41] sm:$0xff]
        %v1119 = vpack.c.bf16 %v1112, %v1111
        %v1120 = vpack.c.bf16 %v1114, %v1113
        %v1121 = vpack.c.bf16 %v1116, %v1115
        %v1122 = vpack.c.bf16 %v1118, %v1117
        %s1123 = scalar_lea.vmem [#allocation9], 48
        %v1124 = vld [vmem:[%s1123] sm:$0xf]
        %v1125 = vld [vmem:[%s1123 + $0x4] sm:$0xf]
        %v1128 = vunpack.c.l.b16 %v1124
        %v1129 = vunpack.c.l.b16 %v1125
        %v1130 = vpack.c.b16 %v1129, %v1128
        %v1133 = vsel %vm481, %v1119, 0
        %v1136 = vsel %vm481, %v1120, 0
        %v1139 = vsel %vm481, %v1121, 0
        %v1142 = vsel %vm481, %v1122, 0
        %1144 = vmatprep.subr.bf16.mxu0 0
        %1145 = vmatpush1.bf16.msra.mxu0 0
        %1146 = vmatprep.subr.bf16.mxu0 0
        %1147 = vmatpush1.bf16.msra.mxu0 0
        %1148 = vmatprep.subr.bf16.mxu0 0
        %1149 = vmatpush1.bf16.msra.mxu0 0
        %1150 = vmatprep.subr.bf16.mxu0 0
        %1151 = vmatpush1.bf16.msra.mxu0 0
        %1152 = vmatprep.subr.bf16.mxu0 0
        %1153 = vmatpush1.bf16.msra.mxu0 0
        %1154 = vmatprep.subr.bf16.mxu0 0
        %1155 = vmatpush1.bf16.msra.mxu0 0
        %1156 = vmatprep.subr.bf16.mxu0 0
        %1157 = vmatpush1.bf16.msra.mxu0 0
        %1158 = vmatprep.subr.bf16.mxu0 0
        %1159 = vmatpush1.bf16.msra.mxu0 %v1130
        %1160 = vmatprep.subr.bf16.mxu0 0
        %1161 = vmatpush2.bf16.msra.mxu0 0
        %1162 = vmatprep.subr.bf16.mxu0 0
        %1163 = vmatpush2.bf16.msra.mxu0 0
        %1164 = vmatprep.subr.bf16.mxu0 0
        %1165 = vmatpush2.bf16.msra.mxu0 0
        %1166 = vmatprep.subr.bf16.mxu0 0
        %1167 = vmatpush2.bf16.msra.mxu0 0
        %1168 = vmatprep.subr.bf16.mxu0 0
        %1169 = vmatpush2.bf16.msra.mxu0 0
        %1170 = vmatprep.subr.bf16.mxu0 0
        %1171 = vmatpush2.bf16.msra.mxu0 0
        %1172 = vmatprep.subr.bf16.mxu0 0
        %1173 = vmatpush2.bf16.msra.mxu0 0
        %1174 = vmatprep.subr.bf16.mxu0 0
        %1175 = vmatpush2.bf16.msra.mxu0 0
        %1176 = vmatprep.mubr.bf16.mxu0 0
        %1177 = vmatmul.mubr.bf16.gmra.mxu0 %v1133
        %v1178 = vpop.f32.mrf.mxu0
        %v1179 = vadd.f32 0.0, %v1178
        %v1180 = vpop.f32.mrf.mxu0
        %v1181 = vpop.f32.mrf.mxu0
        %v1182 = vadd.f32 0.0, %v1181
        %v1183 = vpop.f32.mrf.mxu0
        %1184 = vmatprep.mubr.bf16.mxu0 0
        %1185 = vmatmul.mubr.bf16.gmra.mxu0 %v1136
        %v1186 = vpop.f32.mrf.mxu0
        %v1187 = vadd.f32 0.0, %v1186
        %v1188 = vpop.f32.mrf.mxu0
        %v1189 = vpop.f32.mrf.mxu0
        %v1190 = vadd.f32 0.0, %v1189
        %v1191 = vpop.f32.mrf.mxu0
        %1192 = vmatprep.mubr.bf16.mxu0 0
        %1193 = vmatmul.mubr.bf16.gmra.mxu0 %v1139
        %v1194 = vpop.f32.mrf.mxu0
        %v1195 = vadd.f32 0.0, %v1194
        %v1196 = vpop.f32.mrf.mxu0
        %v1197 = vpop.f32.mrf.mxu0
        %v1198 = vadd.f32 0.0, %v1197
        %v1199 = vpop.f32.mrf.mxu0
        %1200 = vmatprep.mubr.bf16.mxu0 0
        %1201 = vmatmul.mubr.bf16.gmra.mxu0 %v1142
        %v1202 = vpop.f32.mrf.mxu0
        %v1203 = vadd.f32 0.0, %v1202
        %v1204 = vpop.f32.mrf.mxu0
        %v1205 = vpop.f32.mrf.mxu0
        %v1206 = vadd.f32 0.0, %v1205
        %v1207 = vpop.f32.mrf.mxu0
        %1208 = vdwg.mxu0
        %v1209 = vadd.f32 %v1103, %v1179
        %v1210 = vadd.f32 %v1104, %v1182
        %v1211 = vadd.f32 %v1105, %v1187
        %v1212 = vadd.f32 %v1106, %v1190
        %v1213 = vadd.f32 %v1107, %v1195
        %v1214 = vadd.f32 %v1108, %v1198
        %v1215 = vadd.f32 %v1109, %v1203
        %v1216 = vadd.f32 %v1110, %v1206
        %v1217 = vld [vmem:[#allocation2 + $0xa] sm:$0xff]
        %v1218 = vld [vmem:[#allocation2 + $0x12] sm:$0xff]
        %v1219 = vld [vmem:[#allocation2 + $0x1a] sm:$0xff]
        %v1220 = vld [vmem:[#allocation2 + $0x22] sm:$0xff]
        %v1221 = vld [vmem:[#allocation2 + $0x2a] sm:$0xff]
        %v1222 = vld [vmem:[#allocation2 + $0x32] sm:$0xff]
        %v1223 = vld [vmem:[#allocation2 + $0x3a] sm:$0xff]
        %v1224 = vld [vmem:[#allocation2 + $0x42] sm:$0xff]
        %v1225 = vpack.c.bf16 %v1218, %v1217
        %v1226 = vpack.c.bf16 %v1220, %v1219
        %v1227 = vpack.c.bf16 %v1222, %v1221
        %v1228 = vpack.c.bf16 %v1224, %v1223
        %s1229 = scalar_lea.vmem [#allocation9], 56
        %v1230 = vld [vmem:[%s1229] sm:$0xf]
        %v1231 = vld [vmem:[%s1229 + $0x4] sm:$0xf]
        %v1234 = vunpack.c.l.b16 %v1230
        %v1235 = vunpack.c.l.b16 %v1231
        %v1236 = vpack.c.b16 %v1235, %v1234
        %v1239 = vsel %vm481, %v1225, 0
        %v1242 = vsel %vm481, %v1226, 0
        %v1245 = vsel %vm481, %v1227, 0
        %v1248 = vsel %vm481, %v1228, 0
        %1250 = vmatprep.subr.bf16.mxu0 0
        %1251 = vmatpush1.bf16.msra.mxu0 0
        %1252 = vmatprep.subr.bf16.mxu0 0
        %1253 = vmatpush1.bf16.msra.mxu0 0
        %1254 = vmatprep.subr.bf16.mxu0 0
        %1255 = vmatpush1.bf16.msra.mxu0 0
        %1256 = vmatprep.subr.bf16.mxu0 0
        %1257 = vmatpush1.bf16.msra.mxu0 0
        %1258 = vmatprep.subr.bf16.mxu0 0
        %1259 = vmatpush1.bf16.msra.mxu0 0
        %1260 = vmatprep.subr.bf16.mxu0 0
        %1261 = vmatpush1.bf16.msra.mxu0 0
        %1262 = vmatprep.subr.bf16.mxu0 0
        %1263 = vmatpush1.bf16.msra.mxu0 0
        %1264 = vmatprep.subr.bf16.mxu0 0
        %1265 = vmatpush1.bf16.msra.mxu0 %v1236
        %1266 = vmatprep.subr.bf16.mxu0 0
        %1267 = vmatpush2.bf16.msra.mxu0 0
        %1268 = vmatprep.subr.bf16.mxu0 0
        %1269 = vmatpush2.bf16.msra.mxu0 0
        %1270 = vmatprep.subr.bf16.mxu0 0
        %1271 = vmatpush2.bf16.msra.mxu0 0
        %1272 = vmatprep.subr.bf16.mxu0 0
        %1273 = vmatpush2.bf16.msra.mxu0 0
        %1274 = vmatprep.subr.bf16.mxu0 0
        %1275 = vmatpush2.bf16.msra.mxu0 0
        %1276 = vmatprep.subr.bf16.mxu0 0
        %1277 = vmatpush2.bf16.msra.mxu0 0
        %1278 = vmatprep.subr.bf16.mxu0 0
        %1279 = vmatpush2.bf16.msra.mxu0 0
        %1280 = vmatprep.subr.bf16.mxu0 0
        %1281 = vmatpush2.bf16.msra.mxu0 0
        %1282 = vmatprep.mubr.bf16.mxu0 0
        %1283 = vmatmul.mubr.bf16.gmra.mxu0 %v1239
        %v1284 = vpop.f32.mrf.mxu0
        %v1285 = vadd.f32 0.0, %v1284
        %v1286 = vpop.f32.mrf.mxu0
        %v1287 = vpop.f32.mrf.mxu0
        %v1288 = vadd.f32 0.0, %v1287
        %v1289 = vpop.f32.mrf.mxu0
        %1290 = vmatprep.mubr.bf16.mxu0 0
        %1291 = vmatmul.mubr.bf16.gmra.mxu0 %v1242
        %v1292 = vpop.f32.mrf.mxu0
        %v1293 = vadd.f32 0.0, %v1292
        %v1294 = vpop.f32.mrf.mxu0
        %v1295 = vpop.f32.mrf.mxu0
        %v1296 = vadd.f32 0.0, %v1295
        %v1297 = vpop.f32.mrf.mxu0
        %1298 = vmatprep.mubr.bf16.mxu0 0
        %1299 = vmatmul.mubr.bf16.gmra.mxu0 %v1245
        %v1300 = vpop.f32.mrf.mxu0
        %v1301 = vadd.f32 0.0, %v1300
        %v1302 = vpop.f32.mrf.mxu0
        %v1303 = vpop.f32.mrf.mxu0
        %v1304 = vadd.f32 0.0, %v1303
        %v1305 = vpop.f32.mrf.mxu0
        %1306 = vmatprep.mubr.bf16.mxu0 0
        %1307 = vmatmul.mubr.bf16.gmra.mxu0 %v1248
        %v1308 = vpop.f32.mrf.mxu0
        %v1309 = vadd.f32 0.0, %v1308
        %v1310 = vpop.f32.mrf.mxu0
        %v1311 = vpop.f32.mrf.mxu0
        %v1312 = vadd.f32 0.0, %v1311
        %v1313 = vpop.f32.mrf.mxu0
        %1314 = vdwg.mxu0
        %v1315 = vadd.f32 %v1209, %v1285
        %v1316 = vadd.f32 %v1210, %v1288
        %v1317 = vadd.f32 %v1211, %v1293
        %v1318 = vadd.f32 %v1212, %v1296
        %v1319 = vadd.f32 %v1213, %v1301
        %v1320 = vadd.f32 %v1214, %v1304
        %v1321 = vadd.f32 %v1215, %v1309
        %v1322 = vadd.f32 %v1216, %v1312
        %v1323 = vld [vmem:[#allocation2 + $0xb] sm:$0xff]
        %v1324 = vld [vmem:[#allocation2 + $0x13] sm:$0xff]
        %v1325 = vld [vmem:[#allocation2 + $0x1b] sm:$0xff]
        %v1326 = vld [vmem:[#allocation2 + $0x23] sm:$0xff]
        %v1327 = vld [vmem:[#allocation2 + $0x2b] sm:$0xff]
        %v1328 = vld [vmem:[#allocation2 + $0x33] sm:$0xff]
        %v1329 = vld [vmem:[#allocation2 + $0x3b] sm:$0xff]
        %v1330 = vld [vmem:[#allocation2 + $0x43] sm:$0xff]
        %v1331 = vpack.c.bf16 %v1324, %v1323
        %v1332 = vpack.c.bf16 %v1326, %v1325
        %v1333 = vpack.c.bf16 %v1328, %v1327
        %v1334 = vpack.c.bf16 %v1330, %v1329
        %s1335 = scalar_lea.vmem [#allocation9], 64
        %v1336 = vld [vmem:[%s1335] sm:$0xf]
        %v1337 = vld [vmem:[%s1335 + $0x4] sm:$0xf]
        %v1340 = vunpack.c.l.b16 %v1336
        %v1341 = vunpack.c.l.b16 %v1337
        %v1342 = vpack.c.b16 %v1341, %v1340
        %v1345 = vsel %vm481, %v1331, 0
        %v1348 = vsel %vm481, %v1332, 0
        %v1351 = vsel %vm481, %v1333, 0
        %v1354 = vsel %vm481, %v1334, 0
        %1356 = vmatprep.subr.bf16.mxu0 0
        %1357 = vmatpush1.bf16.msra.mxu0 0
        %1358 = vmatprep.subr.bf16.mxu0 0
        %1359 = vmatpush1.bf16.msra.mxu0 0
        %1360 = vmatprep.subr.bf16.mxu0 0
        %1361 = vmatpush1.bf16.msra.mxu0 0
        %1362 = vmatprep.subr.bf16.mxu0 0
        %1363 = vmatpush1.bf16.msra.mxu0 0
        %1364 = vmatprep.subr.bf16.mxu0 0
        %1365 = vmatpush1.bf16.msra.mxu0 0
        %1366 = vmatprep.subr.bf16.mxu0 0
        %1367 = vmatpush1.bf16.msra.mxu0 0
        %1368 = vmatprep.subr.bf16.mxu0 0
        %1369 = vmatpush1.bf16.msra.mxu0 0
        %1370 = vmatprep.subr.bf16.mxu0 0
        %1371 = vmatpush1.bf16.msra.mxu0 %v1342
        %1372 = vmatprep.subr.bf16.mxu0 0
        %1373 = vmatpush2.bf16.msra.mxu0 0
        %1374 = vmatprep.subr.bf16.mxu0 0
        %1375 = vmatpush2.bf16.msra.mxu0 0
        %1376 = vmatprep.subr.bf16.mxu0 0
        %1377 = vmatpush2.bf16.msra.mxu0 0
        %1378 = vmatprep.subr.bf16.mxu0 0
        %1379 = vmatpush2.bf16.msra.mxu0 0
        %1380 = vmatprep.subr.bf16.mxu0 0
        %1381 = vmatpush2.bf16.msra.mxu0 0
        %1382 = vmatprep.subr.bf16.mxu0 0
        %1383 = vmatpush2.bf16.msra.mxu0 0
        %1384 = vmatprep.subr.bf16.mxu0 0
        %1385 = vmatpush2.bf16.msra.mxu0 0
        %1386 = vmatprep.subr.bf16.mxu0 0
        %1387 = vmatpush2.bf16.msra.mxu0 0
        %1388 = vmatprep.mubr.bf16.mxu0 0
        %1389 = vmatmul.mubr.bf16.gmra.mxu0 %v1345
        %v1390 = vpop.f32.mrf.mxu0
        %v1391 = vadd.f32 0.0, %v1390
        %v1392 = vpop.f32.mrf.mxu0
        %v1393 = vpop.f32.mrf.mxu0
        %v1394 = vadd.f32 0.0, %v1393
        %v1395 = vpop.f32.mrf.mxu0
        %1396 = vmatprep.mubr.bf16.mxu0 0
        %1397 = vmatmul.mubr.bf16.gmra.mxu0 %v1348
        %v1398 = vpop.f32.mrf.mxu0
        %v1399 = vadd.f32 0.0, %v1398
        %v1400 = vpop.f32.mrf.mxu0
        %v1401 = vpop.f32.mrf.mxu0
        %v1402 = vadd.f32 0.0, %v1401
        %v1403 = vpop.f32.mrf.mxu0
        %1404 = vmatprep.mubr.bf16.mxu0 0
        %1405 = vmatmul.mubr.bf16.gmra.mxu0 %v1351
        %v1406 = vpop.f32.mrf.mxu0
        %v1407 = vadd.f32 0.0, %v1406
        %v1408 = vpop.f32.mrf.mxu0
        %v1409 = vpop.f32.mrf.mxu0
        %v1410 = vadd.f32 0.0, %v1409
        %v1411 = vpop.f32.mrf.mxu0
        %1412 = vmatprep.mubr.bf16.mxu0 0
        %1413 = vmatmul.mubr.bf16.gmra.mxu0 %v1354
        %v1414 = vpop.f32.mrf.mxu0
        %v1415 = vadd.f32 0.0, %v1414
        %v1416 = vpop.f32.mrf.mxu0
        %v1417 = vpop.f32.mrf.mxu0
        %v1418 = vadd.f32 0.0, %v1417
        %v1419 = vpop.f32.mrf.mxu0
        %1420 = vdwg.mxu0
        %v1421 = vadd.f32 %v1315, %v1391
        %v1422 = vadd.f32 %v1316, %v1394
        %v1423 = vadd.f32 %v1317, %v1399
        %v1424 = vadd.f32 %v1318, %v1402
        %v1425 = vadd.f32 %v1319, %v1407
        %v1426 = vadd.f32 %v1320, %v1410
        %v1427 = vadd.f32 %v1321, %v1415
        %v1428 = vadd.f32 %v1322, %v1418
        %v1429 = vld [vmem:[#allocation2 + $0xc] sm:$0xff]
        %v1430 = vld [vmem:[#allocation2 + $0x14] sm:$0xff]
        %v1431 = vld [vmem:[#allocation2 + $0x1c] sm:$0xff]
        %v1432 = vld [vmem:[#allocation2 + $0x24] sm:$0xff]
        %v1433 = vld [vmem:[#allocation2 + $0x2c] sm:$0xff]
        %v1434 = vld [vmem:[#allocation2 + $0x34] sm:$0xff]
        %v1435 = vld [vmem:[#allocation2 + $0x3c] sm:$0xff]
        %v1436 = vld [vmem:[#allocation2 + $0x44] sm:$0xff]
        %v1437 = vpack.c.bf16 %v1430, %v1429
        %v1438 = vpack.c.bf16 %v1432, %v1431
        %v1439 = vpack.c.bf16 %v1434, %v1433
        %v1440 = vpack.c.bf16 %v1436, %v1435
        %s1441 = scalar_lea.vmem [#allocation9], 72
        %v1442 = vld [vmem:[%s1441] sm:$0xf]
        %v1443 = vld [vmem:[%s1441 + $0x4] sm:$0xf]
        %v1446 = vunpack.c.l.b16 %v1442
        %v1447 = vunpack.c.l.b16 %v1443
        %v1448 = vpack.c.b16 %v1447, %v1446
        %v1451 = vsel %vm481, %v1437, 0
        %v1454 = vsel %vm481, %v1438, 0
        %v1457 = vsel %vm481, %v1439, 0
        %v1460 = vsel %vm481, %v1440, 0
        %1462 = vmatprep.subr.bf16.mxu0 0
        %1463 = vmatpush1.bf16.msra.mxu0 0
        %1464 = vmatprep.subr.bf16.mxu0 0
        %1465 = vmatpush1.bf16.msra.mxu0 0
        %1466 = vmatprep.subr.bf16.mxu0 0
        %1467 = vmatpush1.bf16.msra.mxu0 0
        %1468 = vmatprep.subr.bf16.mxu0 0
        %1469 = vmatpush1.bf16.msra.mxu0 0
        %1470 = vmatprep.subr.bf16.mxu0 0
        %1471 = vmatpush1.bf16.msra.mxu0 0
        %1472 = vmatprep.subr.bf16.mxu0 0
        %1473 = vmatpush1.bf16.msra.mxu0 0
        %1474 = vmatprep.subr.bf16.mxu0 0
        %1475 = vmatpush1.bf16.msra.mxu0 0
        %1476 = vmatprep.subr.bf16.mxu0 0
        %1477 = vmatpush1.bf16.msra.mxu0 %v1448
        %1478 = vmatprep.subr.bf16.mxu0 0
        %1479 = vmatpush2.bf16.msra.mxu0 0
        %1480 = vmatprep.subr.bf16.mxu0 0
        %1481 = vmatpush2.bf16.msra.mxu0 0
        %1482 = vmatprep.subr.bf16.mxu0 0
        %1483 = vmatpush2.bf16.msra.mxu0 0
        %1484 = vmatprep.subr.bf16.mxu0 0
        %1485 = vmatpush2.bf16.msra.mxu0 0
        %1486 = vmatprep.subr.bf16.mxu0 0
        %1487 = vmatpush2.bf16.msra.mxu0 0
        %1488 = vmatprep.subr.bf16.mxu0 0
        %1489 = vmatpush2.bf16.msra.mxu0 0
        %1490 = vmatprep.subr.bf16.mxu0 0
        %1491 = vmatpush2.bf16.msra.mxu0 0
        %1492 = vmatprep.subr.bf16.mxu0 0
        %1493 = vmatpush2.bf16.msra.mxu0 0
        %1494 = vmatprep.mubr.bf16.mxu0 0
        %1495 = vmatmul.mubr.bf16.gmra.mxu0 %v1451
        %v1496 = vpop.f32.mrf.mxu0
        %v1497 = vadd.f32 0.0, %v1496
        %v1498 = vpop.f32.mrf.mxu0
        %v1499 = vpop.f32.mrf.mxu0
        %v1500 = vadd.f32 0.0, %v1499
        %v1501 = vpop.f32.mrf.mxu0
        %1502 = vmatprep.mubr.bf16.mxu0 0
        %1503 = vmatmul.mubr.bf16.gmra.mxu0 %v1454
        %v1504 = vpop.f32.mrf.mxu0
        %v1505 = vadd.f32 0.0, %v1504
        %v1506 = vpop.f32.mrf.mxu0
        %v1507 = vpop.f32.mrf.mxu0
        %v1508 = vadd.f32 0.0, %v1507
        %v1509 = vpop.f32.mrf.mxu0
        %1510 = vmatprep.mubr.bf16.mxu0 0
        %1511 = vmatmul.mubr.bf16.gmra.mxu0 %v1457
        %v1512 = vpop.f32.mrf.mxu0
        %v1513 = vadd.f32 0.0, %v1512
        %v1514 = vpop.f32.mrf.mxu0
        %v1515 = vpop.f32.mrf.mxu0
        %v1516 = vadd.f32 0.0, %v1515
        %v1517 = vpop.f32.mrf.mxu0
        %1518 = vmatprep.mubr.bf16.mxu0 0
        %1519 = vmatmul.mubr.bf16.gmra.mxu0 %v1460
        %v1520 = vpop.f32.mrf.mxu0
        %v1521 = vadd.f32 0.0, %v1520
        %v1522 = vpop.f32.mrf.mxu0
        %v1523 = vpop.f32.mrf.mxu0
        %v1524 = vadd.f32 0.0, %v1523
        %v1525 = vpop.f32.mrf.mxu0
        %1526 = vdwg.mxu0
        %v1527 = vadd.f32 %v1421, %v1497
        %v1528 = vadd.f32 %v1422, %v1500
        %v1529 = vadd.f32 %v1423, %v1505
        %v1530 = vadd.f32 %v1424, %v1508
        %v1531 = vadd.f32 %v1425, %v1513
        %v1532 = vadd.f32 %v1426, %v1516
        %v1533 = vadd.f32 %v1427, %v1521
        %v1534 = vadd.f32 %v1428, %v1524
        %v1535 = vld [vmem:[#allocation2 + $0xd] sm:$0xff]
        %v1536 = vld [vmem:[#allocation2 + $0x15] sm:$0xff]
        %v1537 = vld [vmem:[#allocation2 + $0x1d] sm:$0xff]
        %v1538 = vld [vmem:[#allocation2 + $0x25] sm:$0xff]
        %v1539 = vld [vmem:[#allocation2 + $0x2d] sm:$0xff]
        %v1540 = vld [vmem:[#allocation2 + $0x35] sm:$0xff]
        %v1541 = vld [vmem:[#allocation2 + $0x3d] sm:$0xff]
        %v1542 = vld [vmem:[#allocation2 + $0x45] sm:$0xff]
        %v1543 = vpack.c.bf16 %v1536, %v1535
        %v1544 = vpack.c.bf16 %v1538, %v1537
        %v1545 = vpack.c.bf16 %v1540, %v1539
        %v1546 = vpack.c.bf16 %v1542, %v1541
        %s1547 = scalar_lea.vmem [#allocation9], 80
        %v1548 = vld [vmem:[%s1547] sm:$0xf]
        %v1549 = vld [vmem:[%s1547 + $0x4] sm:$0xf]
        %v1552 = vunpack.c.l.b16 %v1548
        %v1553 = vunpack.c.l.b16 %v1549
        %v1554 = vpack.c.b16 %v1553, %v1552
        %v1557 = vsel %vm481, %v1543, 0
        %v1560 = vsel %vm481, %v1544, 0
        %v1563 = vsel %vm481, %v1545, 0
        %v1566 = vsel %vm481, %v1546, 0
        %1568 = vmatprep.subr.bf16.mxu0 0
        %1569 = vmatpush1.bf16.msra.mxu0 0
        %1570 = vmatprep.subr.bf16.mxu0 0
        %1571 = vmatpush1.bf16.msra.mxu0 0
        %1572 = vmatprep.subr.bf16.mxu0 0
        %1573 = vmatpush1.bf16.msra.mxu0 0
        %1574 = vmatprep.subr.bf16.mxu0 0
        %1575 = vmatpush1.bf16.msra.mxu0 0
        %1576 = vmatprep.subr.bf16.mxu0 0
        %1577 = vmatpush1.bf16.msra.mxu0 0
        %1578 = vmatprep.subr.bf16.mxu0 0
        %1579 = vmatpush1.bf16.msra.mxu0 0
        %1580 = vmatprep.subr.bf16.mxu0 0
        %1581 = vmatpush1.bf16.msra.mxu0 0
        %1582 = vmatprep.subr.bf16.mxu0 0
        %1583 = vmatpush1.bf16.msra.mxu0 %v1554
        %1584 = vmatprep.subr.bf16.mxu0 0
        %1585 = vmatpush2.bf16.msra.mxu0 0
        %1586 = vmatprep.subr.bf16.mxu0 0
        %1587 = vmatpush2.bf16.msra.mxu0 0
        %1588 = vmatprep.subr.bf16.mxu0 0
        %1589 = vmatpush2.bf16.msra.mxu0 0
        %1590 = vmatprep.subr.bf16.mxu0 0
        %1591 = vmatpush2.bf16.msra.mxu0 0
        %1592 = vmatprep.subr.bf16.mxu0 0
        %1593 = vmatpush2.bf16.msra.mxu0 0
        %1594 = vmatprep.subr.bf16.mxu0 0
        %1595 = vmatpush2.bf16.msra.mxu0 0
        %1596 = vmatprep.subr.bf16.mxu0 0
        %1597 = vmatpush2.bf16.msra.mxu0 0
        %1598 = vmatprep.subr.bf16.mxu0 0
        %1599 = vmatpush2.bf16.msra.mxu0 0
        %1600 = vmatprep.mubr.bf16.mxu0 0
        %1601 = vmatmul.mubr.bf16.gmra.mxu0 %v1557
        %v1602 = vpop.f32.mrf.mxu0
        %v1603 = vadd.f32 0.0, %v1602
        %v1604 = vpop.f32.mrf.mxu0
        %v1605 = vpop.f32.mrf.mxu0
        %v1606 = vadd.f32 0.0, %v1605
        %v1607 = vpop.f32.mrf.mxu0
        %1608 = vmatprep.mubr.bf16.mxu0 0
        %1609 = vmatmul.mubr.bf16.gmra.mxu0 %v1560
        %v1610 = vpop.f32.mrf.mxu0
        %v1611 = vadd.f32 0.0, %v1610
        %v1612 = vpop.f32.mrf.mxu0
        %v1613 = vpop.f32.mrf.mxu0
        %v1614 = vadd.f32 0.0, %v1613
        %v1615 = vpop.f32.mrf.mxu0
        %1616 = vmatprep.mubr.bf16.mxu0 0
        %1617 = vmatmul.mubr.bf16.gmra.mxu0 %v1563
        %v1618 = vpop.f32.mrf.mxu0
        %v1619 = vadd.f32 0.0, %v1618
        %v1620 = vpop.f32.mrf.mxu0
        %v1621 = vpop.f32.mrf.mxu0
        %v1622 = vadd.f32 0.0, %v1621
        %v1623 = vpop.f32.mrf.mxu0
        %1624 = vmatprep.mubr.bf16.mxu0 0
        %1625 = vmatmul.mubr.bf16.gmra.mxu0 %v1566
        %v1626 = vpop.f32.mrf.mxu0
        %v1627 = vadd.f32 0.0, %v1626
        %v1628 = vpop.f32.mrf.mxu0
        %v1629 = vpop.f32.mrf.mxu0
        %v1630 = vadd.f32 0.0, %v1629
        %v1631 = vpop.f32.mrf.mxu0
        %1632 = vdwg.mxu0
        %v1633 = vadd.f32 %v1527, %v1603
        %v1634 = vadd.f32 %v1528, %v1606
        %v1635 = vadd.f32 %v1529, %v1611
        %v1636 = vadd.f32 %v1530, %v1614
        %v1637 = vadd.f32 %v1531, %v1619
        %v1638 = vadd.f32 %v1532, %v1622
        %v1639 = vadd.f32 %v1533, %v1627
        %v1640 = vadd.f32 %v1534, %v1630
        %v1641 = vlaneseq
        %v1642 = vshrl.u32 %v1641, 7
        %v1643 = vsub.s32 0, %v1642
        %v1644 = vrot.slane %v479, %v1643
        %v1645 = vadd.f32 %v1633, %v1644
        %v1646 = vadd.f32 %v1634, %v1644
        %v1647 = vadd.f32 %v1635, %v1644
        %v1648 = vadd.f32 %v1636, %v1644
        %v1649 = vadd.f32 %v1637, %v1644
        %v1650 = vadd.f32 %v1638, %v1644
        %v1651 = vadd.f32 %v1639, %v1644
        %v1652 = vadd.f32 %v1640, %v1644
        %vm1653 = vcmp.gt.f32.partialorder %v1645, 0.0
        %vm1654 = vcmp.gt.f32.partialorder %v1646, 0.0
        %vm1655 = vcmp.gt.f32.partialorder %v1647, 0.0
        %vm1656 = vcmp.gt.f32.partialorder %v1648, 0.0
        %vm1657 = vcmp.gt.f32.partialorder %v1649, 0.0
        %vm1658 = vcmp.gt.f32.partialorder %v1650, 0.0
        %vm1659 = vcmp.gt.f32.partialorder %v1651, 0.0
        %vm1660 = vcmp.gt.f32.partialorder %v1652, 0.0
        %v1661 = vlaneseq
        %v1662 = vshrl.u32 %v1661, 7
        %v1663 = vsub.s32 0, %v1662
        %v1664 = vrot.slane %v480, %v1663
        %v1665 = vmul.f32 %v1664, %v1645
        %v1666 = vmul.f32 %v1664, %v1646
        %v1667 = vmul.f32 %v1664, %v1647
        %v1668 = vmul.f32 %v1664, %v1648
        %v1669 = vmul.f32 %v1664, %v1649
        %v1670 = vmul.f32 %v1664, %v1650
        %v1671 = vmul.f32 %v1664, %v1651
        %v1672 = vmul.f32 %v1664, %v1652
        %v1673 = vsel %vm1653, %v1645, %v1665
        %v1674 = vsel %vm1654, %v1646, %v1666
        %v1675 = vsel %vm1655, %v1647, %v1667
        %v1676 = vsel %vm1656, %v1648, %v1668
        %v1677 = vsel %vm1657, %v1649, %v1669
        %v1678 = vsel %vm1658, %v1650, %v1670
        %v1679 = vsel %vm1659, %v1651, %v1671
        %v1680 = vsel %vm1660, %v1652, %v1672
        %1681 = vxpose.xlu0.b32.start [1/16] %v1673, 128
        %1682 = vxpose.xlu0.b32.cont [2/16] %v1674, 128
        %1683 = vxpose.xlu0.b32.cont [3/16] %v1675, 128
        %1684 = vxpose.xlu0.b32.cont [4/16] %v1676, 128
        %1685 = vxpose.xlu0.b32.cont [5/16] %v1677, 128
        %1686 = vxpose.xlu0.b32.cont [6/16] %v1678, 128
        %1687 = vxpose.xlu0.b32.cont [7/16] %v1679, 128
        %1688 = vxpose.xlu0.b32.cont [8/16] %v1680, 128
        %1689 = vxpose.xlu0.b32.cont [9/16] 0.0, 128
        %1690 = vxpose.xlu0.b32.cont [10/16] 0.0, 128
        %1691 = vxpose.xlu0.b32.cont [11/16] 0.0, 128
        %1692 = vxpose.xlu0.b32.cont [12/16] 0.0, 128
        %1693 = vxpose.xlu0.b32.cont [13/16] 0.0, 128
        %1694 = vxpose.xlu0.b32.cont [14/16] 0.0, 128
        %1695 = vxpose.xlu0.b32.cont [15/16] 0.0, 128
        %1696 = vxpose.xlu0.b32.end [16/16] 0.0, 128
        %v1697 = vpop.trf.xlu0
        %v1698 = vpop.trf.xlu0
        %v1699 = vpop.trf.xlu0
        %v1700 = vpop.trf.xlu0
        %v1701 = vpop.trf.xlu0
        %v1702 = vpop.trf.xlu0
        %v1703 = vpop.trf.xlu0
        %v1704 = vpop.trf.xlu0
        %v1705 = vpop.trf.xlu0
        %v1706 = vpop.trf.xlu0
        %v1707 = vpop.trf.xlu0
        %v1708 = vpop.trf.xlu0
        %v1709 = vpop.trf.xlu0
        %v1710 = vpop.trf.xlu0
        %v1711 = vpop.trf.xlu0
        %v1712 = vpop.trf.xlu0
        %vm1713 = vcmask 523264
        %1714 = vst.msk [vmem:[%s412] sm:$0xff] %vm1713, %v1697
        %1715 = vst.msk [vmem:[%s412 + $0x8] sm:$0xff] %vm1713, %v1698
        %v1716 = vld [vmem:[%s5 + $0x2] sm:$0x1]
        %v1717 = vld [vmem:[%s5 + $0x3] sm:$0x1]
        %1718 = vst.msk [vmem:[#allocation3] sm:$0xff] %vm481, 0.0
        %1719 = vst.msk [vmem:[#allocation3 + $0x48] sm:$0xff] %vm481, 0.0
        %1720 = vst.msk [vmem:[#allocation3 + $0x8] sm:$0xff] %vm481, %v1673
        %1721 = vst.msk [vmem:[#allocation3 + $0x10] sm:$0xff] %vm481, %v1674
        %1722 = vst.msk [vmem:[#allocation3 + $0x18] sm:$0xff] %vm481, %v1675
        %1723 = vst.msk [vmem:[#allocation3 + $0x20] sm:$0xff] %vm481, %v1676
        %1724 = vst.msk [vmem:[#allocation3 + $0x28] sm:$0xff] %vm481, %v1677
        %1725 = vst.msk [vmem:[#allocation3 + $0x30] sm:$0xff] %vm481, %v1678
        %1726 = vst.msk [vmem:[#allocation3 + $0x38] sm:$0xff] %vm481, %v1679
        %1727 = vst.msk [vmem:[#allocation3 + $0x40] sm:$0xff] %vm481, %v1680
        %s1728 = scalar_lea.vmem [#allocation3], 3
        %v1729 = vld [vmem:[%s1728] ss:$2 sm:$0xff]
        %s1730 = scalar_lea.vmem [#allocation3], 19
        %v1731 = vld [vmem:[%s1730] ss:$2 sm:$0xff]
        %s1732 = scalar_lea.vmem [#allocation3], 35
        %v1733 = vld [vmem:[%s1732] ss:$2 sm:$0xff]
        %s1734 = scalar_lea.vmem [#allocation3], 51
        %v1735 = vld [vmem:[%s1734] ss:$2 sm:$0xff]
        %v1736 = vpack.c.bf16 %v1731, %v1729
        %v1737 = vpack.c.bf16 %v1735, %v1733
        %v1738 = vld [vmem:[#allocation11] sm:$0xf]
        %v1739 = vld [vmem:[#allocation11 + $0x4] sm:$0xf]
        %s1740 = scalar_lea.vmem [#allocation3], 4
        %v1741 = vld [vmem:[%s1740] ss:$2 sm:$0xff]
        %s1742 = scalar_lea.vmem [#allocation3], 20
        %v1743 = vld [vmem:[%s1742] ss:$2 sm:$0xff]
        %s1744 = scalar_lea.vmem [#allocation3], 36
        %v1745 = vld [vmem:[%s1744] ss:$2 sm:$0xff]
        %s1746 = scalar_lea.vmem [#allocation3], 52
        %v1747 = vld [vmem:[%s1746] ss:$2 sm:$0xff]
        %v1748 = vpack.c.bf16 %v1743, %v1741
        %v1749 = vpack.c.bf16 %v1747, %v1745
        %s1750 = scalar_lea.vmem [#allocation11], 8
        %v1751 = vld [vmem:[%s1750] sm:$0xf]
        %v1752 = vld [vmem:[%s1750 + $0x4] sm:$0xf]
        %v1755 = vunpack.c.l.b16 %v1751
        %v1756 = vunpack.c.l.b16 %v1752
        %v1757 = vpack.c.b16 %v1756, %v1755
        %v1760 = vsel %vm481, %v1748, 0
        %v1763 = vsel %vm481, %v1749, 0
        %1765 = vmatprep.subr.bf16.mxu0 0
        %1766 = vmatpush1.bf16.msra.mxu0 0
        %1767 = vmatprep.subr.bf16.mxu0 0
        %1768 = vmatpush1.bf16.msra.mxu0 0
        %1769 = vmatprep.subr.bf16.mxu0 0
        %1770 = vmatpush1.bf16.msra.mxu0 0
        %1771 = vmatprep.subr.bf16.mxu0 0
        %1772 = vmatpush1.bf16.msra.mxu0 0
        %1773 = vmatprep.subr.bf16.mxu0 0
        %1774 = vmatpush1.bf16.msra.mxu0 0
        %1775 = vmatprep.subr.bf16.mxu0 0
        %1776 = vmatpush1.bf16.msra.mxu0 0
        %1777 = vmatprep.subr.bf16.mxu0 0
        %1778 = vmatpush1.bf16.msra.mxu0 0
        %1779 = vmatprep.subr.bf16.mxu0 0
        %1780 = vmatpush1.bf16.msra.mxu0 %v1757
        %1781 = vmatprep.subr.bf16.mxu0 0
        %1782 = vmatpush2.bf16.msra.mxu0 0
        %1783 = vmatprep.subr.bf16.mxu0 0
        %1784 = vmatpush2.bf16.msra.mxu0 0
        %1785 = vmatprep.subr.bf16.mxu0 0
        %1786 = vmatpush2.bf16.msra.mxu0 0
        %1787 = vmatprep.subr.bf16.mxu0 0
        %1788 = vmatpush2.bf16.msra.mxu0 0
        %1789 = vmatprep.subr.bf16.mxu0 0
        %1790 = vmatpush2.bf16.msra.mxu0 0
        %1791 = vmatprep.subr.bf16.mxu0 0
        %1792 = vmatpush2.bf16.msra.mxu0 0
        %1793 = vmatprep.subr.bf16.mxu0 0
        %1794 = vmatpush2.bf16.msra.mxu0 0
        %1795 = vmatprep.subr.bf16.mxu0 0
        %1796 = vmatpush2.bf16.msra.mxu0 0
        %1797 = vmatprep.mubr.bf16.mxu0 0
        %1798 = vmatmul.mubr.bf16.gmra.mxu0 %v1760
        %v1799 = vpop.f32.mrf.mxu0
        %v1800 = vadd.f32 0.0, %v1799
        %v1801 = vpop.f32.mrf.mxu0
        %v1802 = vpop.f32.mrf.mxu0
        %v1803 = vadd.f32 0.0, %v1802
        %v1804 = vpop.f32.mrf.mxu0
        %1805 = vmatprep.mubr.bf16.mxu0 0
        %1806 = vmatmul.mubr.bf16.gmra.mxu0 %v1763
        %v1807 = vpop.f32.mrf.mxu0
        %v1808 = vadd.f32 0.0, %v1807
        %v1809 = vpop.f32.mrf.mxu0
        %v1810 = vpop.f32.mrf.mxu0
        %v1811 = vadd.f32 0.0, %v1810
        %v1812 = vpop.f32.mrf.mxu0
        %1813 = vdwg.mxu0
        %v1816 = vunpack.c.l.b16 %v1738
        %v1817 = vunpack.c.l.b16 %v1739
        %v1818 = vpack.c.b16 %v1817, %v1816
        %v1821 = vsel %vm481, %v1736, 0
        %v1824 = vsel %vm481, %v1737, 0
        %1826 = vmatprep.subr.bf16.mxu0 0
        %1827 = vmatpush1.bf16.msra.mxu0 0
        %1828 = vmatprep.subr.bf16.mxu0 0
        %1829 = vmatpush1.bf16.msra.mxu0 0
        %1830 = vmatprep.subr.bf16.mxu0 0
        %1831 = vmatpush1.bf16.msra.mxu0 0
        %1832 = vmatprep.subr.bf16.mxu0 0
        %1833 = vmatpush1.bf16.msra.mxu0 0
        %1834 = vmatprep.subr.bf16.mxu0 0
        %1835 = vmatpush1.bf16.msra.mxu0 0
        %1836 = vmatprep.subr.bf16.mxu0 0
        %1837 = vmatpush1.bf16.msra.mxu0 0
        %1838 = vmatprep.subr.bf16.mxu0 0
        %1839 = vmatpush1.bf16.msra.mxu0 0
        %1840 = vmatprep.subr.bf16.mxu0 0
        %1841 = vmatpush1.bf16.msra.mxu0 %v1818
        %1842 = vmatprep.subr.bf16.mxu0 0
        %1843 = vmatpush2.bf16.msra.mxu0 0
        %1844 = vmatprep.subr.bf16.mxu0 0
        %1845 = vmatpush2.bf16.msra.mxu0 0
        %1846 = vmatprep.subr.bf16.mxu0 0
        %1847 = vmatpush2.bf16.msra.mxu0 0
        %1848 = vmatprep.subr.bf16.mxu0 0
        %1849 = vmatpush2.bf16.msra.mxu0 0
        %1850 = vmatprep.subr.bf16.mxu0 0
        %1851 = vmatpush2.bf16.msra.mxu0 0
        %1852 = vmatprep.subr.bf16.mxu0 0
        %1853 = vmatpush2.bf16.msra.mxu0 0
        %1854 = vmatprep.subr.bf16.mxu0 0
        %1855 = vmatpush2.bf16.msra.mxu0 0
        %1856 = vmatprep.subr.bf16.mxu0 0
        %1857 = vmatpush2.bf16.msra.mxu0 0
        %1858 = vmatprep.mubr.bf16.mxu0 0
        %1859 = vmatmul.mubr.bf16.gmra.mxu0 %v1821
        %v1860 = vpop.f32.mrf.mxu0
        %v1861 = vadd.f32 %v1800, %v1860
        %v1862 = vpop.f32.mrf.mxu0
        %v1863 = vpop.f32.mrf.mxu0
        %v1864 = vadd.f32 %v1803, %v1863
        %v1865 = vpop.f32.mrf.mxu0
        %1866 = vmatprep.mubr.bf16.mxu0 0
        %1867 = vmatmul.mubr.bf16.gmra.mxu0 %v1824
        %v1868 = vpop.f32.mrf.mxu0
        %v1869 = vadd.f32 %v1808, %v1868
        %v1870 = vpop.f32.mrf.mxu0
        %v1871 = vpop.f32.mrf.mxu0
        %v1872 = vadd.f32 %v1811, %v1871
        %v1873 = vpop.f32.mrf.mxu0
        %1874 = vdwg.mxu0
        %s1875 = scalar_lea.vmem [#allocation3], 5
        %v1876 = vld [vmem:[%s1875] ss:$2 sm:$0xff]
        %s1877 = scalar_lea.vmem [#allocation3], 21
        %v1878 = vld [vmem:[%s1877] ss:$2 sm:$0xff]
        %s1879 = scalar_lea.vmem [#allocation3], 37
        %v1880 = vld [vmem:[%s1879] ss:$2 sm:$0xff]
        %s1881 = scalar_lea.vmem [#allocation3], 53
        %v1882 = vld [vmem:[%s1881] ss:$2 sm:$0xff]
        %v1883 = vpack.c.bf16 %v1878, %v1876
        %v1884 = vpack.c.bf16 %v1882, %v1880
        %s1885 = scalar_lea.vmem [#allocation11], 16
        %v1886 = vld [vmem:[%s1885] sm:$0xf]
        %v1887 = vld [vmem:[%s1885 + $0x4] sm:$0xf]
        %v1890 = vunpack.c.l.b16 %v1886
        %v1891 = vunpack.c.l.b16 %v1887
        %v1892 = vpack.c.b16 %v1891, %v1890
        %v1895 = vsel %vm481, %v1883, 0
        %v1898 = vsel %vm481, %v1884, 0
        %1900 = vmatprep.subr.bf16.mxu0 0
        %1901 = vmatpush1.bf16.msra.mxu0 0
        %1902 = vmatprep.subr.bf16.mxu0 0
        %1903 = vmatpush1.bf16.msra.mxu0 0
        %1904 = vmatprep.subr.bf16.mxu0 0
        %1905 = vmatpush1.bf16.msra.mxu0 0
        %1906 = vmatprep.subr.bf16.mxu0 0
        %1907 = vmatpush1.bf16.msra.mxu0 0
        %1908 = vmatprep.subr.bf16.mxu0 0
        %1909 = vmatpush1.bf16.msra.mxu0 0
        %1910 = vmatprep.subr.bf16.mxu0 0
        %1911 = vmatpush1.bf16.msra.mxu0 0
        %1912 = vmatprep.subr.bf16.mxu0 0
        %1913 = vmatpush1.bf16.msra.mxu0 0
        %1914 = vmatprep.subr.bf16.mxu0 0
        %1915 = vmatpush1.bf16.msra.mxu0 %v1892
        %1916 = vmatprep.subr.bf16.mxu0 0
        %1917 = vmatpush2.bf16.msra.mxu0 0
        %1918 = vmatprep.subr.bf16.mxu0 0
        %1919 = vmatpush2.bf16.msra.mxu0 0
        %1920 = vmatprep.subr.bf16.mxu0 0
        %1921 = vmatpush2.bf16.msra.mxu0 0
        %1922 = vmatprep.subr.bf16.mxu0 0
        %1923 = vmatpush2.bf16.msra.mxu0 0
        %1924 = vmatprep.subr.bf16.mxu0 0
        %1925 = vmatpush2.bf16.msra.mxu0 0
        %1926 = vmatprep.subr.bf16.mxu0 0
        %1927 = vmatpush2.bf16.msra.mxu0 0
        %1928 = vmatprep.subr.bf16.mxu0 0
        %1929 = vmatpush2.bf16.msra.mxu0 0
        %1930 = vmatprep.subr.bf16.mxu0 0
        %1931 = vmatpush2.bf16.msra.mxu0 0
        %1932 = vmatprep.mubr.bf16.mxu0 0
        %1933 = vmatmul.mubr.bf16.gmra.mxu0 %v1895
        %v1934 = vpop.f32.mrf.mxu0
        %v1935 = vadd.f32 0.0, %v1934
        %v1936 = vpop.f32.mrf.mxu0
        %v1937 = vpop.f32.mrf.mxu0
        %v1938 = vadd.f32 0.0, %v1937
        %v1939 = vpop.f32.mrf.mxu0
        %1940 = vmatprep.mubr.bf16.mxu0 0
        %1941 = vmatmul.mubr.bf16.gmra.mxu0 %v1898
        %v1942 = vpop.f32.mrf.mxu0
        %v1943 = vadd.f32 0.0, %v1942
        %v1944 = vpop.f32.mrf.mxu0
        %v1945 = vpop.f32.mrf.mxu0
        %v1946 = vadd.f32 0.0, %v1945
        %v1947 = vpop.f32.mrf.mxu0
        %1948 = vdwg.mxu0
        %v1949 = vadd.f32 %v1861, %v1935
        %v1950 = vadd.f32 %v1864, %v1938
        %v1951 = vadd.f32 %v1869, %v1943
        %v1952 = vadd.f32 %v1872, %v1946
        %s1953 = scalar_lea.vmem [#allocation3], 6
        %v1954 = vld [vmem:[%s1953] ss:$2 sm:$0xff]
        %s1955 = scalar_lea.vmem [#allocation3], 22
        %v1956 = vld [vmem:[%s1955] ss:$2 sm:$0xff]
        %s1957 = scalar_lea.vmem [#allocation3], 38
        %v1958 = vld [vmem:[%s1957] ss:$2 sm:$0xff]
        %s1959 = scalar_lea.vmem [#allocation3], 54
        %v1960 = vld [vmem:[%s1959] ss:$2 sm:$0xff]
        %v1961 = vpack.c.bf16 %v1956, %v1954
        %v1962 = vpack.c.bf16 %v1960, %v1958
        %s1963 = scalar_lea.vmem [#allocation11], 24
        %v1964 = vld [vmem:[%s1963] sm:$0xf]
        %v1965 = vld [vmem:[%s1963 + $0x4] sm:$0xf]
        %v1968 = vunpack.c.l.b16 %v1964
        %v1969 = vunpack.c.l.b16 %v1965
        %v1970 = vpack.c.b16 %v1969, %v1968
        %v1973 = vsel %vm481, %v1961, 0
        %v1976 = vsel %vm481, %v1962, 0
        %1978 = vmatprep.subr.bf16.mxu0 0
        %1979 = vmatpush1.bf16.msra.mxu0 0
        %1980 = vmatprep.subr.bf16.mxu0 0
        %1981 = vmatpush1.bf16.msra.mxu0 0
        %1982 = vmatprep.subr.bf16.mxu0 0
        %1983 = vmatpush1.bf16.msra.mxu0 0
        %1984 = vmatprep.subr.bf16.mxu0 0
        %1985 = vmatpush1.bf16.msra.mxu0 0
        %1986 = vmatprep.subr.bf16.mxu0 0
        %1987 = vmatpush1.bf16.msra.mxu0 0
        %1988 = vmatprep.subr.bf16.mxu0 0
        %1989 = vmatpush1.bf16.msra.mxu0 0
        %1990 = vmatprep.subr.bf16.mxu0 0
        %1991 = vmatpush1.bf16.msra.mxu0 0
        %1992 = vmatprep.subr.bf16.mxu0 0
        %1993 = vmatpush1.bf16.msra.mxu0 %v1970
        %1994 = vmatprep.subr.bf16.mxu0 0
        %1995 = vmatpush2.bf16.msra.mxu0 0
        %1996 = vmatprep.subr.bf16.mxu0 0
        %1997 = vmatpush2.bf16.msra.mxu0 0
        %1998 = vmatprep.subr.bf16.mxu0 0
        %1999 = vmatpush2.bf16.msra.mxu0 0
        %2000 = vmatprep.subr.bf16.mxu0 0
        %2001 = vmatpush2.bf16.msra.mxu0 0
        %2002 = vmatprep.subr.bf16.mxu0 0
        %2003 = vmatpush2.bf16.msra.mxu0 0
        %2004 = vmatprep.subr.bf16.mxu0 0
        %2005 = vmatpush2.bf16.msra.mxu0 0
        %2006 = vmatprep.subr.bf16.mxu0 0
        %2007 = vmatpush2.bf16.msra.mxu0 0
        %2008 = vmatprep.subr.bf16.mxu0 0
        %2009 = vmatpush2.bf16.msra.mxu0 0
        %2010 = vmatprep.mubr.bf16.mxu0 0
        %2011 = vmatmul.mubr.bf16.gmra.mxu0 %v1973
        %v2012 = vpop.f32.mrf.mxu0
        %v2013 = vadd.f32 0.0, %v2012
        %v2014 = vpop.f32.mrf.mxu0
        %v2015 = vpop.f32.mrf.mxu0
        %v2016 = vadd.f32 0.0, %v2015
        %v2017 = vpop.f32.mrf.mxu0
        %2018 = vmatprep.mubr.bf16.mxu0 0
        %2019 = vmatmul.mubr.bf16.gmra.mxu0 %v1976
        %v2020 = vpop.f32.mrf.mxu0
        %v2021 = vadd.f32 0.0, %v2020
        %v2022 = vpop.f32.mrf.mxu0
        %v2023 = vpop.f32.mrf.mxu0
        %v2024 = vadd.f32 0.0, %v2023
        %v2025 = vpop.f32.mrf.mxu0
        %2026 = vdwg.mxu0
        %v2027 = vadd.f32 %v1949, %v2013
        %v2028 = vadd.f32 %v1950, %v2016
        %v2029 = vadd.f32 %v1951, %v2021
        %v2030 = vadd.f32 %v1952, %v2024
        %s2031 = scalar_lea.vmem [#allocation3], 7
        %v2032 = vld [vmem:[%s2031] ss:$2 sm:$0xff]
        %s2033 = scalar_lea.vmem [#allocation3], 23
        %v2034 = vld [vmem:[%s2033] ss:$2 sm:$0xff]
        %s2035 = scalar_lea.vmem [#allocation3], 39
        %v2036 = vld [vmem:[%s2035] ss:$2 sm:$0xff]
        %s2037 = scalar_lea.vmem [#allocation3], 55
        %v2038 = vld [vmem:[%s2037] ss:$2 sm:$0xff]
        %v2039 = vpack.c.bf16 %v2034, %v2032
        %v2040 = vpack.c.bf16 %v2038, %v2036
        %s2041 = scalar_lea.vmem [#allocation11], 32
        %v2042 = vld [vmem:[%s2041] sm:$0xf]
        %v2043 = vld [vmem:[%s2041 + $0x4] sm:$0xf]
        %v2046 = vunpack.c.l.b16 %v2042
        %v2047 = vunpack.c.l.b16 %v2043
        %v2048 = vpack.c.b16 %v2047, %v2046
        %v2051 = vsel %vm481, %v2039, 0
        %v2054 = vsel %vm481, %v2040, 0
        %2056 = vmatprep.subr.bf16.mxu0 0
        %2057 = vmatpush1.bf16.msra.mxu0 0
        %2058 = vmatprep.subr.bf16.mxu0 0
        %2059 = vmatpush1.bf16.msra.mxu0 0
        %2060 = vmatprep.subr.bf16.mxu0 0
        %2061 = vmatpush1.bf16.msra.mxu0 0
        %2062 = vmatprep.subr.bf16.mxu0 0
        %2063 = vmatpush1.bf16.msra.mxu0 0
        %2064 = vmatprep.subr.bf16.mxu0 0
        %2065 = vmatpush1.bf16.msra.mxu0 0
        %2066 = vmatprep.subr.bf16.mxu0 0
        %2067 = vmatpush1.bf16.msra.mxu0 0
        %2068 = vmatprep.subr.bf16.mxu0 0
        %2069 = vmatpush1.bf16.msra.mxu0 0
        %2070 = vmatprep.subr.bf16.mxu0 0
        %2071 = vmatpush1.bf16.msra.mxu0 %v2048
        %2072 = vmatprep.subr.bf16.mxu0 0
        %2073 = vmatpush2.bf16.msra.mxu0 0
        %2074 = vmatprep.subr.bf16.mxu0 0
        %2075 = vmatpush2.bf16.msra.mxu0 0
        %2076 = vmatprep.subr.bf16.mxu0 0
        %2077 = vmatpush2.bf16.msra.mxu0 0
        %2078 = vmatprep.subr.bf16.mxu0 0
        %2079 = vmatpush2.bf16.msra.mxu0 0
        %2080 = vmatprep.subr.bf16.mxu0 0
        %2081 = vmatpush2.bf16.msra.mxu0 0
        %2082 = vmatprep.subr.bf16.mxu0 0
        %2083 = vmatpush2.bf16.msra.mxu0 0
        %2084 = vmatprep.subr.bf16.mxu0 0
        %2085 = vmatpush2.bf16.msra.mxu0 0
        %2086 = vmatprep.subr.bf16.mxu0 0
        %2087 = vmatpush2.bf16.msra.mxu0 0
        %2088 = vmatprep.mubr.bf16.mxu0 0
        %2089 = vmatmul.mubr.bf16.gmra.mxu0 %v2051
        %v2090 = vpop.f32.mrf.mxu0
        %v2091 = vadd.f32 0.0, %v2090
        %v2092 = vpop.f32.mrf.mxu0
        %v2093 = vpop.f32.mrf.mxu0
        %v2094 = vadd.f32 0.0, %v2093
        %v2095 = vpop.f32.mrf.mxu0
        %2096 = vmatprep.mubr.bf16.mxu0 0
        %2097 = vmatmul.mubr.bf16.gmra.mxu0 %v2054
        %v2098 = vpop.f32.mrf.mxu0
        %v2099 = vadd.f32 0.0, %v2098
        %v2100 = vpop.f32.mrf.mxu0
        %v2101 = vpop.f32.mrf.mxu0
        %v2102 = vadd.f32 0.0, %v2101
        %v2103 = vpop.f32.mrf.mxu0
        %2104 = vdwg.mxu0
        %v2105 = vadd.f32 %v2027, %v2091
        %v2106 = vadd.f32 %v2028, %v2094
        %v2107 = vadd.f32 %v2029, %v2099
        %v2108 = vadd.f32 %v2030, %v2102
        %s2109 = scalar_lea.vmem [#allocation3], 8
        %v2110 = vld [vmem:[%s2109] ss:$2 sm:$0xff]
        %s2111 = scalar_lea.vmem [#allocation3], 24
        %v2112 = vld [vmem:[%s2111] ss:$2 sm:$0xff]
        %s2113 = scalar_lea.vmem [#allocation3], 40
        %v2114 = vld [vmem:[%s2113] ss:$2 sm:$0xff]
        %s2115 = scalar_lea.vmem [#allocation3], 56
        %v2116 = vld [vmem:[%s2115] ss:$2 sm:$0xff]
        %v2117 = vpack.c.bf16 %v2112, %v2110
        %v2118 = vpack.c.bf16 %v2116, %v2114
        %s2119 = scalar_lea.vmem [#allocation11], 40
        %v2120 = vld [vmem:[%s2119] sm:$0xf]
        %v2121 = vld [vmem:[%s2119 + $0x4] sm:$0xf]
        %v2124 = vunpack.c.l.b16 %v2120
        %v2125 = vunpack.c.l.b16 %v2121
        %v2126 = vpack.c.b16 %v2125, %v2124
        %v2129 = vsel %vm481, %v2117, 0
        %v2132 = vsel %vm481, %v2118, 0
        %2134 = vmatprep.subr.bf16.mxu0 0
        %2135 = vmatpush1.bf16.msra.mxu0 0
        %2136 = vmatprep.subr.bf16.mxu0 0
        %2137 = vmatpush1.bf16.msra.mxu0 0
        %2138 = vmatprep.subr.bf16.mxu0 0
        %2139 = vmatpush1.bf16.msra.mxu0 0
        %2140 = vmatprep.subr.bf16.mxu0 0
        %2141 = vmatpush1.bf16.msra.mxu0 0
        %2142 = vmatprep.subr.bf16.mxu0 0
        %2143 = vmatpush1.bf16.msra.mxu0 0
        %2144 = vmatprep.subr.bf16.mxu0 0
        %2145 = vmatpush1.bf16.msra.mxu0 0
        %2146 = vmatprep.subr.bf16.mxu0 0
        %2147 = vmatpush1.bf16.msra.mxu0 0
        %2148 = vmatprep.subr.bf16.mxu0 0
        %2149 = vmatpush1.bf16.msra.mxu0 %v2126
        %2150 = vmatprep.subr.bf16.mxu0 0
        %2151 = vmatpush2.bf16.msra.mxu0 0
        %2152 = vmatprep.subr.bf16.mxu0 0
        %2153 = vmatpush2.bf16.msra.mxu0 0
        %2154 = vmatprep.subr.bf16.mxu0 0
        %2155 = vmatpush2.bf16.msra.mxu0 0
        %2156 = vmatprep.subr.bf16.mxu0 0
        %2157 = vmatpush2.bf16.msra.mxu0 0
        %2158 = vmatprep.subr.bf16.mxu0 0
        %2159 = vmatpush2.bf16.msra.mxu0 0
        %2160 = vmatprep.subr.bf16.mxu0 0
        %2161 = vmatpush2.bf16.msra.mxu0 0
        %2162 = vmatprep.subr.bf16.mxu0 0
        %2163 = vmatpush2.bf16.msra.mxu0 0
        %2164 = vmatprep.subr.bf16.mxu0 0
        %2165 = vmatpush2.bf16.msra.mxu0 0
        %2166 = vmatprep.mubr.bf16.mxu0 0
        %2167 = vmatmul.mubr.bf16.gmra.mxu0 %v2129
        %v2168 = vpop.f32.mrf.mxu0
        %v2169 = vadd.f32 0.0, %v2168
        %v2170 = vpop.f32.mrf.mxu0
        %v2171 = vpop.f32.mrf.mxu0
        %v2172 = vadd.f32 0.0, %v2171
        %v2173 = vpop.f32.mrf.mxu0
        %2174 = vmatprep.mubr.bf16.mxu0 0
        %2175 = vmatmul.mubr.bf16.gmra.mxu0 %v2132
        %v2176 = vpop.f32.mrf.mxu0
        %v2177 = vadd.f32 0.0, %v2176
        %v2178 = vpop.f32.mrf.mxu0
        %v2179 = vpop.f32.mrf.mxu0
        %v2180 = vadd.f32 0.0, %v2179
        %v2181 = vpop.f32.mrf.mxu0
        %2182 = vdwg.mxu0
        %v2183 = vadd.f32 %v2105, %v2169
        %v2184 = vadd.f32 %v2106, %v2172
        %v2185 = vadd.f32 %v2107, %v2177
        %v2186 = vadd.f32 %v2108, %v2180
        %s2187 = scalar_lea.vmem [#allocation3], 9
        %v2188 = vld [vmem:[%s2187] ss:$2 sm:$0xff]
        %s2189 = scalar_lea.vmem [#allocation3], 25
        %v2190 = vld [vmem:[%s2189] ss:$2 sm:$0xff]
        %s2191 = scalar_lea.vmem [#allocation3], 41
        %v2192 = vld [vmem:[%s2191] ss:$2 sm:$0xff]
        %s2193 = scalar_lea.vmem [#allocation3], 57
        %v2194 = vld [vmem:[%s2193] ss:$2 sm:$0xff]
        %v2195 = vpack.c.bf16 %v2190, %v2188
        %v2196 = vpack.c.bf16 %v2194, %v2192
        %s2197 = scalar_lea.vmem [#allocation11], 48
        %v2198 = vld [vmem:[%s2197] sm:$0xf]
        %v2199 = vld [vmem:[%s2197 + $0x4] sm:$0xf]
        %v2202 = vunpack.c.l.b16 %v2198
        %v2203 = vunpack.c.l.b16 %v2199
        %v2204 = vpack.c.b16 %v2203, %v2202
        %v2207 = vsel %vm481, %v2195, 0
        %v2210 = vsel %vm481, %v2196, 0
        %2212 = vmatprep.subr.bf16.mxu0 0
        %2213 = vmatpush1.bf16.msra.mxu0 0
        %2214 = vmatprep.subr.bf16.mxu0 0
        %2215 = vmatpush1.bf16.msra.mxu0 0
        %2216 = vmatprep.subr.bf16.mxu0 0
        %2217 = vmatpush1.bf16.msra.mxu0 0
        %2218 = vmatprep.subr.bf16.mxu0 0
        %2219 = vmatpush1.bf16.msra.mxu0 0
        %2220 = vmatprep.subr.bf16.mxu0 0
        %2221 = vmatpush1.bf16.msra.mxu0 0
        %2222 = vmatprep.subr.bf16.mxu0 0
        %2223 = vmatpush1.bf16.msra.mxu0 0
        %2224 = vmatprep.subr.bf16.mxu0 0
        %2225 = vmatpush1.bf16.msra.mxu0 0
        %2226 = vmatprep.subr.bf16.mxu0 0
        %2227 = vmatpush1.bf16.msra.mxu0 %v2204
        %2228 = vmatprep.subr.bf16.mxu0 0
        %2229 = vmatpush2.bf16.msra.mxu0 0
        %2230 = vmatprep.subr.bf16.mxu0 0
        %2231 = vmatpush2.bf16.msra.mxu0 0
        %2232 = vmatprep.subr.bf16.mxu0 0
        %2233 = vmatpush2.bf16.msra.mxu0 0
        %2234 = vmatprep.subr.bf16.mxu0 0
        %2235 = vmatpush2.bf16.msra.mxu0 0
        %2236 = vmatprep.subr.bf16.mxu0 0
        %2237 = vmatpush2.bf16.msra.mxu0 0
        %2238 = vmatprep.subr.bf16.mxu0 0
        %2239 = vmatpush2.bf16.msra.mxu0 0
        %2240 = vmatprep.subr.bf16.mxu0 0
        %2241 = vmatpush2.bf16.msra.mxu0 0
        %2242 = vmatprep.subr.bf16.mxu0 0
        %2243 = vmatpush2.bf16.msra.mxu0 0
        %2244 = vmatprep.mubr.bf16.mxu0 0
        %2245 = vmatmul.mubr.bf16.gmra.mxu0 %v2207
        %v2246 = vpop.f32.mrf.mxu0
        %v2247 = vadd.f32 0.0, %v2246
        %v2248 = vpop.f32.mrf.mxu0
        %v2249 = vpop.f32.mrf.mxu0
        %v2250 = vadd.f32 0.0, %v2249
        %v2251 = vpop.f32.mrf.mxu0
        %2252 = vmatprep.mubr.bf16.mxu0 0
        %2253 = vmatmul.mubr.bf16.gmra.mxu0 %v2210
        %v2254 = vpop.f32.mrf.mxu0
        %v2255 = vadd.f32 0.0, %v2254
        %v2256 = vpop.f32.mrf.mxu0
        %v2257 = vpop.f32.mrf.mxu0
        %v2258 = vadd.f32 0.0, %v2257
        %v2259 = vpop.f32.mrf.mxu0
        %2260 = vdwg.mxu0
        %v2261 = vadd.f32 %v2183, %v2247
        %v2262 = vadd.f32 %v2184, %v2250
        %v2263 = vadd.f32 %v2185, %v2255
        %v2264 = vadd.f32 %v2186, %v2258
        %s2265 = scalar_lea.vmem [#allocation3], 10
        %v2266 = vld [vmem:[%s2265] ss:$2 sm:$0xff]
        %s2267 = scalar_lea.vmem [#allocation3], 26
        %v2268 = vld [vmem:[%s2267] ss:$2 sm:$0xff]
        %s2269 = scalar_lea.vmem [#allocation3], 42
        %v2270 = vld [vmem:[%s2269] ss:$2 sm:$0xff]
        %s2271 = scalar_lea.vmem [#allocation3], 58
        %v2272 = vld [vmem:[%s2271] ss:$2 sm:$0xff]
        %v2273 = vpack.c.bf16 %v2268, %v2266
        %v2274 = vpack.c.bf16 %v2272, %v2270
        %s2275 = scalar_lea.vmem [#allocation11], 56
        %v2276 = vld [vmem:[%s2275] sm:$0xf]
        %v2277 = vld [vmem:[%s2275 + $0x4] sm:$0xf]
        %v2280 = vunpack.c.l.b16 %v2276
        %v2281 = vunpack.c.l.b16 %v2277
        %v2282 = vpack.c.b16 %v2281, %v2280
        %v2285 = vsel %vm481, %v2273, 0
        %v2288 = vsel %vm481, %v2274, 0
        %2290 = vmatprep.subr.bf16.mxu0 0
        %2291 = vmatpush1.bf16.msra.mxu0 0
        %2292 = vmatprep.subr.bf16.mxu0 0
        %2293 = vmatpush1.bf16.msra.mxu0 0
        %2294 = vmatprep.subr.bf16.mxu0 0
        %2295 = vmatpush1.bf16.msra.mxu0 0
        %2296 = vmatprep.subr.bf16.mxu0 0
        %2297 = vmatpush1.bf16.msra.mxu0 0
        %2298 = vmatprep.subr.bf16.mxu0 0
        %2299 = vmatpush1.bf16.msra.mxu0 0
        %2300 = vmatprep.subr.bf16.mxu0 0
        %2301 = vmatpush1.bf16.msra.mxu0 0
        %2302 = vmatprep.subr.bf16.mxu0 0
        %2303 = vmatpush1.bf16.msra.mxu0 0
        %2304 = vmatprep.subr.bf16.mxu0 0
        %2305 = vmatpush1.bf16.msra.mxu0 %v2282
        %2306 = vmatprep.subr.bf16.mxu0 0
        %2307 = vmatpush2.bf16.msra.mxu0 0
        %2308 = vmatprep.subr.bf16.mxu0 0
        %2309 = vmatpush2.bf16.msra.mxu0 0
        %2310 = vmatprep.subr.bf16.mxu0 0
        %2311 = vmatpush2.bf16.msra.mxu0 0
        %2312 = vmatprep.subr.bf16.mxu0 0
        %2313 = vmatpush2.bf16.msra.mxu0 0
        %2314 = vmatprep.subr.bf16.mxu0 0
        %2315 = vmatpush2.bf16.msra.mxu0 0
        %2316 = vmatprep.subr.bf16.mxu0 0
        %2317 = vmatpush2.bf16.msra.mxu0 0
        %2318 = vmatprep.subr.bf16.mxu0 0
        %2319 = vmatpush2.bf16.msra.mxu0 0
        %2320 = vmatprep.subr.bf16.mxu0 0
        %2321 = vmatpush2.bf16.msra.mxu0 0
        %2322 = vmatprep.mubr.bf16.mxu0 0
        %2323 = vmatmul.mubr.bf16.gmra.mxu0 %v2285
        %v2324 = vpop.f32.mrf.mxu0
        %v2325 = vadd.f32 0.0, %v2324
        %v2326 = vpop.f32.mrf.mxu0
        %v2327 = vpop.f32.mrf.mxu0
        %v2328 = vadd.f32 0.0, %v2327
        %v2329 = vpop.f32.mrf.mxu0
        %2330 = vmatprep.mubr.bf16.mxu0 0
        %2331 = vmatmul.mubr.bf16.gmra.mxu0 %v2288
        %v2332 = vpop.f32.mrf.mxu0
        %v2333 = vadd.f32 0.0, %v2332
        %v2334 = vpop.f32.mrf.mxu0
        %v2335 = vpop.f32.mrf.mxu0
        %v2336 = vadd.f32 0.0, %v2335
        %v2337 = vpop.f32.mrf.mxu0
        %2338 = vdwg.mxu0
        %v2339 = vadd.f32 %v2261, %v2325
        %v2340 = vadd.f32 %v2262, %v2328
        %v2341 = vadd.f32 %v2263, %v2333
        %v2342 = vadd.f32 %v2264, %v2336
        %s2343 = scalar_lea.vmem [#allocation3], 11
        %v2344 = vld [vmem:[%s2343] ss:$2 sm:$0xff]
        %s2345 = scalar_lea.vmem [#allocation3], 27
        %v2346 = vld [vmem:[%s2345] ss:$2 sm:$0xff]
        %s2347 = scalar_lea.vmem [#allocation3], 43
        %v2348 = vld [vmem:[%s2347] ss:$2 sm:$0xff]
        %s2349 = scalar_lea.vmem [#allocation3], 59
        %v2350 = vld [vmem:[%s2349] ss:$2 sm:$0xff]
        %v2351 = vpack.c.bf16 %v2346, %v2344
        %v2352 = vpack.c.bf16 %v2350, %v2348
        %s2353 = scalar_lea.vmem [#allocation11], 64
        %v2354 = vld [vmem:[%s2353] sm:$0xf]
        %v2355 = vld [vmem:[%s2353 + $0x4] sm:$0xf]
        %v2358 = vunpack.c.l.b16 %v2354
        %v2359 = vunpack.c.l.b16 %v2355
        %v2360 = vpack.c.b16 %v2359, %v2358
        %v2363 = vsel %vm481, %v2351, 0
        %v2366 = vsel %vm481, %v2352, 0
        %2368 = vmatprep.subr.bf16.mxu0 0
        %2369 = vmatpush1.bf16.msra.mxu0 0
        %2370 = vmatprep.subr.bf16.mxu0 0
        %2371 = vmatpush1.bf16.msra.mxu0 0
        %2372 = vmatprep.subr.bf16.mxu0 0
        %2373 = vmatpush1.bf16.msra.mxu0 0
        %2374 = vmatprep.subr.bf16.mxu0 0
        %2375 = vmatpush1.bf16.msra.mxu0 0
        %2376 = vmatprep.subr.bf16.mxu0 0
        %2377 = vmatpush1.bf16.msra.mxu0 0
        %2378 = vmatprep.subr.bf16.mxu0 0
        %2379 = vmatpush1.bf16.msra.mxu0 0
        %2380 = vmatprep.subr.bf16.mxu0 0
        %2381 = vmatpush1.bf16.msra.mxu0 0
        %2382 = vmatprep.subr.bf16.mxu0 0
        %2383 = vmatpush1.bf16.msra.mxu0 %v2360
        %2384 = vmatprep.subr.bf16.mxu0 0
        %2385 = vmatpush2.bf16.msra.mxu0 0
        %2386 = vmatprep.subr.bf16.mxu0 0
        %2387 = vmatpush2.bf16.msra.mxu0 0
        %2388 = vmatprep.subr.bf16.mxu0 0
        %2389 = vmatpush2.bf16.msra.mxu0 0
        %2390 = vmatprep.subr.bf16.mxu0 0
        %2391 = vmatpush2.bf16.msra.mxu0 0
        %2392 = vmatprep.subr.bf16.mxu0 0
        %2393 = vmatpush2.bf16.msra.mxu0 0
        %2394 = vmatprep.subr.bf16.mxu0 0
        %2395 = vmatpush2.bf16.msra.mxu0 0
        %2396 = vmatprep.subr.bf16.mxu0 0
        %2397 = vmatpush2.bf16.msra.mxu0 0
        %2398 = vmatprep.subr.bf16.mxu0 0
        %2399 = vmatpush2.bf16.msra.mxu0 0
        %2400 = vmatprep.mubr.bf16.mxu0 0
        %2401 = vmatmul.mubr.bf16.gmra.mxu0 %v2363
        %v2402 = vpop.f32.mrf.mxu0
        %v2403 = vadd.f32 0.0, %v2402
        %v2404 = vpop.f32.mrf.mxu0
        %v2405 = vpop.f32.mrf.mxu0
        %v2406 = vadd.f32 0.0, %v2405
        %v2407 = vpop.f32.mrf.mxu0
        %2408 = vmatprep.mubr.bf16.mxu0 0
        %2409 = vmatmul.mubr.bf16.gmra.mxu0 %v2366
        %v2410 = vpop.f32.mrf.mxu0
        %v2411 = vadd.f32 0.0, %v2410
        %v2412 = vpop.f32.mrf.mxu0
        %v2413 = vpop.f32.mrf.mxu0
        %v2414 = vadd.f32 0.0, %v2413
        %v2415 = vpop.f32.mrf.mxu0
        %2416 = vdwg.mxu0
        %v2417 = vadd.f32 %v2339, %v2403
        %v2418 = vadd.f32 %v2340, %v2406
        %v2419 = vadd.f32 %v2341, %v2411
        %v2420 = vadd.f32 %v2342, %v2414
        %s2421 = scalar_lea.vmem [#allocation3], 12
        %v2422 = vld [vmem:[%s2421] ss:$2 sm:$0xff]
        %s2423 = scalar_lea.vmem [#allocation3], 28
        %v2424 = vld [vmem:[%s2423] ss:$2 sm:$0xff]
        %s2425 = scalar_lea.vmem [#allocation3], 44
        %v2426 = vld [vmem:[%s2425] ss:$2 sm:$0xff]
        %s2427 = scalar_lea.vmem [#allocation3], 60
        %v2428 = vld [vmem:[%s2427] ss:$2 sm:$0xff]
        %v2429 = vpack.c.bf16 %v2424, %v2422
        %v2430 = vpack.c.bf16 %v2428, %v2426
        %s2431 = scalar_lea.vmem [#allocation11], 72
        %v2432 = vld [vmem:[%s2431] sm:$0xf]
        %v2433 = vld [vmem:[%s2431 + $0x4] sm:$0xf]
        %v2436 = vunpack.c.l.b16 %v2432
        %v2437 = vunpack.c.l.b16 %v2433
        %v2438 = vpack.c.b16 %v2437, %v2436
        %v2441 = vsel %vm481, %v2429, 0
        %v2444 = vsel %vm481, %v2430, 0
        %2446 = vmatprep.subr.bf16.mxu0 0
        %2447 = vmatpush1.bf16.msra.mxu0 0
        %2448 = vmatprep.subr.bf16.mxu0 0
        %2449 = vmatpush1.bf16.msra.mxu0 0
        %2450 = vmatprep.subr.bf16.mxu0 0
        %2451 = vmatpush1.bf16.msra.mxu0 0
        %2452 = vmatprep.subr.bf16.mxu0 0
        %2453 = vmatpush1.bf16.msra.mxu0 0
        %2454 = vmatprep.subr.bf16.mxu0 0
        %2455 = vmatpush1.bf16.msra.mxu0 0
        %2456 = vmatprep.subr.bf16.mxu0 0
        %2457 = vmatpush1.bf16.msra.mxu0 0
        %2458 = vmatprep.subr.bf16.mxu0 0
        %2459 = vmatpush1.bf16.msra.mxu0 0
        %2460 = vmatprep.subr.bf16.mxu0 0
        %2461 = vmatpush1.bf16.msra.mxu0 %v2438
        %2462 = vmatprep.subr.bf16.mxu0 0
        %2463 = vmatpush2.bf16.msra.mxu0 0
        %2464 = vmatprep.subr.bf16.mxu0 0
        %2465 = vmatpush2.bf16.msra.mxu0 0
        %2466 = vmatprep.subr.bf16.mxu0 0
        %2467 = vmatpush2.bf16.msra.mxu0 0
        %2468 = vmatprep.subr.bf16.mxu0 0
        %2469 = vmatpush2.bf16.msra.mxu0 0
        %2470 = vmatprep.subr.bf16.mxu0 0
        %2471 = vmatpush2.bf16.msra.mxu0 0
        %2472 = vmatprep.subr.bf16.mxu0 0
        %2473 = vmatpush2.bf16.msra.mxu0 0
        %2474 = vmatprep.subr.bf16.mxu0 0
        %2475 = vmatpush2.bf16.msra.mxu0 0
        %2476 = vmatprep.subr.bf16.mxu0 0
        %2477 = vmatpush2.bf16.msra.mxu0 0
        %2478 = vmatprep.mubr.bf16.mxu0 0
        %2479 = vmatmul.mubr.bf16.gmra.mxu0 %v2441
        %v2480 = vpop.f32.mrf.mxu0
        %v2481 = vadd.f32 0.0, %v2480
        %v2482 = vpop.f32.mrf.mxu0
        %v2483 = vpop.f32.mrf.mxu0
        %v2484 = vadd.f32 0.0, %v2483
        %v2485 = vpop.f32.mrf.mxu0
        %2486 = vmatprep.mubr.bf16.mxu0 0
        %2487 = vmatmul.mubr.bf16.gmra.mxu0 %v2444
        %v2488 = vpop.f32.mrf.mxu0
        %v2489 = vadd.f32 0.0, %v2488
        %v2490 = vpop.f32.mrf.mxu0
        %v2491 = vpop.f32.mrf.mxu0
        %v2492 = vadd.f32 0.0, %v2491
        %v2493 = vpop.f32.mrf.mxu0
        %2494 = vdwg.mxu0
        %v2495 = vadd.f32 %v2417, %v2481
        %v2496 = vadd.f32 %v2418, %v2484
        %v2497 = vadd.f32 %v2419, %v2489
        %v2498 = vadd.f32 %v2420, %v2492
        %s2499 = scalar_lea.vmem [#allocation3], 13
        %v2500 = vld [vmem:[%s2499] ss:$2 sm:$0xff]
        %s2501 = scalar_lea.vmem [#allocation3], 29
        %v2502 = vld [vmem:[%s2501] ss:$2 sm:$0xff]
        %s2503 = scalar_lea.vmem [#allocation3], 45
        %v2504 = vld [vmem:[%s2503] ss:$2 sm:$0xff]
        %s2505 = scalar_lea.vmem [#allocation3], 61
        %v2506 = vld [vmem:[%s2505] ss:$2 sm:$0xff]
        %v2507 = vpack.c.bf16 %v2502, %v2500
        %v2508 = vpack.c.bf16 %v2506, %v2504
        %s2509 = scalar_lea.vmem [#allocation11], 80
        %v2510 = vld [vmem:[%s2509] sm:$0xf]
        %v2511 = vld [vmem:[%s2509 + $0x4] sm:$0xf]
        %v2514 = vunpack.c.l.b16 %v2510
        %v2515 = vunpack.c.l.b16 %v2511
        %v2516 = vpack.c.b16 %v2515, %v2514
        %v2519 = vsel %vm481, %v2507, 0
        %v2522 = vsel %vm481, %v2508, 0
        %2524 = vmatprep.subr.bf16.mxu0 0
        %2525 = vmatpush1.bf16.msra.mxu0 0
        %2526 = vmatprep.subr.bf16.mxu0 0
        %2527 = vmatpush1.bf16.msra.mxu0 0
        %2528 = vmatprep.subr.bf16.mxu0 0
        %2529 = vmatpush1.bf16.msra.mxu0 0
        %2530 = vmatprep.subr.bf16.mxu0 0
        %2531 = vmatpush1.bf16.msra.mxu0 0
        %2532 = vmatprep.subr.bf16.mxu0 0
        %2533 = vmatpush1.bf16.msra.mxu0 0
        %2534 = vmatprep.subr.bf16.mxu0 0
        %2535 = vmatpush1.bf16.msra.mxu0 0
        %2536 = vmatprep.subr.bf16.mxu0 0
        %2537 = vmatpush1.bf16.msra.mxu0 0
        %2538 = vmatprep.subr.bf16.mxu0 0
        %2539 = vmatpush1.bf16.msra.mxu0 %v2516
        %2540 = vmatprep.subr.bf16.mxu0 0
        %2541 = vmatpush2.bf16.msra.mxu0 0
        %2542 = vmatprep.subr.bf16.mxu0 0
        %2543 = vmatpush2.bf16.msra.mxu0 0
        %2544 = vmatprep.subr.bf16.mxu0 0
        %2545 = vmatpush2.bf16.msra.mxu0 0
        %2546 = vmatprep.subr.bf16.mxu0 0
        %2547 = vmatpush2.bf16.msra.mxu0 0
        %2548 = vmatprep.subr.bf16.mxu0 0
        %2549 = vmatpush2.bf16.msra.mxu0 0
        %2550 = vmatprep.subr.bf16.mxu0 0
        %2551 = vmatpush2.bf16.msra.mxu0 0
        %2552 = vmatprep.subr.bf16.mxu0 0
        %2553 = vmatpush2.bf16.msra.mxu0 0
        %2554 = vmatprep.subr.bf16.mxu0 0
        %2555 = vmatpush2.bf16.msra.mxu0 0
        %2556 = vmatprep.mubr.bf16.mxu0 0
        %2557 = vmatmul.mubr.bf16.gmra.mxu0 %v2519
        %v2558 = vpop.f32.mrf.mxu0
        %v2559 = vadd.f32 0.0, %v2558
        %v2560 = vpop.f32.mrf.mxu0
        %v2561 = vpop.f32.mrf.mxu0
        %v2562 = vadd.f32 0.0, %v2561
        %v2563 = vpop.f32.mrf.mxu0
        %2564 = vmatprep.mubr.bf16.mxu0 0
        %2565 = vmatmul.mubr.bf16.gmra.mxu0 %v2522
        %v2566 = vpop.f32.mrf.mxu0
        %v2567 = vadd.f32 0.0, %v2566
        %v2568 = vpop.f32.mrf.mxu0
        %v2569 = vpop.f32.mrf.mxu0
        %v2570 = vadd.f32 0.0, %v2569
        %v2571 = vpop.f32.mrf.mxu0
        %2572 = vdwg.mxu0
        %v2573 = vadd.f32 %v2495, %v2559
        %v2574 = vadd.f32 %v2496, %v2562
        %v2575 = vadd.f32 %v2497, %v2567
        %v2576 = vadd.f32 %v2498, %v2570
        %v2577 = vlaneseq
        %v2578 = vshrl.u32 %v2577, 7
        %v2579 = vsub.s32 0, %v2578
        %v2580 = vrot.slane %v1716, %v2579
        %v2581 = vadd.f32 %v2573, %v2580
        %v2582 = vadd.f32 %v2574, %v2580
        %v2583 = vadd.f32 %v2575, %v2580
        %v2584 = vadd.f32 %v2576, %v2580
        %vm2585 = vcmp.gt.f32.partialorder %v2581, 0.0
        %vm2586 = vcmp.gt.f32.partialorder %v2582, 0.0
        %vm2587 = vcmp.gt.f32.partialorder %v2583, 0.0
        %vm2588 = vcmp.gt.f32.partialorder %v2584, 0.0
        %v2589 = vlaneseq
        %v2590 = vshrl.u32 %v2589, 7
        %v2591 = vsub.s32 0, %v2590
        %v2592 = vrot.slane %v1717, %v2591
        %v2593 = vmul.f32 %v2592, %v2581
        %v2594 = vmul.f32 %v2592, %v2582
        %v2595 = vmul.f32 %v2592, %v2583
        %v2596 = vmul.f32 %v2592, %v2584
        %v2597 = vsel %vm2585, %v2581, %v2593
        %v2598 = vsel %vm2586, %v2582, %v2594
        %v2599 = vsel %vm2587, %v2583, %v2595
        %v2600 = vsel %vm2588, %v2584, %v2596
        %2601 = vxpose.xlu0.b32.start [1/16] %v2597, 128
        %2602 = vxpose.xlu0.b32.cont [2/16] %v2598, 128
        %2603 = vxpose.xlu0.b32.cont [3/16] %v2599, 128
        %2604 = vxpose.xlu0.b32.cont [4/16] %v2600, 128
        %2605 = vxpose.xlu0.b32.cont [5/16] 0.0, 128
        %2606 = vxpose.xlu0.b32.cont [6/16] 0.0, 128
        %2607 = vxpose.xlu0.b32.cont [7/16] 0.0, 128
        %2608 = vxpose.xlu0.b32.cont [8/16] 0.0, 128
        %2609 = vxpose.xlu0.b32.cont [9/16] 0.0, 128
        %2610 = vxpose.xlu0.b32.cont [10/16] 0.0, 128
        %2611 = vxpose.xlu0.b32.cont [11/16] 0.0, 128
        %2612 = vxpose.xlu0.b32.cont [12/16] 0.0, 128
        %2613 = vxpose.xlu0.b32.cont [13/16] 0.0, 128
        %2614 = vxpose.xlu0.b32.cont [14/16] 0.0, 128
        %2615 = vxpose.xlu0.b32.cont [15/16] 0.0, 128
        %2616 = vxpose.xlu0.b32.end [16/16] 0.0, 128
        %v2617 = vpop.trf.xlu0
        %v2618 = vpop.trf.xlu0
        %v2619 = vpop.trf.xlu0
        %v2620 = vpop.trf.xlu0
        %v2621 = vpop.trf.xlu0
        %v2622 = vpop.trf.xlu0
        %v2623 = vpop.trf.xlu0
        %v2624 = vpop.trf.xlu0
        %v2625 = vpop.trf.xlu0
        %v2626 = vpop.trf.xlu0
        %v2627 = vpop.trf.xlu0
        %v2628 = vpop.trf.xlu0
        %v2629 = vpop.trf.xlu0
        %v2630 = vpop.trf.xlu0
        %v2631 = vpop.trf.xlu0
        %v2632 = vpop.trf.xlu0
        %vm2633 = vcmask 261120
        %2634 = vst.msk [vmem:[%s419] sm:$0xff] %vm2633, %v2617
        %2635 = vst.msk [vmem:[%s419 + $0x8] sm:$0xff] %vm2633, %v2618
        %2636 = vst.msk [vmem:[%s419 + $0x10] sm:$0xff] %vm2633, %v2619
        %2637 = vst.msk [vmem:[%s419 + $0x18] sm:$0xff] %vm2633, %v2620
        %v2638 = vld [vmem:[%s5 + $0x4] sm:$0x1]
        %v2639 = vld [vmem:[%s5 + $0x5] sm:$0x1]
        %2640 = vst.msk [vmem:[#allocation4] sm:$0xff] %vm2633, 0.0
        %2641 = vst.msk [vmem:[#allocation4 + $0x28] sm:$0xff] %vm2633, 0.0
        %2642 = vst.msk [vmem:[#allocation4 + $0x8] sm:$0xff] %vm2633, %v2597
        %2643 = vst.msk [vmem:[#allocation4 + $0x10] sm:$0xff] %vm2633, %v2598
        %2644 = vst.msk [vmem:[#allocation4 + $0x18] sm:$0xff] %vm2633, %v2599
        %2645 = vst.msk [vmem:[#allocation4 + $0x20] sm:$0xff] %vm2633, %v2600
        %s2646 = scalar_lea.vmem [#allocation4], 3
        %v2647 = vld [vmem:[%s2646] ss:$2 sm:$0xff]
        %s2648 = scalar_lea.vmem [#allocation4], 19
        %v2649 = vld [vmem:[%s2648] ss:$2 sm:$0xff]
        %v2650 = vpack.c.bf16 %v2649, %v2647
        %v2651 = vld [vmem:[#allocation12] sm:$0xf]
        %v2652 = vld [vmem:[#allocation12 + $0x4] sm:$0xf]
        %v2653 = vld [vmem:[#allocation12 + $0x8] sm:$0xf]
        %v2654 = vld [vmem:[#allocation12 + $0xc] sm:$0xf]
        %s2655 = scalar_lea.vmem [#allocation4], 4
        %v2656 = vld [vmem:[%s2655] ss:$2 sm:$0xff]
        %s2657 = scalar_lea.vmem [#allocation4], 20
        %v2658 = vld [vmem:[%s2657] ss:$2 sm:$0xff]
        %v2659 = vpack.c.bf16 %v2658, %v2656
        %s2660 = scalar_lea.vmem [#allocation12], 16
        %v2661 = vld [vmem:[%s2660] sm:$0xf]
        %v2662 = vld [vmem:[%s2660 + $0x4] sm:$0xf]
        %v2663 = vld [vmem:[%s2660 + $0x8] sm:$0xf]
        %v2664 = vld [vmem:[%s2660 + $0xc] sm:$0xf]
        %v2669 = vunpack.c.l.b16 %v2661
        %v2670 = vunpack.c.l.b16 %v2662
        %v2671 = vunpack.c.l.b16 %v2663
        %v2672 = vunpack.c.l.b16 %v2664
        %v2673 = vpack.c.b16 %v2670, %v2669
        %v2674 = vpack.c.b16 %v2672, %v2671
        %v2678 = vsel %vm2633, %v2659, 0
        %2680 = vmatprep.subr.bf16.mxu0 0
        %2681 = vmatpush1.bf16.msra.mxu0 0
        %2682 = vmatprep.subr.bf16.mxu0 0
        %2683 = vmatpush1.bf16.msra.mxu0 0
        %2684 = vmatprep.subr.bf16.mxu0 0
        %2685 = vmatpush1.bf16.msra.mxu0 0
        %2686 = vmatprep.subr.bf16.mxu0 0
        %2687 = vmatpush1.bf16.msra.mxu0 0
        %2688 = vmatprep.subr.bf16.mxu0 0
        %2689 = vmatpush1.bf16.msra.mxu0 0
        %2690 = vmatprep.subr.bf16.mxu0 0
        %2691 = vmatpush1.bf16.msra.mxu0 0
        %2692 = vmatprep.subr.bf16.mxu0 0
        %2693 = vmatpush1.bf16.msra.mxu0 %v2674
        %2694 = vmatprep.subr.bf16.mxu0 0
        %2695 = vmatpush1.bf16.msra.mxu0 %v2673
        %2696 = vmatprep.subr.bf16.mxu0 0
        %2697 = vmatpush2.bf16.msra.mxu0 0
        %2698 = vmatprep.subr.bf16.mxu0 0
        %2699 = vmatpush2.bf16.msra.mxu0 0
        %2700 = vmatprep.subr.bf16.mxu0 0
        %2701 = vmatpush2.bf16.msra.mxu0 0
        %2702 = vmatprep.subr.bf16.mxu0 0
        %2703 = vmatpush2.bf16.msra.mxu0 0
        %2704 = vmatprep.subr.bf16.mxu0 0
        %2705 = vmatpush2.bf16.msra.mxu0 0
        %2706 = vmatprep.subr.bf16.mxu0 0
        %2707 = vmatpush2.bf16.msra.mxu0 0
        %2708 = vmatprep.subr.bf16.mxu0 0
        %2709 = vmatpush2.bf16.msra.mxu0 0
        %2710 = vmatprep.subr.bf16.mxu0 0
        %2711 = vmatpush2.bf16.msra.mxu0 0
        %2712 = vmatprep.mubr.bf16.mxu0 0
        %2713 = vmatmul.mubr.bf16.gmra.mxu0 %v2678
        %v2714 = vpop.f32.mrf.mxu0
        %v2715 = vadd.f32 0.0, %v2714
        %v2716 = vpop.f32.mrf.mxu0
        %v2717 = vpop.f32.mrf.mxu0
        %v2718 = vadd.f32 0.0, %v2717
        %v2719 = vpop.f32.mrf.mxu0
        %2720 = vdwg.mxu0
        %v2725 = vunpack.c.l.b16 %v2651
        %v2726 = vunpack.c.l.b16 %v2652
        %v2727 = vunpack.c.l.b16 %v2653
        %v2728 = vunpack.c.l.b16 %v2654
        %v2729 = vpack.c.b16 %v2726, %v2725
        %v2730 = vpack.c.b16 %v2728, %v2727
        %v2734 = vsel %vm2633, %v2650, 0
        %2736 = vmatprep.subr.bf16.mxu0 0
        %2737 = vmatpush1.bf16.msra.mxu0 0
        %2738 = vmatprep.subr.bf16.mxu0 0
        %2739 = vmatpush1.bf16.msra.mxu0 0
        %2740 = vmatprep.subr.bf16.mxu0 0
        %2741 = vmatpush1.bf16.msra.mxu0 0
        %2742 = vmatprep.subr.bf16.mxu0 0
        %2743 = vmatpush1.bf16.msra.mxu0 0
        %2744 = vmatprep.subr.bf16.mxu0 0
        %2745 = vmatpush1.bf16.msra.mxu0 0
        %2746 = vmatprep.subr.bf16.mxu0 0
        %2747 = vmatpush1.bf16.msra.mxu0 0
        %2748 = vmatprep.subr.bf16.mxu0 0
        %2749 = vmatpush1.bf16.msra.mxu0 %v2730
        %2750 = vmatprep.subr.bf16.mxu0 0
        %2751 = vmatpush1.bf16.msra.mxu0 %v2729
        %2752 = vmatprep.subr.bf16.mxu0 0
        %2753 = vmatpush2.bf16.msra.mxu0 0
        %2754 = vmatprep.subr.bf16.mxu0 0
        %2755 = vmatpush2.bf16.msra.mxu0 0
        %2756 = vmatprep.subr.bf16.mxu0 0
        %2757 = vmatpush2.bf16.msra.mxu0 0
        %2758 = vmatprep.subr.bf16.mxu0 0
        %2759 = vmatpush2.bf16.msra.mxu0 0
        %2760 = vmatprep.subr.bf16.mxu0 0
        %2761 = vmatpush2.bf16.msra.mxu0 0
        %2762 = vmatprep.subr.bf16.mxu0 0
        %2763 = vmatpush2.bf16.msra.mxu0 0
        %2764 = vmatprep.subr.bf16.mxu0 0
        %2765 = vmatpush2.bf16.msra.mxu0 0
        %2766 = vmatprep.subr.bf16.mxu0 0
        %2767 = vmatpush2.bf16.msra.mxu0 0
        %2768 = vmatprep.mubr.bf16.mxu0 0
        %2769 = vmatmul.mubr.bf16.gmra.mxu0 %v2734
        %v2770 = vpop.f32.mrf.mxu0
        %v2771 = vadd.f32 %v2715, %v2770
        %v2772 = vpop.f32.mrf.mxu0
        %v2773 = vpop.f32.mrf.mxu0
        %v2774 = vadd.f32 %v2718, %v2773
        %v2775 = vpop.f32.mrf.mxu0
        %2776 = vdwg.mxu0
        %s2777 = scalar_lea.vmem [#allocation4], 5
        %v2778 = vld [vmem:[%s2777] ss:$2 sm:$0xff]
        %s2779 = scalar_lea.vmem [#allocation4], 21
        %v2780 = vld [vmem:[%s2779] ss:$2 sm:$0xff]
        %v2781 = vpack.c.bf16 %v2780, %v2778
        %s2782 = scalar_lea.vmem [#allocation12], 32
        %v2783 = vld [vmem:[%s2782] sm:$0xf]
        %v2784 = vld [vmem:[%s2782 + $0x4] sm:$0xf]
        %v2785 = vld [vmem:[%s2782 + $0x8] sm:$0xf]
        %v2786 = vld [vmem:[%s2782 + $0xc] sm:$0xf]
        %v2791 = vunpack.c.l.b16 %v2783
        %v2792 = vunpack.c.l.b16 %v2784
        %v2793 = vunpack.c.l.b16 %v2785
        %v2794 = vunpack.c.l.b16 %v2786
        %v2795 = vpack.c.b16 %v2792, %v2791
        %v2796 = vpack.c.b16 %v2794, %v2793
        %v2800 = vsel %vm2633, %v2781, 0
        %2802 = vmatprep.subr.bf16.mxu0 0
        %2803 = vmatpush1.bf16.msra.mxu0 0
        %2804 = vmatprep.subr.bf16.mxu0 0
        %2805 = vmatpush1.bf16.msra.mxu0 0
        %2806 = vmatprep.subr.bf16.mxu0 0
        %2807 = vmatpush1.bf16.msra.mxu0 0
        %2808 = vmatprep.subr.bf16.mxu0 0
        %2809 = vmatpush1.bf16.msra.mxu0 0
        %2810 = vmatprep.subr.bf16.mxu0 0
        %2811 = vmatpush1.bf16.msra.mxu0 0
        %2812 = vmatprep.subr.bf16.mxu0 0
        %2813 = vmatpush1.bf16.msra.mxu0 0
        %2814 = vmatprep.subr.bf16.mxu0 0
        %2815 = vmatpush1.bf16.msra.mxu0 %v2796
        %2816 = vmatprep.subr.bf16.mxu0 0
        %2817 = vmatpush1.bf16.msra.mxu0 %v2795
        %2818 = vmatprep.subr.bf16.mxu0 0
        %2819 = vmatpush2.bf16.msra.mxu0 0
        %2820 = vmatprep.subr.bf16.mxu0 0
        %2821 = vmatpush2.bf16.msra.mxu0 0
        %2822 = vmatprep.subr.bf16.mxu0 0
        %2823 = vmatpush2.bf16.msra.mxu0 0
        %2824 = vmatprep.subr.bf16.mxu0 0
        %2825 = vmatpush2.bf16.msra.mxu0 0
        %2826 = vmatprep.subr.bf16.mxu0 0
        %2827 = vmatpush2.bf16.msra.mxu0 0
        %2828 = vmatprep.subr.bf16.mxu0 0
        %2829 = vmatpush2.bf16.msra.mxu0 0
        %2830 = vmatprep.subr.bf16.mxu0 0
        %2831 = vmatpush2.bf16.msra.mxu0 0
        %2832 = vmatprep.subr.bf16.mxu0 0
        %2833 = vmatpush2.bf16.msra.mxu0 0
        %2834 = vmatprep.mubr.bf16.mxu0 0
        %2835 = vmatmul.mubr.bf16.gmra.mxu0 %v2800
        %v2836 = vpop.f32.mrf.mxu0
        %v2837 = vadd.f32 0.0, %v2836
        %v2838 = vpop.f32.mrf.mxu0
        %v2839 = vpop.f32.mrf.mxu0
        %v2840 = vadd.f32 0.0, %v2839
        %v2841 = vpop.f32.mrf.mxu0
        %2842 = vdwg.mxu0
        %v2843 = vadd.f32 %v2771, %v2837
        %v2844 = vadd.f32 %v2774, %v2840
        %s2845 = scalar_lea.vmem [#allocation4], 6
        %v2846 = vld [vmem:[%s2845] ss:$2 sm:$0xff]
        %s2847 = scalar_lea.vmem [#allocation4], 22
        %v2848 = vld [vmem:[%s2847] ss:$2 sm:$0xff]
        %v2849 = vpack.c.bf16 %v2848, %v2846
        %s2850 = scalar_lea.vmem [#allocation12], 48
        %v2851 = vld [vmem:[%s2850] sm:$0xf]
        %v2852 = vld [vmem:[%s2850 + $0x4] sm:$0xf]
        %v2853 = vld [vmem:[%s2850 + $0x8] sm:$0xf]
        %v2854 = vld [vmem:[%s2850 + $0xc] sm:$0xf]
        %v2859 = vunpack.c.l.b16 %v2851
        %v2860 = vunpack.c.l.b16 %v2852
        %v2861 = vunpack.c.l.b16 %v2853
        %v2862 = vunpack.c.l.b16 %v2854
        %v2863 = vpack.c.b16 %v2860, %v2859
        %v2864 = vpack.c.b16 %v2862, %v2861
        %v2868 = vsel %vm2633, %v2849, 0
        %2870 = vmatprep.subr.bf16.mxu0 0
        %2871 = vmatpush1.bf16.msra.mxu0 0
        %2872 = vmatprep.subr.bf16.mxu0 0
        %2873 = vmatpush1.bf16.msra.mxu0 0
        %2874 = vmatprep.subr.bf16.mxu0 0
        %2875 = vmatpush1.bf16.msra.mxu0 0
        %2876 = vmatprep.subr.bf16.mxu0 0
        %2877 = vmatpush1.bf16.msra.mxu0 0
        %2878 = vmatprep.subr.bf16.mxu0 0
        %2879 = vmatpush1.bf16.msra.mxu0 0
        %2880 = vmatprep.subr.bf16.mxu0 0
        %2881 = vmatpush1.bf16.msra.mxu0 0
        %2882 = vmatprep.subr.bf16.mxu0 0
        %2883 = vmatpush1.bf16.msra.mxu0 %v2864
        %2884 = vmatprep.subr.bf16.mxu0 0
        %2885 = vmatpush1.bf16.msra.mxu0 %v2863
        %2886 = vmatprep.subr.bf16.mxu0 0
        %2887 = vmatpush2.bf16.msra.mxu0 0
        %2888 = vmatprep.subr.bf16.mxu0 0
        %2889 = vmatpush2.bf16.msra.mxu0 0
        %2890 = vmatprep.subr.bf16.mxu0 0
        %2891 = vmatpush2.bf16.msra.mxu0 0
        %2892 = vmatprep.subr.bf16.mxu0 0
        %2893 = vmatpush2.bf16.msra.mxu0 0
        %2894 = vmatprep.subr.bf16.mxu0 0
        %2895 = vmatpush2.bf16.msra.mxu0 0
        %2896 = vmatprep.subr.bf16.mxu0 0
        %2897 = vmatpush2.bf16.msra.mxu0 0
        %2898 = vmatprep.subr.bf16.mxu0 0
        %2899 = vmatpush2.bf16.msra.mxu0 0
        %2900 = vmatprep.subr.bf16.mxu0 0
        %2901 = vmatpush2.bf16.msra.mxu0 0
        %2902 = vmatprep.mubr.bf16.mxu0 0
        %2903 = vmatmul.mubr.bf16.gmra.mxu0 %v2868
        %v2904 = vpop.f32.mrf.mxu0
        %v2905 = vadd.f32 0.0, %v2904
        %v2906 = vpop.f32.mrf.mxu0
        %v2907 = vpop.f32.mrf.mxu0
        %v2908 = vadd.f32 0.0, %v2907
        %v2909 = vpop.f32.mrf.mxu0
        %2910 = vdwg.mxu0
        %v2911 = vadd.f32 %v2843, %v2905
        %v2912 = vadd.f32 %v2844, %v2908
        %s2913 = scalar_lea.vmem [#allocation4], 7
        %v2914 = vld [vmem:[%s2913] ss:$2 sm:$0xff]
        %s2915 = scalar_lea.vmem [#allocation4], 23
        %v2916 = vld [vmem:[%s2915] ss:$2 sm:$0xff]
        %v2917 = vpack.c.bf16 %v2916, %v2914
        %s2918 = scalar_lea.vmem [#allocation12], 64
        %v2919 = vld [vmem:[%s2918] sm:$0xf]
        %v2920 = vld [vmem:[%s2918 + $0x4] sm:$0xf]
        %v2921 = vld [vmem:[%s2918 + $0x8] sm:$0xf]
        %v2922 = vld [vmem:[%s2918 + $0xc] sm:$0xf]
        %v2927 = vunpack.c.l.b16 %v2919
        %v2928 = vunpack.c.l.b16 %v2920
        %v2929 = vunpack.c.l.b16 %v2921
        %v2930 = vunpack.c.l.b16 %v2922
        %v2931 = vpack.c.b16 %v2928, %v2927
        %v2932 = vpack.c.b16 %v2930, %v2929
        %v2936 = vsel %vm2633, %v2917, 0
        %2938 = vmatprep.subr.bf16.mxu0 0
        %2939 = vmatpush1.bf16.msra.mxu0 0
        %2940 = vmatprep.subr.bf16.mxu0 0
        %2941 = vmatpush1.bf16.msra.mxu0 0
        %2942 = vmatprep.subr.bf16.mxu0 0
        %2943 = vmatpush1.bf16.msra.mxu0 0
        %2944 = vmatprep.subr.bf16.mxu0 0
        %2945 = vmatpush1.bf16.msra.mxu0 0
        %2946 = vmatprep.subr.bf16.mxu0 0
        %2947 = vmatpush1.bf16.msra.mxu0 0
        %2948 = vmatprep.subr.bf16.mxu0 0
        %2949 = vmatpush1.bf16.msra.mxu0 0
        %2950 = vmatprep.subr.bf16.mxu0 0
        %2951 = vmatpush1.bf16.msra.mxu0 %v2932
        %2952 = vmatprep.subr.bf16.mxu0 0
        %2953 = vmatpush1.bf16.msra.mxu0 %v2931
        %2954 = vmatprep.subr.bf16.mxu0 0
        %2955 = vmatpush2.bf16.msra.mxu0 0
        %2956 = vmatprep.subr.bf16.mxu0 0
        %2957 = vmatpush2.bf16.msra.mxu0 0
        %2958 = vmatprep.subr.bf16.mxu0 0
        %2959 = vmatpush2.bf16.msra.mxu0 0
        %2960 = vmatprep.subr.bf16.mxu0 0
        %2961 = vmatpush2.bf16.msra.mxu0 0
        %2962 = vmatprep.subr.bf16.mxu0 0
        %2963 = vmatpush2.bf16.msra.mxu0 0
        %2964 = vmatprep.subr.bf16.mxu0 0
        %2965 = vmatpush2.bf16.msra.mxu0 0
        %2966 = vmatprep.subr.bf16.mxu0 0
        %2967 = vmatpush2.bf16.msra.mxu0 0
        %2968 = vmatprep.subr.bf16.mxu0 0
        %2969 = vmatpush2.bf16.msra.mxu0 0
        %2970 = vmatprep.mubr.bf16.mxu0 0
        %2971 = vmatmul.mubr.bf16.gmra.mxu0 %v2936
        %v2972 = vpop.f32.mrf.mxu0
        %v2973 = vadd.f32 0.0, %v2972
        %v2974 = vpop.f32.mrf.mxu0
        %v2975 = vpop.f32.mrf.mxu0
        %v2976 = vadd.f32 0.0, %v2975
        %v2977 = vpop.f32.mrf.mxu0
        %2978 = vdwg.mxu0
        %v2979 = vadd.f32 %v2911, %v2973
        %v2980 = vadd.f32 %v2912, %v2976
        %s2981 = scalar_lea.vmem [#allocation4], 8
        %v2982 = vld [vmem:[%s2981] ss:$2 sm:$0xff]
        %s2983 = scalar_lea.vmem [#allocation4], 24
        %v2984 = vld [vmem:[%s2983] ss:$2 sm:$0xff]
        %v2985 = vpack.c.bf16 %v2984, %v2982
        %s2986 = scalar_lea.vmem [#allocation12], 80
        %v2987 = vld [vmem:[%s2986] sm:$0xf]
        %v2988 = vld [vmem:[%s2986 + $0x4] sm:$0xf]
        %v2989 = vld [vmem:[%s2986 + $0x8] sm:$0xf]
        %v2990 = vld [vmem:[%s2986 + $0xc] sm:$0xf]
        %v2995 = vunpack.c.l.b16 %v2987
        %v2996 = vunpack.c.l.b16 %v2988
        %v2997 = vunpack.c.l.b16 %v2989
        %v2998 = vunpack.c.l.b16 %v2990
        %v2999 = vpack.c.b16 %v2996, %v2995
        %v3000 = vpack.c.b16 %v2998, %v2997
        %v3004 = vsel %vm2633, %v2985, 0
        %3006 = vmatprep.subr.bf16.mxu0 0
        %3007 = vmatpush1.bf16.msra.mxu0 0
        %3008 = vmatprep.subr.bf16.mxu0 0
        %3009 = vmatpush1.bf16.msra.mxu0 0
        %3010 = vmatprep.subr.bf16.mxu0 0
        %3011 = vmatpush1.bf16.msra.mxu0 0
        %3012 = vmatprep.subr.bf16.mxu0 0
        %3013 = vmatpush1.bf16.msra.mxu0 0
        %3014 = vmatprep.subr.bf16.mxu0 0
        %3015 = vmatpush1.bf16.msra.mxu0 0
        %3016 = vmatprep.subr.bf16.mxu0 0
        %3017 = vmatpush1.bf16.msra.mxu0 0
        %3018 = vmatprep.subr.bf16.mxu0 0
        %3019 = vmatpush1.bf16.msra.mxu0 %v3000
        %3020 = vmatprep.subr.bf16.mxu0 0
        %3021 = vmatpush1.bf16.msra.mxu0 %v2999
        %3022 = vmatprep.subr.bf16.mxu0 0
        %3023 = vmatpush2.bf16.msra.mxu0 0
        %3024 = vmatprep.subr.bf16.mxu0 0
        %3025 = vmatpush2.bf16.msra.mxu0 0
        %3026 = vmatprep.subr.bf16.mxu0 0
        %3027 = vmatpush2.bf16.msra.mxu0 0
        %3028 = vmatprep.subr.bf16.mxu0 0
        %3029 = vmatpush2.bf16.msra.mxu0 0
        %3030 = vmatprep.subr.bf16.mxu0 0
        %3031 = vmatpush2.bf16.msra.mxu0 0
        %3032 = vmatprep.subr.bf16.mxu0 0
        %3033 = vmatpush2.bf16.msra.mxu0 0
        %3034 = vmatprep.subr.bf16.mxu0 0
        %3035 = vmatpush2.bf16.msra.mxu0 0
        %3036 = vmatprep.subr.bf16.mxu0 0
        %3037 = vmatpush2.bf16.msra.mxu0 0
        %3038 = vmatprep.mubr.bf16.mxu0 0
        %3039 = vmatmul.mubr.bf16.gmra.mxu0 %v3004
        %v3040 = vpop.f32.mrf.mxu0
        %v3041 = vadd.f32 0.0, %v3040
        %v3042 = vpop.f32.mrf.mxu0
        %v3043 = vpop.f32.mrf.mxu0
        %v3044 = vadd.f32 0.0, %v3043
        %v3045 = vpop.f32.mrf.mxu0
        %3046 = vdwg.mxu0
        %v3047 = vadd.f32 %v2979, %v3041
        %v3048 = vadd.f32 %v2980, %v3044
        %s3049 = scalar_lea.vmem [#allocation4], 9
        %v3050 = vld [vmem:[%s3049] ss:$2 sm:$0xff]
        %s3051 = scalar_lea.vmem [#allocation4], 25
        %v3052 = vld [vmem:[%s3051] ss:$2 sm:$0xff]
        %v3053 = vpack.c.bf16 %v3052, %v3050
        %s3054 = scalar_lea.vmem [#allocation12], 96
        %v3055 = vld [vmem:[%s3054] sm:$0xf]
        %v3056 = vld [vmem:[%s3054 + $0x4] sm:$0xf]
        %v3057 = vld [vmem:[%s3054 + $0x8] sm:$0xf]
        %v3058 = vld [vmem:[%s3054 + $0xc] sm:$0xf]
        %v3063 = vunpack.c.l.b16 %v3055
        %v3064 = vunpack.c.l.b16 %v3056
        %v3065 = vunpack.c.l.b16 %v3057
        %v3066 = vunpack.c.l.b16 %v3058
        %v3067 = vpack.c.b16 %v3064, %v3063
        %v3068 = vpack.c.b16 %v3066, %v3065
        %v3072 = vsel %vm2633, %v3053, 0
        %3074 = vmatprep.subr.bf16.mxu0 0
        %3075 = vmatpush1.bf16.msra.mxu0 0
        %3076 = vmatprep.subr.bf16.mxu0 0
        %3077 = vmatpush1.bf16.msra.mxu0 0
        %3078 = vmatprep.subr.bf16.mxu0 0
        %3079 = vmatpush1.bf16.msra.mxu0 0
        %3080 = vmatprep.subr.bf16.mxu0 0
        %3081 = vmatpush1.bf16.msra.mxu0 0
        %3082 = vmatprep.subr.bf16.mxu0 0
        %3083 = vmatpush1.bf16.msra.mxu0 0
        %3084 = vmatprep.subr.bf16.mxu0 0
        %3085 = vmatpush1.bf16.msra.mxu0 0
        %3086 = vmatprep.subr.bf16.mxu0 0
        %3087 = vmatpush1.bf16.msra.mxu0 %v3068
        %3088 = vmatprep.subr.bf16.mxu0 0
        %3089 = vmatpush1.bf16.msra.mxu0 %v3067
        %3090 = vmatprep.subr.bf16.mxu0 0
        %3091 = vmatpush2.bf16.msra.mxu0 0
        %3092 = vmatprep.subr.bf16.mxu0 0
        %3093 = vmatpush2.bf16.msra.mxu0 0
        %3094 = vmatprep.subr.bf16.mxu0 0
        %3095 = vmatpush2.bf16.msra.mxu0 0
        %3096 = vmatprep.subr.bf16.mxu0 0
        %3097 = vmatpush2.bf16.msra.mxu0 0
        %3098 = vmatprep.subr.bf16.mxu0 0
        %3099 = vmatpush2.bf16.msra.mxu0 0
        %3100 = vmatprep.subr.bf16.mxu0 0
        %3101 = vmatpush2.bf16.msra.mxu0 0
        %3102 = vmatprep.subr.bf16.mxu0 0
        %3103 = vmatpush2.bf16.msra.mxu0 0
        %3104 = vmatprep.subr.bf16.mxu0 0
        %3105 = vmatpush2.bf16.msra.mxu0 0
        %3106 = vmatprep.mubr.bf16.mxu0 0
        %3107 = vmatmul.mubr.bf16.gmra.mxu0 %v3072
        %v3108 = vpop.f32.mrf.mxu0
        %v3109 = vadd.f32 0.0, %v3108
        %v3110 = vpop.f32.mrf.mxu0
        %v3111 = vpop.f32.mrf.mxu0
        %v3112 = vadd.f32 0.0, %v3111
        %v3113 = vpop.f32.mrf.mxu0
        %3114 = vdwg.mxu0
        %v3115 = vadd.f32 %v3047, %v3109
        %v3116 = vadd.f32 %v3048, %v3112
        %s3117 = scalar_lea.vmem [#allocation4], 10
        %v3118 = vld [vmem:[%s3117] ss:$2 sm:$0xff]
        %s3119 = scalar_lea.vmem [#allocation4], 26
        %v3120 = vld [vmem:[%s3119] ss:$2 sm:$0xff]
        %v3121 = vpack.c.bf16 %v3120, %v3118
        %s3122 = scalar_lea.vmem [#allocation12], 112
        %v3123 = vld [vmem:[%s3122] sm:$0xf]
        %v3124 = vld [vmem:[%s3122 + $0x4] sm:$0xf]
        %v3125 = vld [vmem:[%s3122 + $0x8] sm:$0xf]
        %v3126 = vld [vmem:[%s3122 + $0xc] sm:$0xf]
        %v3131 = vunpack.c.l.b16 %v3123
        %v3132 = vunpack.c.l.b16 %v3124
        %v3133 = vunpack.c.l.b16 %v3125
        %v3134 = vunpack.c.l.b16 %v3126
        %v3135 = vpack.c.b16 %v3132, %v3131
        %v3136 = vpack.c.b16 %v3134, %v3133
        %v3140 = vsel %vm2633, %v3121, 0
        %3142 = vmatprep.subr.bf16.mxu0 0
        %3143 = vmatpush1.bf16.msra.mxu0 0
        %3144 = vmatprep.subr.bf16.mxu0 0
        %3145 = vmatpush1.bf16.msra.mxu0 0
        %3146 = vmatprep.subr.bf16.mxu0 0
        %3147 = vmatpush1.bf16.msra.mxu0 0
        %3148 = vmatprep.subr.bf16.mxu0 0
        %3149 = vmatpush1.bf16.msra.mxu0 0
        %3150 = vmatprep.subr.bf16.mxu0 0
        %3151 = vmatpush1.bf16.msra.mxu0 0
        %3152 = vmatprep.subr.bf16.mxu0 0
        %3153 = vmatpush1.bf16.msra.mxu0 0
        %3154 = vmatprep.subr.bf16.mxu0 0
        %3155 = vmatpush1.bf16.msra.mxu0 %v3136
        %3156 = vmatprep.subr.bf16.mxu0 0
        %3157 = vmatpush1.bf16.msra.mxu0 %v3135
        %3158 = vmatprep.subr.bf16.mxu0 0
        %3159 = vmatpush2.bf16.msra.mxu0 0
        %3160 = vmatprep.subr.bf16.mxu0 0
        %3161 = vmatpush2.bf16.msra.mxu0 0
        %3162 = vmatprep.subr.bf16.mxu0 0
        %3163 = vmatpush2.bf16.msra.mxu0 0
        %3164 = vmatprep.subr.bf16.mxu0 0
        %3165 = vmatpush2.bf16.msra.mxu0 0
        %3166 = vmatprep.subr.bf16.mxu0 0
        %3167 = vmatpush2.bf16.msra.mxu0 0
        %3168 = vmatprep.subr.bf16.mxu0 0
        %3169 = vmatpush2.bf16.msra.mxu0 0
        %3170 = vmatprep.subr.bf16.mxu0 0
        %3171 = vmatpush2.bf16.msra.mxu0 0
        %3172 = vmatprep.subr.bf16.mxu0 0
        %3173 = vmatpush2.bf16.msra.mxu0 0
        %3174 = vmatprep.mubr.bf16.mxu0 0
        %3175 = vmatmul.mubr.bf16.gmra.mxu0 %v3140
        %v3176 = vpop.f32.mrf.mxu0
        %v3177 = vadd.f32 0.0, %v3176
        %v3178 = vpop.f32.mrf.mxu0
        %v3179 = vpop.f32.mrf.mxu0
        %v3180 = vadd.f32 0.0, %v3179
        %v3181 = vpop.f32.mrf.mxu0
        %3182 = vdwg.mxu0
        %v3183 = vadd.f32 %v3115, %v3177
        %v3184 = vadd.f32 %v3116, %v3180
        %s3185 = scalar_lea.vmem [#allocation4], 11
        %v3186 = vld [vmem:[%s3185] ss:$2 sm:$0xff]
        %s3187 = scalar_lea.vmem [#allocation4], 27
        %v3188 = vld [vmem:[%s3187] ss:$2 sm:$0xff]
        %v3189 = vpack.c.bf16 %v3188, %v3186
        %s3190 = scalar_lea.vmem [#allocation12], 128
        %v3191 = vld [vmem:[%s3190] sm:$0xf]
        %v3192 = vld [vmem:[%s3190 + $0x4] sm:$0xf]
        %v3193 = vld [vmem:[%s3190 + $0x8] sm:$0xf]
        %v3194 = vld [vmem:[%s3190 + $0xc] sm:$0xf]
        %v3199 = vunpack.c.l.b16 %v3191
        %v3200 = vunpack.c.l.b16 %v3192
        %v3201 = vunpack.c.l.b16 %v3193
        %v3202 = vunpack.c.l.b16 %v3194
        %v3203 = vpack.c.b16 %v3200, %v3199
        %v3204 = vpack.c.b16 %v3202, %v3201
        %v3208 = vsel %vm2633, %v3189, 0
        %3210 = vmatprep.subr.bf16.mxu0 0
        %3211 = vmatpush1.bf16.msra.mxu0 0
        %3212 = vmatprep.subr.bf16.mxu0 0
        %3213 = vmatpush1.bf16.msra.mxu0 0
        %3214 = vmatprep.subr.bf16.mxu0 0
        %3215 = vmatpush1.bf16.msra.mxu0 0
        %3216 = vmatprep.subr.bf16.mxu0 0
        %3217 = vmatpush1.bf16.msra.mxu0 0
        %3218 = vmatprep.subr.bf16.mxu0 0
        %3219 = vmatpush1.bf16.msra.mxu0 0
        %3220 = vmatprep.subr.bf16.mxu0 0
        %3221 = vmatpush1.bf16.msra.mxu0 0
        %3222 = vmatprep.subr.bf16.mxu0 0
        %3223 = vmatpush1.bf16.msra.mxu0 %v3204
        %3224 = vmatprep.subr.bf16.mxu0 0
        %3225 = vmatpush1.bf16.msra.mxu0 %v3203
        %3226 = vmatprep.subr.bf16.mxu0 0
        %3227 = vmatpush2.bf16.msra.mxu0 0
        %3228 = vmatprep.subr.bf16.mxu0 0
        %3229 = vmatpush2.bf16.msra.mxu0 0
        %3230 = vmatprep.subr.bf16.mxu0 0
        %3231 = vmatpush2.bf16.msra.mxu0 0
        %3232 = vmatprep.subr.bf16.mxu0 0
        %3233 = vmatpush2.bf16.msra.mxu0 0
        %3234 = vmatprep.subr.bf16.mxu0 0
        %3235 = vmatpush2.bf16.msra.mxu0 0
        %3236 = vmatprep.subr.bf16.mxu0 0
        %3237 = vmatpush2.bf16.msra.mxu0 0
        %3238 = vmatprep.subr.bf16.mxu0 0
        %3239 = vmatpush2.bf16.msra.mxu0 0
        %3240 = vmatprep.subr.bf16.mxu0 0
        %3241 = vmatpush2.bf16.msra.mxu0 0
        %3242 = vmatprep.mubr.bf16.mxu0 0
        %3243 = vmatmul.mubr.bf16.gmra.mxu0 %v3208
        %v3244 = vpop.f32.mrf.mxu0
        %v3245 = vadd.f32 0.0, %v3244
        %v3246 = vpop.f32.mrf.mxu0
        %v3247 = vpop.f32.mrf.mxu0
        %v3248 = vadd.f32 0.0, %v3247
        %v3249 = vpop.f32.mrf.mxu0
        %3250 = vdwg.mxu0
        %v3251 = vadd.f32 %v3183, %v3245
        %v3252 = vadd.f32 %v3184, %v3248
        %s3253 = scalar_lea.vmem [#allocation4], 12
        %v3254 = vld [vmem:[%s3253] ss:$2 sm:$0xff]
        %s3255 = scalar_lea.vmem [#allocation4], 28
        %v3256 = vld [vmem:[%s3255] ss:$2 sm:$0xff]
        %v3257 = vpack.c.bf16 %v3256, %v3254
        %s3258 = scalar_lea.vmem [#allocation12], 144
        %v3259 = vld [vmem:[%s3258] sm:$0xf]
        %v3260 = vld [vmem:[%s3258 + $0x4] sm:$0xf]
        %v3261 = vld [vmem:[%s3258 + $0x8] sm:$0xf]
        %v3262 = vld [vmem:[%s3258 + $0xc] sm:$0xf]
        %v3267 = vunpack.c.l.b16 %v3259
        %v3268 = vunpack.c.l.b16 %v3260
        %v3269 = vunpack.c.l.b16 %v3261
        %v3270 = vunpack.c.l.b16 %v3262
        %v3271 = vpack.c.b16 %v3268, %v3267
        %v3272 = vpack.c.b16 %v3270, %v3269
        %v3276 = vsel %vm2633, %v3257, 0
        %3278 = vmatprep.subr.bf16.mxu0 0
        %3279 = vmatpush1.bf16.msra.mxu0 0
        %3280 = vmatprep.subr.bf16.mxu0 0
        %3281 = vmatpush1.bf16.msra.mxu0 0
        %3282 = vmatprep.subr.bf16.mxu0 0
        %3283 = vmatpush1.bf16.msra.mxu0 0
        %3284 = vmatprep.subr.bf16.mxu0 0
        %3285 = vmatpush1.bf16.msra.mxu0 0
        %3286 = vmatprep.subr.bf16.mxu0 0
        %3287 = vmatpush1.bf16.msra.mxu0 0
        %3288 = vmatprep.subr.bf16.mxu0 0
        %3289 = vmatpush1.bf16.msra.mxu0 0
        %3290 = vmatprep.subr.bf16.mxu0 0
        %3291 = vmatpush1.bf16.msra.mxu0 %v3272
        %3292 = vmatprep.subr.bf16.mxu0 0
        %3293 = vmatpush1.bf16.msra.mxu0 %v3271
        %3294 = vmatprep.subr.bf16.mxu0 0
        %3295 = vmatpush2.bf16.msra.mxu0 0
        %3296 = vmatprep.subr.bf16.mxu0 0
        %3297 = vmatpush2.bf16.msra.mxu0 0
        %3298 = vmatprep.subr.bf16.mxu0 0
        %3299 = vmatpush2.bf16.msra.mxu0 0
        %3300 = vmatprep.subr.bf16.mxu0 0
        %3301 = vmatpush2.bf16.msra.mxu0 0
        %3302 = vmatprep.subr.bf16.mxu0 0
        %3303 = vmatpush2.bf16.msra.mxu0 0
        %3304 = vmatprep.subr.bf16.mxu0 0
        %3305 = vmatpush2.bf16.msra.mxu0 0
        %3306 = vmatprep.subr.bf16.mxu0 0
        %3307 = vmatpush2.bf16.msra.mxu0 0
        %3308 = vmatprep.subr.bf16.mxu0 0
        %3309 = vmatpush2.bf16.msra.mxu0 0
        %3310 = vmatprep.mubr.bf16.mxu0 0
        %3311 = vmatmul.mubr.bf16.gmra.mxu0 %v3276
        %v3312 = vpop.f32.mrf.mxu0
        %v3313 = vadd.f32 0.0, %v3312
        %v3314 = vpop.f32.mrf.mxu0
        %v3315 = vpop.f32.mrf.mxu0
        %v3316 = vadd.f32 0.0, %v3315
        %v3317 = vpop.f32.mrf.mxu0
        %3318 = vdwg.mxu0
        %v3319 = vadd.f32 %v3251, %v3313
        %v3320 = vadd.f32 %v3252, %v3316
        %s3321 = scalar_lea.vmem [#allocation4], 13
        %v3322 = vld [vmem:[%s3321] ss:$2 sm:$0xff]
        %s3323 = scalar_lea.vmem [#allocation4], 29
        %v3324 = vld [vmem:[%s3323] ss:$2 sm:$0xff]
        %v3325 = vpack.c.bf16 %v3324, %v3322
        %s3326 = scalar_lea.vmem [#allocation12], 160
        %v3327 = vld [vmem:[%s3326] sm:$0xf]
        %v3328 = vld [vmem:[%s3326 + $0x4] sm:$0xf]
        %v3329 = vld [vmem:[%s3326 + $0x8] sm:$0xf]
        %v3330 = vld [vmem:[%s3326 + $0xc] sm:$0xf]
        %v3335 = vunpack.c.l.b16 %v3327
        %v3336 = vunpack.c.l.b16 %v3328
        %v3337 = vunpack.c.l.b16 %v3329
        %v3338 = vunpack.c.l.b16 %v3330
        %v3339 = vpack.c.b16 %v3336, %v3335
        %v3340 = vpack.c.b16 %v3338, %v3337
        %v3344 = vsel %vm2633, %v3325, 0
        %3346 = vmatprep.subr.bf16.mxu0 0
        %3347 = vmatpush1.bf16.msra.mxu0 0
        %3348 = vmatprep.subr.bf16.mxu0 0
        %3349 = vmatpush1.bf16.msra.mxu0 0
        %3350 = vmatprep.subr.bf16.mxu0 0
        %3351 = vmatpush1.bf16.msra.mxu0 0
        %3352 = vmatprep.subr.bf16.mxu0 0
        %3353 = vmatpush1.bf16.msra.mxu0 0
        %3354 = vmatprep.subr.bf16.mxu0 0
        %3355 = vmatpush1.bf16.msra.mxu0 0
        %3356 = vmatprep.subr.bf16.mxu0 0
        %3357 = vmatpush1.bf16.msra.mxu0 0
        %3358 = vmatprep.subr.bf16.mxu0 0
        %3359 = vmatpush1.bf16.msra.mxu0 %v3340
        %3360 = vmatprep.subr.bf16.mxu0 0
        %3361 = vmatpush1.bf16.msra.mxu0 %v3339
        %3362 = vmatprep.subr.bf16.mxu0 0
        %3363 = vmatpush2.bf16.msra.mxu0 0
        %3364 = vmatprep.subr.bf16.mxu0 0
        %3365 = vmatpush2.bf16.msra.mxu0 0
        %3366 = vmatprep.subr.bf16.mxu0 0
        %3367 = vmatpush2.bf16.msra.mxu0 0
        %3368 = vmatprep.subr.bf16.mxu0 0
        %3369 = vmatpush2.bf16.msra.mxu0 0
        %3370 = vmatprep.subr.bf16.mxu0 0
        %3371 = vmatpush2.bf16.msra.mxu0 0
        %3372 = vmatprep.subr.bf16.mxu0 0
        %3373 = vmatpush2.bf16.msra.mxu0 0
        %3374 = vmatprep.subr.bf16.mxu0 0
        %3375 = vmatpush2.bf16.msra.mxu0 0
        %3376 = vmatprep.subr.bf16.mxu0 0
        %3377 = vmatpush2.bf16.msra.mxu0 0
        %3378 = vmatprep.mubr.bf16.mxu0 0
        %3379 = vmatmul.mubr.bf16.gmra.mxu0 %v3344
        %v3380 = vpop.f32.mrf.mxu0
        %v3381 = vadd.f32 0.0, %v3380
        %v3382 = vpop.f32.mrf.mxu0
        %v3383 = vpop.f32.mrf.mxu0
        %v3384 = vadd.f32 0.0, %v3383
        %v3385 = vpop.f32.mrf.mxu0
        %3386 = vdwg.mxu0
        %v3387 = vadd.f32 %v3319, %v3381
        %v3388 = vadd.f32 %v3320, %v3384
        %v3389 = vlaneseq
        %v3390 = vshrl.u32 %v3389, 7
        %v3391 = vsub.s32 0, %v3390
        %v3392 = vrot.slane %v2638, %v3391
        %v3393 = vadd.f32 %v3387, %v3392
        %v3394 = vadd.f32 %v3388, %v3392
        %vm3395 = vcmp.gt.f32.partialorder %v3393, 0.0
        %vm3396 = vcmp.gt.f32.partialorder %v3394, 0.0
        %v3397 = vlaneseq
        %v3398 = vshrl.u32 %v3397, 7
        %v3399 = vsub.s32 0, %v3398
        %v3400 = vrot.slane %v2639, %v3399
        %v3401 = vmul.f32 %v3400, %v3393
        %v3402 = vmul.f32 %v3400, %v3394
        %v3403 = vsel %vm3395, %v3393, %v3401
        %v3404 = vsel %vm3396, %v3394, %v3402
        %3405 = vxpose.xlu0.b32.start [1/16] %v3403, 128
        %3406 = vxpose.xlu0.b32.cont [2/16] %v3404, 128
        %3407 = vxpose.xlu0.b32.cont [3/16] 0.0, 128
        %3408 = vxpose.xlu0.b32.cont [4/16] 0.0, 128
        %3409 = vxpose.xlu0.b32.cont [5/16] 0.0, 128
        %3410 = vxpose.xlu0.b32.cont [6/16] 0.0, 128
        %3411 = vxpose.xlu0.b32.cont [7/16] 0.0, 128
        %3412 = vxpose.xlu0.b32.cont [8/16] 0.0, 128
        %3413 = vxpose.xlu0.b32.cont [9/16] 0.0, 128
        %3414 = vxpose.xlu0.b32.cont [10/16] 0.0, 128
        %3415 = vxpose.xlu0.b32.cont [11/16] 0.0, 128
        %3416 = vxpose.xlu0.b32.cont [12/16] 0.0, 128
        %3417 = vxpose.xlu0.b32.cont [13/16] 0.0, 128
        %3418 = vxpose.xlu0.b32.cont [14/16] 0.0, 128
        %3419 = vxpose.xlu0.b32.cont [15/16] 0.0, 128
        %3420 = vxpose.xlu0.b32.end [16/16] 0.0, 128
        %v3421 = vpop.trf.xlu0
        %v3422 = vpop.trf.xlu0
        %v3423 = vpop.trf.xlu0
        %v3424 = vpop.trf.xlu0
        %v3425 = vpop.trf.xlu0
        %v3426 = vpop.trf.xlu0
        %v3427 = vpop.trf.xlu0
        %v3428 = vpop.trf.xlu0
        %v3429 = vpop.trf.xlu0
        %v3430 = vpop.trf.xlu0
        %v3431 = vpop.trf.xlu0
        %v3432 = vpop.trf.xlu0
        %v3433 = vpop.trf.xlu0
        %v3434 = vpop.trf.xlu0
        %v3435 = vpop.trf.xlu0
        %v3436 = vpop.trf.xlu0
        %3437 = vst.msk [vmem:[%s438] sm:$0xff] %vm481, %v3421
        %3438 = vst.msk [vmem:[%s438 + $0x8] sm:$0xff] %vm481, %v3422
        %3439 = vst.msk [vmem:[%s438 + $0x10] sm:$0xff] %vm481, %v3423
        %3440 = vst.msk [vmem:[%s438 + $0x18] sm:$0xff] %vm481, %v3424
        %3441 = vst.msk [vmem:[%s438 + $0x20] sm:$0xff] %vm481, %v3425
        %3442 = vst.msk [vmem:[%s438 + $0x28] sm:$0xff] %vm481, %v3426
        %3443 = vst.msk [vmem:[%s438 + $0x30] sm:$0xff] %vm481, %v3427
        %3444 = vst.msk [vmem:[%s438 + $0x38] sm:$0xff] %vm481, %v3428
        %v3445 = vld [vmem:[%s5 + $0x6] sm:$0x1]
        %v3446 = vld [vmem:[%s5 + $0x7] sm:$0x1]
        %3447 = vst.msk [vmem:[#allocation5] sm:$0xff] %vm1713, 0.0
        %3448 = vst.msk [vmem:[#allocation5 + $0x18] sm:$0xff] %vm1713, 0.0
        %3449 = vst.msk [vmem:[#allocation5 + $0x8] sm:$0xff] %vm1713, %v3403
        %3450 = vst.msk [vmem:[#allocation5 + $0x10] sm:$0xff] %vm1713, %v3404
        %s3451 = scalar_lea.vmem [#allocation5], 3
        %v3452 = vld [vmem:[%s3451] ss:$2 sm:$0xff]
        %v3453 = vpack.c.bf16 %v3452, %v3452
        %v3454 = vld [vmem:[#allocation14] sm:$0xf]
        %v3455 = vld [vmem:[#allocation14 + $0x4] sm:$0xf]
        %v3456 = vld [vmem:[#allocation14 + $0x8] sm:$0xf]
        %v3457 = vld [vmem:[#allocation14 + $0xc] sm:$0xf]
        %v3458 = vld [vmem:[#allocation14 + $0x10] sm:$0xf]
        %v3459 = vld [vmem:[#allocation14 + $0x14] sm:$0xf]
        %v3460 = vld [vmem:[#allocation14 + $0x18] sm:$0xf]
        %v3461 = vld [vmem:[#allocation14 + $0x1c] sm:$0xf]
        %s3462 = scalar_lea.vmem [#allocation5], 4
        %v3463 = vld [vmem:[%s3462] ss:$2 sm:$0xff]
        %v3464 = vpack.c.bf16 %v3463, %v3463
        %s3465 = scalar_lea.vmem [#allocation14], 32
        %v3466 = vld [vmem:[%s3465] sm:$0xf]
        %v3467 = vld [vmem:[%s3465 + $0x4] sm:$0xf]
        %v3468 = vld [vmem:[%s3465 + $0x8] sm:$0xf]
        %v3469 = vld [vmem:[%s3465 + $0xc] sm:$0xf]
        %v3470 = vld [vmem:[%s3465 + $0x10] sm:$0xf]
        %v3471 = vld [vmem:[%s3465 + $0x14] sm:$0xf]
        %v3472 = vld [vmem:[%s3465 + $0x18] sm:$0xf]
        %v3473 = vld [vmem:[%s3465 + $0x1c] sm:$0xf]
        %v3482 = vunpack.c.l.b16 %v3466
        %v3483 = vunpack.c.l.b16 %v3467
        %v3484 = vunpack.c.l.b16 %v3468
        %v3485 = vunpack.c.l.b16 %v3469
        %v3486 = vunpack.c.l.b16 %v3470
        %v3487 = vunpack.c.l.b16 %v3471
        %v3488 = vunpack.c.l.b16 %v3472
        %v3489 = vunpack.c.l.b16 %v3473
        %v3490 = vpack.c.b16 %v3483, %v3482
        %v3491 = vpack.c.b16 %v3485, %v3484
        %v3492 = vpack.c.b16 %v3487, %v3486
        %v3493 = vpack.c.b16 %v3489, %v3488
        %v3499 = vsel %vm1713, %v3464, 0
        %3501 = vmatprep.subr.bf16.mxu0 0
        %3502 = vmatpush1.bf16.msra.mxu0 0
        %3503 = vmatprep.subr.bf16.mxu0 0
        %3504 = vmatpush1.bf16.msra.mxu0 0
        %3505 = vmatprep.subr.bf16.mxu0 0
        %3506 = vmatpush1.bf16.msra.mxu0 0
        %3507 = vmatprep.subr.bf16.mxu0 0
        %3508 = vmatpush1.bf16.msra.mxu0 0
        %3509 = vmatprep.subr.bf16.mxu0 0
        %3510 = vmatpush1.bf16.msra.mxu0 %v3493
        %3511 = vmatprep.subr.bf16.mxu0 0
        %3512 = vmatpush1.bf16.msra.mxu0 %v3492
        %3513 = vmatprep.subr.bf16.mxu0 0
        %3514 = vmatpush1.bf16.msra.mxu0 %v3491
        %3515 = vmatprep.subr.bf16.mxu0 0
        %3516 = vmatpush1.bf16.msra.mxu0 %v3490
        %3517 = vmatprep.subr.bf16.mxu0 0
        %3518 = vmatpush2.bf16.msra.mxu0 0
        %3519 = vmatprep.subr.bf16.mxu0 0
        %3520 = vmatpush2.bf16.msra.mxu0 0
        %3521 = vmatprep.subr.bf16.mxu0 0
        %3522 = vmatpush2.bf16.msra.mxu0 0
        %3523 = vmatprep.subr.bf16.mxu0 0
        %3524 = vmatpush2.bf16.msra.mxu0 0
        %3525 = vmatprep.subr.bf16.mxu0 0
        %3526 = vmatpush2.bf16.msra.mxu0 0
        %3527 = vmatprep.subr.bf16.mxu0 0
        %3528 = vmatpush2.bf16.msra.mxu0 0
        %3529 = vmatprep.subr.bf16.mxu0 0
        %3530 = vmatpush2.bf16.msra.mxu0 0
        %3531 = vmatprep.subr.bf16.mxu0 0
        %3532 = vmatpush2.bf16.msra.mxu0 0
        %3533 = vmatprep.mubr.bf16.mxu0 0
        %3534 = vmatmul.mubr.bf16.gmra.mxu0 %v3499
        %v3535 = vpop.f32.mrf.mxu0
        %v3536 = vadd.f32 0.0, %v3535
        %v3537 = vpop.f32.mrf.mxu0
        %v3538 = vpop.f32.mrf.mxu0
        %v3539 = vpop.f32.mrf.mxu0
        %3540 = vdwg.mxu0
        %v3549 = vunpack.c.l.b16 %v3454
        %v3550 = vunpack.c.l.b16 %v3455
        %v3551 = vunpack.c.l.b16 %v3456
        %v3552 = vunpack.c.l.b16 %v3457
        %v3553 = vunpack.c.l.b16 %v3458
        %v3554 = vunpack.c.l.b16 %v3459
        %v3555 = vunpack.c.l.b16 %v3460
        %v3556 = vunpack.c.l.b16 %v3461
        %v3557 = vpack.c.b16 %v3550, %v3549
        %v3558 = vpack.c.b16 %v3552, %v3551
        %v3559 = vpack.c.b16 %v3554, %v3553
        %v3560 = vpack.c.b16 %v3556, %v3555
        %v3566 = vsel %vm1713, %v3453, 0
        %3568 = vmatprep.subr.bf16.mxu0 0
        %3569 = vmatpush1.bf16.msra.mxu0 0
        %3570 = vmatprep.subr.bf16.mxu0 0
        %3571 = vmatpush1.bf16.msra.mxu0 0
        %3572 = vmatprep.subr.bf16.mxu0 0
        %3573 = vmatpush1.bf16.msra.mxu0 0
        %3574 = vmatprep.subr.bf16.mxu0 0
        %3575 = vmatpush1.bf16.msra.mxu0 0
        %3576 = vmatprep.subr.bf16.mxu0 0
        %3577 = vmatpush1.bf16.msra.mxu0 %v3560
        %3578 = vmatprep.subr.bf16.mxu0 0
        %3579 = vmatpush1.bf16.msra.mxu0 %v3559
        %3580 = vmatprep.subr.bf16.mxu0 0
        %3581 = vmatpush1.bf16.msra.mxu0 %v3558
        %3582 = vmatprep.subr.bf16.mxu0 0
        %3583 = vmatpush1.bf16.msra.mxu0 %v3557
        %3584 = vmatprep.subr.bf16.mxu0 0
        %3585 = vmatpush2.bf16.msra.mxu0 0
        %3586 = vmatprep.subr.bf16.mxu0 0
        %3587 = vmatpush2.bf16.msra.mxu0 0
        %3588 = vmatprep.subr.bf16.mxu0 0
        %3589 = vmatpush2.bf16.msra.mxu0 0
        %3590 = vmatprep.subr.bf16.mxu0 0
        %3591 = vmatpush2.bf16.msra.mxu0 0
        %3592 = vmatprep.subr.bf16.mxu0 0
        %3593 = vmatpush2.bf16.msra.mxu0 0
        %3594 = vmatprep.subr.bf16.mxu0 0
        %3595 = vmatpush2.bf16.msra.mxu0 0
        %3596 = vmatprep.subr.bf16.mxu0 0
        %3597 = vmatpush2.bf16.msra.mxu0 0
        %3598 = vmatprep.subr.bf16.mxu0 0
        %3599 = vmatpush2.bf16.msra.mxu0 0
        %3600 = vmatprep.mubr.bf16.mxu0 0
        %3601 = vmatmul.mubr.bf16.gmra.mxu0 %v3566
        %v3602 = vpop.f32.mrf.mxu0
        %v3603 = vadd.f32 %v3536, %v3602
        %v3604 = vpop.f32.mrf.mxu0
        %v3605 = vpop.f32.mrf.mxu0
        %v3606 = vpop.f32.mrf.mxu0
        %3607 = vdwg.mxu0
        %s3608 = scalar_lea.vmem [#allocation5], 5
        %v3609 = vld [vmem:[%s3608] ss:$2 sm:$0xff]
        %v3610 = vpack.c.bf16 %v3609, %v3609
        %s3611 = scalar_lea.vmem [#allocation14], 64
        %v3612 = vld [vmem:[%s3611] sm:$0xf]
        %v3613 = vld [vmem:[%s3611 + $0x4] sm:$0xf]
        %v3614 = vld [vmem:[%s3611 + $0x8] sm:$0xf]
        %v3615 = vld [vmem:[%s3611 + $0xc] sm:$0xf]
        %v3616 = vld [vmem:[%s3611 + $0x10] sm:$0xf]
        %v3617 = vld [vmem:[%s3611 + $0x14] sm:$0xf]
        %v3618 = vld [vmem:[%s3611 + $0x18] sm:$0xf]
        %v3619 = vld [vmem:[%s3611 + $0x1c] sm:$0xf]
        %v3628 = vunpack.c.l.b16 %v3612
        %v3629 = vunpack.c.l.b16 %v3613
        %v3630 = vunpack.c.l.b16 %v3614
        %v3631 = vunpack.c.l.b16 %v3615
        %v3632 = vunpack.c.l.b16 %v3616
        %v3633 = vunpack.c.l.b16 %v3617
        %v3634 = vunpack.c.l.b16 %v3618
        %v3635 = vunpack.c.l.b16 %v3619
        %v3636 = vpack.c.b16 %v3629, %v3628
        %v3637 = vpack.c.b16 %v3631, %v3630
        %v3638 = vpack.c.b16 %v3633, %v3632
        %v3639 = vpack.c.b16 %v3635, %v3634
        %v3645 = vsel %vm1713, %v3610, 0
        %3647 = vmatprep.subr.bf16.mxu0 0
        %3648 = vmatpush1.bf16.msra.mxu0 0
        %3649 = vmatprep.subr.bf16.mxu0 0
        %3650 = vmatpush1.bf16.msra.mxu0 0
        %3651 = vmatprep.subr.bf16.mxu0 0
        %3652 = vmatpush1.bf16.msra.mxu0 0
        %3653 = vmatprep.subr.bf16.mxu0 0
        %3654 = vmatpush1.bf16.msra.mxu0 0
        %3655 = vmatprep.subr.bf16.mxu0 0
        %3656 = vmatpush1.bf16.msra.mxu0 %v3639
        %3657 = vmatprep.subr.bf16.mxu0 0
        %3658 = vmatpush1.bf16.msra.mxu0 %v3638
        %3659 = vmatprep.subr.bf16.mxu0 0
        %3660 = vmatpush1.bf16.msra.mxu0 %v3637
        %3661 = vmatprep.subr.bf16.mxu0 0
        %3662 = vmatpush1.bf16.msra.mxu0 %v3636
        %3663 = vmatprep.subr.bf16.mxu0 0
        %3664 = vmatpush2.bf16.msra.mxu0 0
        %3665 = vmatprep.subr.bf16.mxu0 0
        %3666 = vmatpush2.bf16.msra.mxu0 0
        %3667 = vmatprep.subr.bf16.mxu0 0
        %3668 = vmatpush2.bf16.msra.mxu0 0
        %3669 = vmatprep.subr.bf16.mxu0 0
        %3670 = vmatpush2.bf16.msra.mxu0 0
        %3671 = vmatprep.subr.bf16.mxu0 0
        %3672 = vmatpush2.bf16.msra.mxu0 0
        %3673 = vmatprep.subr.bf16.mxu0 0
        %3674 = vmatpush2.bf16.msra.mxu0 0
        %3675 = vmatprep.subr.bf16.mxu0 0
        %3676 = vmatpush2.bf16.msra.mxu0 0
        %3677 = vmatprep.subr.bf16.mxu0 0
        %3678 = vmatpush2.bf16.msra.mxu0 0
        %3679 = vmatprep.mubr.bf16.mxu0 0
        %3680 = vmatmul.mubr.bf16.gmra.mxu0 %v3645
        %v3681 = vpop.f32.mrf.mxu0
        %v3682 = vadd.f32 0.0, %v3681
        %v3683 = vpop.f32.mrf.mxu0
        %v3684 = vpop.f32.mrf.mxu0
        %v3685 = vpop.f32.mrf.mxu0
        %3686 = vdwg.mxu0
        %v3687 = vadd.f32 %v3603, %v3682
        %s3688 = scalar_lea.vmem [#allocation5], 6
        %v3689 = vld [vmem:[%s3688] ss:$2 sm:$0xff]
        %v3690 = vpack.c.bf16 %v3689, %v3689
        %s3691 = scalar_lea.vmem [#allocation14], 96
        %v3692 = vld [vmem:[%s3691] sm:$0xf]
        %v3693 = vld [vmem:[%s3691 + $0x4] sm:$0xf]
        %v3694 = vld [vmem:[%s3691 + $0x8] sm:$0xf]
        %v3695 = vld [vmem:[%s3691 + $0xc] sm:$0xf]
        %v3696 = vld [vmem:[%s3691 + $0x10] sm:$0xf]
        %v3697 = vld [vmem:[%s3691 + $0x14] sm:$0xf]
        %v3698 = vld [vmem:[%s3691 + $0x18] sm:$0xf]
        %v3699 = vld [vmem:[%s3691 + $0x1c] sm:$0xf]
        %v3708 = vunpack.c.l.b16 %v3692
        %v3709 = vunpack.c.l.b16 %v3693
        %v3710 = vunpack.c.l.b16 %v3694
        %v3711 = vunpack.c.l.b16 %v3695
        %v3712 = vunpack.c.l.b16 %v3696
        %v3713 = vunpack.c.l.b16 %v3697
        %v3714 = vunpack.c.l.b16 %v3698
        %v3715 = vunpack.c.l.b16 %v3699
        %v3716 = vpack.c.b16 %v3709, %v3708
        %v3717 = vpack.c.b16 %v3711, %v3710
        %v3718 = vpack.c.b16 %v3713, %v3712
        %v3719 = vpack.c.b16 %v3715, %v3714
        %v3725 = vsel %vm1713, %v3690, 0
        %3727 = vmatprep.subr.bf16.mxu0 0
        %3728 = vmatpush1.bf16.msra.mxu0 0
        %3729 = vmatprep.subr.bf16.mxu0 0
        %3730 = vmatpush1.bf16.msra.mxu0 0
        %3731 = vmatprep.subr.bf16.mxu0 0
        %3732 = vmatpush1.bf16.msra.mxu0 0
        %3733 = vmatprep.subr.bf16.mxu0 0
        %3734 = vmatpush1.bf16.msra.mxu0 0
        %3735 = vmatprep.subr.bf16.mxu0 0
        %3736 = vmatpush1.bf16.msra.mxu0 %v3719
        %3737 = vmatprep.subr.bf16.mxu0 0
        %3738 = vmatpush1.bf16.msra.mxu0 %v3718
        %3739 = vmatprep.subr.bf16.mxu0 0
        %3740 = vmatpush1.bf16.msra.mxu0 %v3717
        %3741 = vmatprep.subr.bf16.mxu0 0
        %3742 = vmatpush1.bf16.msra.mxu0 %v3716
        %3743 = vmatprep.subr.bf16.mxu0 0
        %3744 = vmatpush2.bf16.msra.mxu0 0
        %3745 = vmatprep.subr.bf16.mxu0 0
        %3746 = vmatpush2.bf16.msra.mxu0 0
        %3747 = vmatprep.subr.bf16.mxu0 0
        %3748 = vmatpush2.bf16.msra.mxu0 0
        %3749 = vmatprep.subr.bf16.mxu0 0
        %3750 = vmatpush2.bf16.msra.mxu0 0
        %3751 = vmatprep.subr.bf16.mxu0 0
        %3752 = vmatpush2.bf16.msra.mxu0 0
        %3753 = vmatprep.subr.bf16.mxu0 0
        %3754 = vmatpush2.bf16.msra.mxu0 0
        %3755 = vmatprep.subr.bf16.mxu0 0
        %3756 = vmatpush2.bf16.msra.mxu0 0
        %3757 = vmatprep.subr.bf16.mxu0 0
        %3758 = vmatpush2.bf16.msra.mxu0 0
        %3759 = vmatprep.mubr.bf16.mxu0 0
        %3760 = vmatmul.mubr.bf16.gmra.mxu0 %v3725
        %v3761 = vpop.f32.mrf.mxu0
        %v3762 = vadd.f32 0.0, %v3761
        %v3763 = vpop.f32.mrf.mxu0
        %v3764 = vpop.f32.mrf.mxu0
        %v3765 = vpop.f32.mrf.mxu0
        %3766 = vdwg.mxu0
        %v3767 = vadd.f32 %v3687, %v3762
        %s3768 = scalar_lea.vmem [#allocation5], 7
        %v3769 = vld [vmem:[%s3768] ss:$2 sm:$0xff]
        %v3770 = vpack.c.bf16 %v3769, %v3769
        %s3771 = scalar_lea.vmem [#allocation14], 128
        %v3772 = vld [vmem:[%s3771] sm:$0xf]
        %v3773 = vld [vmem:[%s3771 + $0x4] sm:$0xf]
        %v3774 = vld [vmem:[%s3771 + $0x8] sm:$0xf]
        %v3775 = vld [vmem:[%s3771 + $0xc] sm:$0xf]
        %v3776 = vld [vmem:[%s3771 + $0x10] sm:$0xf]
        %v3777 = vld [vmem:[%s3771 + $0x14] sm:$0xf]
        %v3778 = vld [vmem:[%s3771 + $0x18] sm:$0xf]
        %v3779 = vld [vmem:[%s3771 + $0x1c] sm:$0xf]
        %v3788 = vunpack.c.l.b16 %v3772
        %v3789 = vunpack.c.l.b16 %v3773
        %v3790 = vunpack.c.l.b16 %v3774
        %v3791 = vunpack.c.l.b16 %v3775
        %v3792 = vunpack.c.l.b16 %v3776
        %v3793 = vunpack.c.l.b16 %v3777
        %v3794 = vunpack.c.l.b16 %v3778
        %v3795 = vunpack.c.l.b16 %v3779
        %v3796 = vpack.c.b16 %v3789, %v3788
        %v3797 = vpack.c.b16 %v3791, %v3790
        %v3798 = vpack.c.b16 %v3793, %v3792
        %v3799 = vpack.c.b16 %v3795, %v3794
        %v3805 = vsel %vm1713, %v3770, 0
        %3807 = vmatprep.subr.bf16.mxu0 0
        %3808 = vmatpush1.bf16.msra.mxu0 0
        %3809 = vmatprep.subr.bf16.mxu0 0
        %3810 = vmatpush1.bf16.msra.mxu0 0
        %3811 = vmatprep.subr.bf16.mxu0 0
        %3812 = vmatpush1.bf16.msra.mxu0 0
        %3813 = vmatprep.subr.bf16.mxu0 0
        %3814 = vmatpush1.bf16.msra.mxu0 0
        %3815 = vmatprep.subr.bf16.mxu0 0
        %3816 = vmatpush1.bf16.msra.mxu0 %v3799
        %3817 = vmatprep.subr.bf16.mxu0 0
        %3818 = vmatpush1.bf16.msra.mxu0 %v3798
        %3819 = vmatprep.subr.bf16.mxu0 0
        %3820 = vmatpush1.bf16.msra.mxu0 %v3797
        %3821 = vmatprep.subr.bf16.mxu0 0
        %3822 = vmatpush1.bf16.msra.mxu0 %v3796
        %3823 = vmatprep.subr.bf16.mxu0 0
        %3824 = vmatpush2.bf16.msra.mxu0 0
        %3825 = vmatprep.subr.bf16.mxu0 0
        %3826 = vmatpush2.bf16.msra.mxu0 0
        %3827 = vmatprep.subr.bf16.mxu0 0
        %3828 = vmatpush2.bf16.msra.mxu0 0
        %3829 = vmatprep.subr.bf16.mxu0 0
        %3830 = vmatpush2.bf16.msra.mxu0 0
        %3831 = vmatprep.subr.bf16.mxu0 0
        %3832 = vmatpush2.bf16.msra.mxu0 0
        %3833 = vmatprep.subr.bf16.mxu0 0
        %3834 = vmatpush2.bf16.msra.mxu0 0
        %3835 = vmatprep.subr.bf16.mxu0 0
        %3836 = vmatpush2.bf16.msra.mxu0 0
        %3837 = vmatprep.subr.bf16.mxu0 0
        %3838 = vmatpush2.bf16.msra.mxu0 0
        %3839 = vmatprep.mubr.bf16.mxu0 0
        %3840 = vmatmul.mubr.bf16.gmra.mxu0 %v3805
        %v3841 = vpop.f32.mrf.mxu0
        %v3842 = vadd.f32 0.0, %v3841
        %v3843 = vpop.f32.mrf.mxu0
        %v3844 = vpop.f32.mrf.mxu0
        %v3845 = vpop.f32.mrf.mxu0
        %3846 = vdwg.mxu0
        %v3847 = vadd.f32 %v3767, %v3842
        %s3848 = scalar_lea.vmem [#allocation5], 8
        %v3849 = vld [vmem:[%s3848] ss:$2 sm:$0xff]
        %v3850 = vpack.c.bf16 %v3849, %v3849
        %s3851 = scalar_lea.vmem [#allocation14], 160
        %v3852 = vld [vmem:[%s3851] sm:$0xf]
        %v3853 = vld [vmem:[%s3851 + $0x4] sm:$0xf]
        %v3854 = vld [vmem:[%s3851 + $0x8] sm:$0xf]
        %v3855 = vld [vmem:[%s3851 + $0xc] sm:$0xf]
        %v3856 = vld [vmem:[%s3851 + $0x10] sm:$0xf]
        %v3857 = vld [vmem:[%s3851 + $0x14] sm:$0xf]
        %v3858 = vld [vmem:[%s3851 + $0x18] sm:$0xf]
        %v3859 = vld [vmem:[%s3851 + $0x1c] sm:$0xf]
        %v3868 = vunpack.c.l.b16 %v3852
        %v3869 = vunpack.c.l.b16 %v3853
        %v3870 = vunpack.c.l.b16 %v3854
        %v3871 = vunpack.c.l.b16 %v3855
        %v3872 = vunpack.c.l.b16 %v3856
        %v3873 = vunpack.c.l.b16 %v3857
        %v3874 = vunpack.c.l.b16 %v3858
        %v3875 = vunpack.c.l.b16 %v3859
        %v3876 = vpack.c.b16 %v3869, %v3868
        %v3877 = vpack.c.b16 %v3871, %v3870
        %v3878 = vpack.c.b16 %v3873, %v3872
        %v3879 = vpack.c.b16 %v3875, %v3874
        %v3885 = vsel %vm1713, %v3850, 0
        %3887 = vmatprep.subr.bf16.mxu0 0
        %3888 = vmatpush1.bf16.msra.mxu0 0
        %3889 = vmatprep.subr.bf16.mxu0 0
        %3890 = vmatpush1.bf16.msra.mxu0 0
        %3891 = vmatprep.subr.bf16.mxu0 0
        %3892 = vmatpush1.bf16.msra.mxu0 0
        %3893 = vmatprep.subr.bf16.mxu0 0
        %3894 = vmatpush1.bf16.msra.mxu0 0
        %3895 = vmatprep.subr.bf16.mxu0 0
        %3896 = vmatpush1.bf16.msra.mxu0 %v3879
        %3897 = vmatprep.subr.bf16.mxu0 0
        %3898 = vmatpush1.bf16.msra.mxu0 %v3878
        %3899 = vmatprep.subr.bf16.mxu0 0
        %3900 = vmatpush1.bf16.msra.mxu0 %v3877
        %3901 = vmatprep.subr.bf16.mxu0 0
        %3902 = vmatpush1.bf16.msra.mxu0 %v3876
        %3903 = vmatprep.subr.bf16.mxu0 0
        %3904 = vmatpush2.bf16.msra.mxu0 0
        %3905 = vmatprep.subr.bf16.mxu0 0
        %3906 = vmatpush2.bf16.msra.mxu0 0
        %3907 = vmatprep.subr.bf16.mxu0 0
        %3908 = vmatpush2.bf16.msra.mxu0 0
        %3909 = vmatprep.subr.bf16.mxu0 0
        %3910 = vmatpush2.bf16.msra.mxu0 0
        %3911 = vmatprep.subr.bf16.mxu0 0
        %3912 = vmatpush2.bf16.msra.mxu0 0
        %3913 = vmatprep.subr.bf16.mxu0 0
        %3914 = vmatpush2.bf16.msra.mxu0 0
        %3915 = vmatprep.subr.bf16.mxu0 0
        %3916 = vmatpush2.bf16.msra.mxu0 0
        %3917 = vmatprep.subr.bf16.mxu0 0
        %3918 = vmatpush2.bf16.msra.mxu0 0
        %3919 = vmatprep.mubr.bf16.mxu0 0
        %3920 = vmatmul.mubr.bf16.gmra.mxu0 %v3885
        %v3921 = vpop.f32.mrf.mxu0
        %v3922 = vadd.f32 0.0, %v3921
        %v3923 = vpop.f32.mrf.mxu0
        %v3924 = vpop.f32.mrf.mxu0
        %v3925 = vpop.f32.mrf.mxu0
        %3926 = vdwg.mxu0
        %v3927 = vadd.f32 %v3847, %v3922
        %s3928 = scalar_lea.vmem [#allocation5], 9
        %v3929 = vld [vmem:[%s3928] ss:$2 sm:$0xff]
        %v3930 = vpack.c.bf16 %v3929, %v3929
        %s3931 = scalar_lea.vmem [#allocation14], 192
        %v3932 = vld [vmem:[%s3931] sm:$0xf]
        %v3933 = vld [vmem:[%s3931 + $0x4] sm:$0xf]
        %v3934 = vld [vmem:[%s3931 + $0x8] sm:$0xf]
        %v3935 = vld [vmem:[%s3931 + $0xc] sm:$0xf]
        %v3936 = vld [vmem:[%s3931 + $0x10] sm:$0xf]
        %v3937 = vld [vmem:[%s3931 + $0x14] sm:$0xf]
        %v3938 = vld [vmem:[%s3931 + $0x18] sm:$0xf]
        %v3939 = vld [vmem:[%s3931 + $0x1c] sm:$0xf]
        %v3948 = vunpack.c.l.b16 %v3932
        %v3949 = vunpack.c.l.b16 %v3933
        %v3950 = vunpack.c.l.b16 %v3934
        %v3951 = vunpack.c.l.b16 %v3935
        %v3952 = vunpack.c.l.b16 %v3936
        %v3953 = vunpack.c.l.b16 %v3937
        %v3954 = vunpack.c.l.b16 %v3938
        %v3955 = vunpack.c.l.b16 %v3939
        %v3956 = vpack.c.b16 %v3949, %v3948
        %v3957 = vpack.c.b16 %v3951, %v3950
        %v3958 = vpack.c.b16 %v3953, %v3952
        %v3959 = vpack.c.b16 %v3955, %v3954
        %v3965 = vsel %vm1713, %v3930, 0
        %3967 = vmatprep.subr.bf16.mxu0 0
        %3968 = vmatpush1.bf16.msra.mxu0 0
        %3969 = vmatprep.subr.bf16.mxu0 0
        %3970 = vmatpush1.bf16.msra.mxu0 0
        %3971 = vmatprep.subr.bf16.mxu0 0
        %3972 = vmatpush1.bf16.msra.mxu0 0
        %3973 = vmatprep.subr.bf16.mxu0 0
        %3974 = vmatpush1.bf16.msra.mxu0 0
        %3975 = vmatprep.subr.bf16.mxu0 0
        %3976 = vmatpush1.bf16.msra.mxu0 %v3959
        %3977 = vmatprep.subr.bf16.mxu0 0
        %3978 = vmatpush1.bf16.msra.mxu0 %v3958
        %3979 = vmatprep.subr.bf16.mxu0 0
        %3980 = vmatpush1.bf16.msra.mxu0 %v3957
        %3981 = vmatprep.subr.bf16.mxu0 0
        %3982 = vmatpush1.bf16.msra.mxu0 %v3956
        %3983 = vmatprep.subr.bf16.mxu0 0
        %3984 = vmatpush2.bf16.msra.mxu0 0
        %3985 = vmatprep.subr.bf16.mxu0 0
        %3986 = vmatpush2.bf16.msra.mxu0 0
        %3987 = vmatprep.subr.bf16.mxu0 0
        %3988 = vmatpush2.bf16.msra.mxu0 0
        %3989 = vmatprep.subr.bf16.mxu0 0
        %3990 = vmatpush2.bf16.msra.mxu0 0
        %3991 = vmatprep.subr.bf16.mxu0 0
        %3992 = vmatpush2.bf16.msra.mxu0 0
        %3993 = vmatprep.subr.bf16.mxu0 0
        %3994 = vmatpush2.bf16.msra.mxu0 0
        %3995 = vmatprep.subr.bf16.mxu0 0
        %3996 = vmatpush2.bf16.msra.mxu0 0
        %3997 = vmatprep.subr.bf16.mxu0 0
        %3998 = vmatpush2.bf16.msra.mxu0 0
        %3999 = vmatprep.mubr.bf16.mxu0 0
        %4000 = vmatmul.mubr.bf16.gmra.mxu0 %v3965
        %v4001 = vpop.f32.mrf.mxu0
        %v4002 = vadd.f32 0.0, %v4001
        %v4003 = vpop.f32.mrf.mxu0
        %v4004 = vpop.f32.mrf.mxu0
        %v4005 = vpop.f32.mrf.mxu0
        %4006 = vdwg.mxu0
        %v4007 = vadd.f32 %v3927, %v4002
        %s4008 = scalar_lea.vmem [#allocation5], 10
        %v4009 = vld [vmem:[%s4008] ss:$2 sm:$0xff]
        %v4010 = vpack.c.bf16 %v4009, %v4009
        %s4011 = scalar_lea.vmem [#allocation14], 224
        %v4012 = vld [vmem:[%s4011] sm:$0xf]
        %v4013 = vld [vmem:[%s4011 + $0x4] sm:$0xf]
        %v4014 = vld [vmem:[%s4011 + $0x8] sm:$0xf]
        %v4015 = vld [vmem:[%s4011 + $0xc] sm:$0xf]
        %v4016 = vld [vmem:[%s4011 + $0x10] sm:$0xf]
        %v4017 = vld [vmem:[%s4011 + $0x14] sm:$0xf]
        %v4018 = vld [vmem:[%s4011 + $0x18] sm:$0xf]
        %v4019 = vld [vmem:[%s4011 + $0x1c] sm:$0xf]
        %v4028 = vunpack.c.l.b16 %v4012
        %v4029 = vunpack.c.l.b16 %v4013
        %v4030 = vunpack.c.l.b16 %v4014
        %v4031 = vunpack.c.l.b16 %v4015
        %v4032 = vunpack.c.l.b16 %v4016
        %v4033 = vunpack.c.l.b16 %v4017
        %v4034 = vunpack.c.l.b16 %v4018
        %v4035 = vunpack.c.l.b16 %v4019
        %v4036 = vpack.c.b16 %v4029, %v4028
        %v4037 = vpack.c.b16 %v4031, %v4030
        %v4038 = vpack.c.b16 %v4033, %v4032
        %v4039 = vpack.c.b16 %v4035, %v4034
        %v4045 = vsel %vm1713, %v4010, 0
        %4047 = vmatprep.subr.bf16.mxu0 0
        %4048 = vmatpush1.bf16.msra.mxu0 0
        %4049 = vmatprep.subr.bf16.mxu0 0
        %4050 = vmatpush1.bf16.msra.mxu0 0
        %4051 = vmatprep.subr.bf16.mxu0 0
        %4052 = vmatpush1.bf16.msra.mxu0 0
        %4053 = vmatprep.subr.bf16.mxu0 0
        %4054 = vmatpush1.bf16.msra.mxu0 0
        %4055 = vmatprep.subr.bf16.mxu0 0
        %4056 = vmatpush1.bf16.msra.mxu0 %v4039
        %4057 = vmatprep.subr.bf16.mxu0 0
        %4058 = vmatpush1.bf16.msra.mxu0 %v4038
        %4059 = vmatprep.subr.bf16.mxu0 0
        %4060 = vmatpush1.bf16.msra.mxu0 %v4037
        %4061 = vmatprep.subr.bf16.mxu0 0
        %4062 = vmatpush1.bf16.msra.mxu0 %v4036
        %4063 = vmatprep.subr.bf16.mxu0 0
        %4064 = vmatpush2.bf16.msra.mxu0 0
        %4065 = vmatprep.subr.bf16.mxu0 0
        %4066 = vmatpush2.bf16.msra.mxu0 0
        %4067 = vmatprep.subr.bf16.mxu0 0
        %4068 = vmatpush2.bf16.msra.mxu0 0
        %4069 = vmatprep.subr.bf16.mxu0 0
        %4070 = vmatpush2.bf16.msra.mxu0 0
        %4071 = vmatprep.subr.bf16.mxu0 0
        %4072 = vmatpush2.bf16.msra.mxu0 0
        %4073 = vmatprep.subr.bf16.mxu0 0
        %4074 = vmatpush2.bf16.msra.mxu0 0
        %4075 = vmatprep.subr.bf16.mxu0 0
        %4076 = vmatpush2.bf16.msra.mxu0 0
        %4077 = vmatprep.subr.bf16.mxu0 0
        %4078 = vmatpush2.bf16.msra.mxu0 0
        %4079 = vmatprep.mubr.bf16.mxu0 0
        %4080 = vmatmul.mubr.bf16.gmra.mxu0 %v4045
        %v4081 = vpop.f32.mrf.mxu0
        %v4082 = vadd.f32 0.0, %v4081
        %v4083 = vpop.f32.mrf.mxu0
        %v4084 = vpop.f32.mrf.mxu0
        %v4085 = vpop.f32.mrf.mxu0
        %4086 = vdwg.mxu0
        %v4087 = vadd.f32 %v4007, %v4082
        %s4088 = scalar_lea.vmem [#allocation5], 11
        %v4089 = vld [vmem:[%s4088] ss:$2 sm:$0xff]
        %v4090 = vpack.c.bf16 %v4089, %v4089
        %s4091 = scalar_lea.vmem [#allocation14], 256
        %v4092 = vld [vmem:[%s4091] sm:$0xf]
        %v4093 = vld [vmem:[%s4091 + $0x4] sm:$0xf]
        %v4094 = vld [vmem:[%s4091 + $0x8] sm:$0xf]
        %v4095 = vld [vmem:[%s4091 + $0xc] sm:$0xf]
        %v4096 = vld [vmem:[%s4091 + $0x10] sm:$0xf]
        %v4097 = vld [vmem:[%s4091 + $0x14] sm:$0xf]
        %v4098 = vld [vmem:[%s4091 + $0x18] sm:$0xf]
        %v4099 = vld [vmem:[%s4091 + $0x1c] sm:$0xf]
        %v4108 = vunpack.c.l.b16 %v4092
        %v4109 = vunpack.c.l.b16 %v4093
        %v4110 = vunpack.c.l.b16 %v4094
        %v4111 = vunpack.c.l.b16 %v4095
        %v4112 = vunpack.c.l.b16 %v4096
        %v4113 = vunpack.c.l.b16 %v4097
        %v4114 = vunpack.c.l.b16 %v4098
        %v4115 = vunpack.c.l.b16 %v4099
        %v4116 = vpack.c.b16 %v4109, %v4108
        %v4117 = vpack.c.b16 %v4111, %v4110
        %v4118 = vpack.c.b16 %v4113, %v4112
        %v4119 = vpack.c.b16 %v4115, %v4114
        %v4125 = vsel %vm1713, %v4090, 0
        %4127 = vmatprep.subr.bf16.mxu0 0
        %4128 = vmatpush1.bf16.msra.mxu0 0
        %4129 = vmatprep.subr.bf16.mxu0 0
        %4130 = vmatpush1.bf16.msra.mxu0 0
        %4131 = vmatprep.subr.bf16.mxu0 0
        %4132 = vmatpush1.bf16.msra.mxu0 0
        %4133 = vmatprep.subr.bf16.mxu0 0
        %4134 = vmatpush1.bf16.msra.mxu0 0
        %4135 = vmatprep.subr.bf16.mxu0 0
        %4136 = vmatpush1.bf16.msra.mxu0 %v4119
        %4137 = vmatprep.subr.bf16.mxu0 0
        %4138 = vmatpush1.bf16.msra.mxu0 %v4118
        %4139 = vmatprep.subr.bf16.mxu0 0
        %4140 = vmatpush1.bf16.msra.mxu0 %v4117
        %4141 = vmatprep.subr.bf16.mxu0 0
        %4142 = vmatpush1.bf16.msra.mxu0 %v4116
        %4143 = vmatprep.subr.bf16.mxu0 0
        %4144 = vmatpush2.bf16.msra.mxu0 0
        %4145 = vmatprep.subr.bf16.mxu0 0
        %4146 = vmatpush2.bf16.msra.mxu0 0
        %4147 = vmatprep.subr.bf16.mxu0 0
        %4148 = vmatpush2.bf16.msra.mxu0 0
        %4149 = vmatprep.subr.bf16.mxu0 0
        %4150 = vmatpush2.bf16.msra.mxu0 0
        %4151 = vmatprep.subr.bf16.mxu0 0
        %4152 = vmatpush2.bf16.msra.mxu0 0
        %4153 = vmatprep.subr.bf16.mxu0 0
        %4154 = vmatpush2.bf16.msra.mxu0 0
        %4155 = vmatprep.subr.bf16.mxu0 0
        %4156 = vmatpush2.bf16.msra.mxu0 0
        %4157 = vmatprep.subr.bf16.mxu0 0
        %4158 = vmatpush2.bf16.msra.mxu0 0
        %4159 = vmatprep.mubr.bf16.mxu0 0
        %4160 = vmatmul.mubr.bf16.gmra.mxu0 %v4125
        %v4161 = vpop.f32.mrf.mxu0
        %v4162 = vadd.f32 0.0, %v4161
        %v4163 = vpop.f32.mrf.mxu0
        %v4164 = vpop.f32.mrf.mxu0
        %v4165 = vpop.f32.mrf.mxu0
        %4166 = vdwg.mxu0
        %v4167 = vadd.f32 %v4087, %v4162
        %s4168 = scalar_lea.vmem [#allocation5], 12
        %v4169 = vld [vmem:[%s4168] ss:$2 sm:$0xff]
        %v4170 = vpack.c.bf16 %v4169, %v4169
        %s4171 = scalar_lea.vmem [#allocation14], 288
        %v4172 = vld [vmem:[%s4171] sm:$0xf]
        %v4173 = vld [vmem:[%s4171 + $0x4] sm:$0xf]
        %v4174 = vld [vmem:[%s4171 + $0x8] sm:$0xf]
        %v4175 = vld [vmem:[%s4171 + $0xc] sm:$0xf]
        %v4176 = vld [vmem:[%s4171 + $0x10] sm:$0xf]
        %v4177 = vld [vmem:[%s4171 + $0x14] sm:$0xf]
        %v4178 = vld [vmem:[%s4171 + $0x18] sm:$0xf]
        %v4179 = vld [vmem:[%s4171 + $0x1c] sm:$0xf]
        %v4188 = vunpack.c.l.b16 %v4172
        %v4189 = vunpack.c.l.b16 %v4173
        %v4190 = vunpack.c.l.b16 %v4174
        %v4191 = vunpack.c.l.b16 %v4175
        %v4192 = vunpack.c.l.b16 %v4176
        %v4193 = vunpack.c.l.b16 %v4177
        %v4194 = vunpack.c.l.b16 %v4178
        %v4195 = vunpack.c.l.b16 %v4179
        %v4196 = vpack.c.b16 %v4189, %v4188
        %v4197 = vpack.c.b16 %v4191, %v4190
        %v4198 = vpack.c.b16 %v4193, %v4192
        %v4199 = vpack.c.b16 %v4195, %v4194
        %v4205 = vsel %vm1713, %v4170, 0
        %4207 = vmatprep.subr.bf16.mxu0 0
        %4208 = vmatpush1.bf16.msra.mxu0 0
        %4209 = vmatprep.subr.bf16.mxu0 0
        %4210 = vmatpush1.bf16.msra.mxu0 0
        %4211 = vmatprep.subr.bf16.mxu0 0
        %4212 = vmatpush1.bf16.msra.mxu0 0
        %4213 = vmatprep.subr.bf16.mxu0 0
        %4214 = vmatpush1.bf16.msra.mxu0 0
        %4215 = vmatprep.subr.bf16.mxu0 0
        %4216 = vmatpush1.bf16.msra.mxu0 %v4199
        %4217 = vmatprep.subr.bf16.mxu0 0
        %4218 = vmatpush1.bf16.msra.mxu0 %v4198
        %4219 = vmatprep.subr.bf16.mxu0 0
        %4220 = vmatpush1.bf16.msra.mxu0 %v4197
        %4221 = vmatprep.subr.bf16.mxu0 0
        %4222 = vmatpush1.bf16.msra.mxu0 %v4196
        %4223 = vmatprep.subr.bf16.mxu0 0
        %4224 = vmatpush2.bf16.msra.mxu0 0
        %4225 = vmatprep.subr.bf16.mxu0 0
        %4226 = vmatpush2.bf16.msra.mxu0 0
        %4227 = vmatprep.subr.bf16.mxu0 0
        %4228 = vmatpush2.bf16.msra.mxu0 0
        %4229 = vmatprep.subr.bf16.mxu0 0
        %4230 = vmatpush2.bf16.msra.mxu0 0
        %4231 = vmatprep.subr.bf16.mxu0 0
        %4232 = vmatpush2.bf16.msra.mxu0 0
        %4233 = vmatprep.subr.bf16.mxu0 0
        %4234 = vmatpush2.bf16.msra.mxu0 0
        %4235 = vmatprep.subr.bf16.mxu0 0
        %4236 = vmatpush2.bf16.msra.mxu0 0
        %4237 = vmatprep.subr.bf16.mxu0 0
        %4238 = vmatpush2.bf16.msra.mxu0 0
        %4239 = vmatprep.mubr.bf16.mxu0 0
        %4240 = vmatmul.mubr.bf16.gmra.mxu0 %v4205
        %v4241 = vpop.f32.mrf.mxu0
        %v4242 = vadd.f32 0.0, %v4241
        %v4243 = vpop.f32.mrf.mxu0
        %v4244 = vpop.f32.mrf.mxu0
        %v4245 = vpop.f32.mrf.mxu0
        %4246 = vdwg.mxu0
        %v4247 = vadd.f32 %v4167, %v4242
        %s4248 = scalar_lea.vmem [#allocation5], 13
        %v4249 = vld [vmem:[%s4248] ss:$2 sm:$0xff]
        %v4250 = vpack.c.bf16 %v4249, %v4249
        %s4251 = scalar_lea.vmem [#allocation14], 320
        %v4252 = vld [vmem:[%s4251] sm:$0xf]
        %v4253 = vld [vmem:[%s4251 + $0x4] sm:$0xf]
        %v4254 = vld [vmem:[%s4251 + $0x8] sm:$0xf]
        %v4255 = vld [vmem:[%s4251 + $0xc] sm:$0xf]
        %v4256 = vld [vmem:[%s4251 + $0x10] sm:$0xf]
        %v4257 = vld [vmem:[%s4251 + $0x14] sm:$0xf]
        %v4258 = vld [vmem:[%s4251 + $0x18] sm:$0xf]
        %v4259 = vld [vmem:[%s4251 + $0x1c] sm:$0xf]
        %v4268 = vunpack.c.l.b16 %v4252
        %v4269 = vunpack.c.l.b16 %v4253
        %v4270 = vunpack.c.l.b16 %v4254
        %v4271 = vunpack.c.l.b16 %v4255
        %v4272 = vunpack.c.l.b16 %v4256
        %v4273 = vunpack.c.l.b16 %v4257
        %v4274 = vunpack.c.l.b16 %v4258
        %v4275 = vunpack.c.l.b16 %v4259
        %v4276 = vpack.c.b16 %v4269, %v4268
        %v4277 = vpack.c.b16 %v4271, %v4270
        %v4278 = vpack.c.b16 %v4273, %v4272
        %v4279 = vpack.c.b16 %v4275, %v4274
        %v4285 = vsel %vm1713, %v4250, 0
        %4287 = vmatprep.subr.bf16.mxu0 0
        %4288 = vmatpush1.bf16.msra.mxu0 0
        %4289 = vmatprep.subr.bf16.mxu0 0
        %4290 = vmatpush1.bf16.msra.mxu0 0
        %4291 = vmatprep.subr.bf16.mxu0 0
        %4292 = vmatpush1.bf16.msra.mxu0 0
        %4293 = vmatprep.subr.bf16.mxu0 0
        %4294 = vmatpush1.bf16.msra.mxu0 0
        %4295 = vmatprep.subr.bf16.mxu0 0
        %4296 = vmatpush1.bf16.msra.mxu0 %v4279
        %4297 = vmatprep.subr.bf16.mxu0 0
        %4298 = vmatpush1.bf16.msra.mxu0 %v4278
        %4299 = vmatprep.subr.bf16.mxu0 0
        %4300 = vmatpush1.bf16.msra.mxu0 %v4277
        %4301 = vmatprep.subr.bf16.mxu0 0
        %4302 = vmatpush1.bf16.msra.mxu0 %v4276
        %4303 = vmatprep.subr.bf16.mxu0 0
        %4304 = vmatpush2.bf16.msra.mxu0 0
        %4305 = vmatprep.subr.bf16.mxu0 0
        %4306 = vmatpush2.bf16.msra.mxu0 0
        %4307 = vmatprep.subr.bf16.mxu0 0
        %4308 = vmatpush2.bf16.msra.mxu0 0
        %4309 = vmatprep.subr.bf16.mxu0 0
        %4310 = vmatpush2.bf16.msra.mxu0 0
        %4311 = vmatprep.subr.bf16.mxu0 0
        %4312 = vmatpush2.bf16.msra.mxu0 0
        %4313 = vmatprep.subr.bf16.mxu0 0
        %4314 = vmatpush2.bf16.msra.mxu0 0
        %4315 = vmatprep.subr.bf16.mxu0 0
        %4316 = vmatpush2.bf16.msra.mxu0 0
        %4317 = vmatprep.subr.bf16.mxu0 0
        %4318 = vmatpush2.bf16.msra.mxu0 0
        %4319 = vmatprep.mubr.bf16.mxu0 0
        %4320 = vmatmul.mubr.bf16.gmra.mxu0 %v4285
        %v4321 = vpop.f32.mrf.mxu0
        %v4322 = vadd.f32 0.0, %v4321
        %v4323 = vpop.f32.mrf.mxu0
        %v4324 = vpop.f32.mrf.mxu0
        %v4325 = vpop.f32.mrf.mxu0
        %4326 = vdwg.mxu0
        %v4327 = vadd.f32 %v4247, %v4322
        %v4328 = vlaneseq
        %v4329 = vshrl.u32 %v4328, 7
        %v4330 = vsub.s32 0, %v4329
        %v4331 = vrot.slane %v3445, %v4330
        %v4332 = vadd.f32 %v4327, %v4331
        %vm4333 = vcmp.gt.f32.partialorder %v4332, 0.0
        %v4334 = vlaneseq
        %v4335 = vshrl.u32 %v4334, 7
        %v4336 = vsub.s32 0, %v4335
        %v4337 = vrot.slane %v3446, %v4336
        %v4338 = vmul.f32 %v4337, %v4332
        %v4339 = vsel %vm4333, %v4332, %v4338
        %4340 = vxpose.xlu0.b32.start [1/16] %v4339, 128
        %4341 = vxpose.xlu0.b32.cont [2/16] 0.0, 128
        %4342 = vxpose.xlu0.b32.cont [3/16] 0.0, 128
        %4343 = vxpose.xlu0.b32.cont [4/16] 0.0, 128
        %4344 = vxpose.xlu0.b32.cont [5/16] 0.0, 128
        %4345 = vxpose.xlu0.b32.cont [6/16] 0.0, 128
        %4346 = vxpose.xlu0.b32.cont [7/16] 0.0, 128
        %4347 = vxpose.xlu0.b32.cont [8/16] 0.0, 128
        %4348 = vxpose.xlu0.b32.cont [9/16] 0.0, 128
        %4349 = vxpose.xlu0.b32.cont [10/16] 0.0, 128
        %4350 = vxpose.xlu0.b32.cont [11/16] 0.0, 128
        %4351 = vxpose.xlu0.b32.cont [12/16] 0.0, 128
        %4352 = vxpose.xlu0.b32.cont [13/16] 0.0, 128
        %4353 = vxpose.xlu0.b32.cont [14/16] 0.0, 128
        %4354 = vxpose.xlu0.b32.cont [15/16] 0.0, 128
        %4355 = vxpose.xlu0.b32.end [16/16] 0.0, 128
        %v4356 = vpop.trf.xlu0
        %v4357 = vpop.trf.xlu0
        %v4358 = vpop.trf.xlu0
        %v4359 = vpop.trf.xlu0
        %v4360 = vpop.trf.xlu0
        %v4361 = vpop.trf.xlu0
        %v4362 = vpop.trf.xlu0
        %v4363 = vpop.trf.xlu0
        %v4364 = vpop.trf.xlu0
        %v4365 = vpop.trf.xlu0
        %v4366 = vpop.trf.xlu0
        %v4367 = vpop.trf.xlu0
        %v4368 = vpop.trf.xlu0
        %v4369 = vpop.trf.xlu0
        %v4370 = vpop.trf.xlu0
        %v4371 = vpop.trf.xlu0
        %vm4372 = vcmask 64512
        %4373 = vst.msk [vmem:[%s443] sm:$0xff] %vm4372, %v4356
        %4374 = vst.msk [vmem:[%s443 + $0x8] sm:$0xff] %vm4372, %v4357
        %4375 = vst.msk [vmem:[%s443 + $0x10] sm:$0xff] %vm4372, %v4358
        %4376 = vst.msk [vmem:[%s443 + $0x18] sm:$0xff] %vm4372, %v4359
        %4377 = vst.msk [vmem:[%s443 + $0x20] sm:$0xff] %vm4372, %v4360
        %4378 = vst.msk [vmem:[%s443 + $0x28] sm:$0xff] %vm4372, %v4361
        %4379 = vst.msk [vmem:[%s443 + $0x30] sm:$0xff] %vm4372, %v4362
        %4380 = vst.msk [vmem:[%s443 + $0x38] sm:$0xff] %vm4372, %v4363
        %4381 = vst.msk [vmem:[%s443 + $0x40] sm:$0xff] %vm4372, %v4364
        %4382 = vst.msk [vmem:[%s443 + $0x48] sm:$0xff] %vm4372, %v4365
        %4383 = vst.msk [vmem:[%s443 + $0x50] sm:$0xff] %vm4372, %v4366
        %4384 = vst.msk [vmem:[%s443 + $0x58] sm:$0xff] %vm4372, %v4367
        %4385 = vst.msk [vmem:[%s443 + $0x60] sm:$0xff] %vm4372, %v4368
        %4386 = vst.msk [vmem:[%s443 + $0x68] sm:$0xff] %vm4372, %v4369
        %4387 = vst.msk [vmem:[%s443 + $0x70] sm:$0xff] %vm4372, %v4370
        %4388 = vst.msk [vmem:[%s443 + $0x78] sm:$0xff] %vm4372, %v4371
        %s4389 = sand.u32 %s171, 1
        %s4390 = scalar_lea.sflag [#allocation8], %s4389
        %s4391 = sand.u32 %s171, 1
        %s4392 = smul.addr %s4391, 16
        %s4393 = scalar_lea.vmem [#allocation15], %s4392
        %s4394 = sand.u32 %s197, 1
        %s4395 = scalar_lea.sflag [#allocation17], %s4394
        %s4396 = sand.u32 %s197, 1
        %s4397 = smul.addr %s4396, 32
        %s4398 = scalar_lea.vmem [#allocation16], %s4397
        %p4399 = scmp.lt.s32.totalorder %s32, 1
        %s4400 = scalar_select %p4399, %s32, 1
        %s4401 = smul.addr %s4400, 8
        %s4402 = smul.addr %s4401, 8
        %s4403 = scalar_lea.vmem %s8, %s4402
        %p4404 = scmp.lt.s32.totalorder %s32, 1
        %s4405 = scalar_select %p4404, %s32, 1
        %s4406 = smul.addr %s4405, 16
        %s4407 = smul.addr %s4406, 8
        %s4408 = scalar_lea.vmem %s9, %s4407
        // Predicated region
        $region65: #{encoder_forward.1} parent=43 // pred_check
          %p4409 = pneg %p181
        $region66: #{encoder_forward.1} parent=43 // pred_check_branch
          %4411 = sbr.rel (%p4409) target = $region68
        $region67: #{encoder_forward.1} parent=43 // pred_region
          %s4413 = ssub.s32 256, 256
          %4414 = vsyncadd %s4390, %s4413
          %s4415 = smul.addr %s32, 2
          %s4416 = smul.addr %s4415, 128
          %s4417 = scalar_lea.hbm %s6, %s4416
          %s4418 = sshll.u32 %s4393, 4
          %s4419 = int_to_ptr.vmem [resolvable:$true] %s4418
          %4424 = dma.vmem_to_hbm [thread:$0]  %s4419, 256, %s4417, %s4390, 128, 128, 8
        $region68: #{encoder_forward.1} parent=43 // pred_fallthru
          _
        // Predicated region
        $region69: #{encoder_forward.1} parent=43 // pred_check
          %p4425 = pneg %p207
        $region70: #{encoder_forward.1} parent=43 // pred_check_branch
          %4427 = sbr.rel (%p4425) target = $region72
        $region71: #{encoder_forward.1} parent=43 // pred_region
          %s4429 = ssub.s32 512, 512
          %4430 = vsyncadd %s4395, %s4429
          %s4431 = smul.addr %s32, 4
          %s4432 = smul.addr %s4431, 128
          %s4433 = scalar_lea.hbm %s7, %s4432
          %s4434 = sshll.u32 %s4398, 4
          %s4435 = int_to_ptr.vmem [resolvable:$true] %s4434
          %4440 = dma.vmem_to_hbm [thread:$0]  %s4435, 512, %s4433, %s4395, 128, 128, 8
        $region72: #{encoder_forward.1} parent=43 // pred_fallthru
          _
        // Predicated region
        $region73: #{encoder_forward.1} parent=43 // pred_check
          %p4441 = pneg %p233
        $region74: #{encoder_forward.1} parent=43 // pred_check_branch
          %4443 = sbr.rel (%p4441) target = $region76
        $region75: #{encoder_forward.1} parent=43 // pred_region
          _
        $region76: #{encoder_forward.1} parent=43 // pred_fallthru
          _
        // Predicated region
        $region77: #{encoder_forward.1} parent=43 // pred_check
          %p4444 = pneg %p259
        $region78: #{encoder_forward.1} parent=43 // pred_check_branch
          %4446 = sbr.rel (%p4444) target = $region80
        $region79: #{encoder_forward.1} parent=43 // pred_region
          _
        $region80: #{encoder_forward.1} parent=43 // pred_fallthru
          _
      $region44: #{encoder_forward.1} parent=5 // pred_fallthru
        _
      %p4447 = scmp.le.s32.totalorder 2, %s27
      // Predicated region
      $region81: #{encoder_forward.1} parent=5 // pred_check
        %p4448 = pneg %p4447
      $region82: #{encoder_forward.1} parent=5 // pred_check_branch
        %4450 = sbr.rel (%p4448) target = $region84
      $region83: #{encoder_forward.1} parent=5 // pred_region
        %s4451 = ssub.s32 %s27, 2
        // Predicated region
        $region85: #{encoder_forward.1} parent=83 // pred_check
          %p4452 = pneg %p187
        $region86: #{encoder_forward.1} parent=83 // pred_check_branch
          %4454 = sbr.rel (%p4452) target = $region88
        $region87: #{encoder_forward.1} parent=83 // pred_region
          %s4455 = sand.u32 %s172, 1
          %s4456 = scalar_lea.sflag [#allocation8], %s4455
          %s4457 = sand.u32 %s172, 1
          %s4458 = smul.addr %s4457, 16
          %s4459 = scalar_lea.vmem [#allocation15], %s4458
          %4460 = dma.done %s4456, 256
        $region88: #{encoder_forward.1} parent=83 // pred_fallthru
          _
        // Predicated region
        $region89: #{encoder_forward.1} parent=83 // pred_check
          %p4461 = pneg %p213
        $region90: #{encoder_forward.1} parent=83 // pred_check_branch
          %4463 = sbr.rel (%p4461) target = $region92
        $region91: #{encoder_forward.1} parent=83 // pred_region
          %s4464 = sand.u32 %s198, 1
          %s4465 = scalar_lea.sflag [#allocation17], %s4464
          %s4466 = sand.u32 %s198, 1
          %s4467 = smul.addr %s4466, 32
          %s4468 = scalar_lea.vmem [#allocation16], %s4467
          %4469 = dma.done %s4465, 512
        $region92: #{encoder_forward.1} parent=83 // pred_fallthru
          _
        // Predicated region
        $region93: #{encoder_forward.1} parent=83 // pred_check
          %p4470 = pneg %p239
        $region94: #{encoder_forward.1} parent=83 // pred_check_branch
          %4472 = sbr.rel (%p4470) target = $region96
        $region95: #{encoder_forward.1} parent=83 // pred_region
          %p4473 = scmp.lt.s32.totalorder %s33, 1
          %s4474 = scalar_select %p4473, %s33, 1
          %s4475 = smul.addr %s4474, 8
          %s4476 = smul.addr %s4475, 8
          %s4477 = scalar_lea.vmem %s8, %s4476
        $region96: #{encoder_forward.1} parent=83 // pred_fallthru
          _
        // Predicated region
        $region97: #{encoder_forward.1} parent=83 // pred_check
          %p4478 = pneg %p265
        $region98: #{encoder_forward.1} parent=83 // pred_check_branch
          %4480 = sbr.rel (%p4478) target = $region100
        $region99: #{encoder_forward.1} parent=83 // pred_region
          %p4481 = scmp.lt.s32.totalorder %s33, 1
          %s4482 = scalar_select %p4481, %s33, 1
          %s4483 = smul.addr %s4482, 16
          %s4484 = smul.addr %s4483, 8
          %s4485 = scalar_lea.vmem %s9, %s4484
        $region100: #{encoder_forward.1} parent=83 // pred_fallthru
          _
      $region84: #{encoder_forward.1} parent=5 // pred_fallthru
        _
    $region6: #{encoder_forward.1} parent=1 // loop_footer
      %s31 = sadd.s32 1, %s27
    $region7: #{encoder_forward.1} parent=1 // loop_footer_branch
      %26 = sbr.rel target = $region3
    $region8: #{encoder_forward.1} parent=1 // loop_exit
      _
    %4486 = vsyncpa [#allocation7], 1
    %s4487 = scalar_lea.sflag [#allocation7], 1
    %4488 = vsyncpa %s4487, 1
    %4489 = vsyncpa [#allocation10], 1
    %4490 = vsyncpa [#allocation13], 1
    %4491 = vsyncpa [#allocation8], 1
    %s4492 = scalar_lea.sflag [#allocation8], 1
    %4493 = vsyncpa %s4492, 1
    %4494 = vsyncpa [#allocation17], 1
    %s4495 = scalar_lea.sflag [#allocation17], 1
    %4496 = vsyncpa %s4495, 1

</llo_original>
